<compile_context>
chip_gen: v7x
topology: tpu7x:2x2x1
jax: 0.10.0
libtpu: 0.0.40
codegen_flags: <defaults>
</compile_context>

<pallas_src>
import functools
import math

import jax
import jax.numpy as jnp
from jax.experimental import pallas as pl
from jax.experimental.pallas import tpu as pltpu

IN_FEATURES = 2048
HIDDEN = 512
OUT_FEATURES = 2
OUT_PAD = 128          # lane-dense padded width of the fc2 output slab
MAX_TILE_M = 512       # max batch rows per grid step


def _classifier_kernel(x_ref, w1_ref, b1_ref, w2_ref, b2_ref, out_ref):
    # x_ref:  (tile_m, 2048)  f32  -> cast to bf16 here (no extra HBM pass over x)
    # w1_ref: (2048, 512)     bf16 (constant index_map -> VMEM-resident)
    # b1_ref: (1, 512)        f32
    # w2_ref: (512, 128)      bf16 (zero-padded past column OUT_FEATURES)
    # b2_ref: (1, 128)        f32  (zero-padded)
    # out_ref:(tile_m, 128)   bf16 (lane-dense -> unmasked full-vreg stores)
    x = x_ref[...].astype(jnp.bfloat16)

    # fc1: bf16 x bf16 -> f32 accumulation on the MXU, bias + ReLU in f32
    h = jnp.dot(x, w1_ref[...], preferred_element_type=jnp.float32)
    h = jnp.maximum(h + b1_ref[...], 0.0)

    # fc2: feed the MXU at native bf16 rate; accumulate in f32
    o = jnp.dot(h.astype(jnp.bfloat16), w2_ref[...],
                preferred_element_type=jnp.float32)
    out_ref[...] = (o + b2_ref[...]).astype(out_ref.dtype)


def _round_up(x, m):
    return (x + m - 1) // m * m


def _choose_tile_m(batch, max_tile_m):
    """Batch tile: multiple of 8 sublanes, capped at max_tile_m; split into >= 2
    tiles when the batch is large enough so the 'parallel' axis can feed both
    v7x TensorCores."""
    b_aligned = _round_up(batch, 8)
    if b_aligned <= max_tile_m:
        if b_aligned >= 256:                       # big enough to split across 2 TCs
            return _round_up(pl.cdiv(b_aligned, 2), 8)
        return b_aligned                           # tiny batch: single latency-bound step
    return max_tile_m


def prepare_params(w1, b1, w2, b2):
    """One-time parameter prep (do NOT rebuild per forward): bf16 weights, 2-D
    biases, fc2 weight/bias zero-padded to a lane-dense 128-wide output slab.

    w1: (2048, 512), b1: (512,), w2: (512, 2), b2: (2,)   [x @ W convention]
    """
    w1_bf16 = w1.astype(jnp.bfloat16)
    b1_2d = b1.reshape(1, HIDDEN).astype(jnp.float32)
    w2_pad = jnp.zeros((HIDDEN, OUT_PAD), dtype=jnp.bfloat16)
    w2_pad = w2_pad.at[:, :OUT_FEATURES].set(w2.astype(jnp.bfloat16))
    b2_pad = jnp.zeros((1, OUT_PAD), dtype=jnp.float32)
    b2_pad = b2_pad.at[:, :OUT_FEATURES].set(b2.astype(jnp.float32))
    return w1_bf16, b1_2d, w2_pad, b2_pad


@functools.partial(jax.jit, static_argnames=("max_tile_m",))
def new_classifier_forward(x, w1_bf16, b1_2d, w2_pad, b2_pad, *,
                           max_tile_m=MAX_TILE_M):
    """relu(x @ W1 + b1) @ W2 + b2.  x: (B, 2048) f32 -> (B, 2) f32."""
    B = x.shape[0]
    tile_m = _choose_tile_m(B, max_tile_m)
    n_tiles = pl.cdiv(B, tile_m)
    B_pad = n_tiles * tile_m

    if B_pad != B:
        x = jnp.pad(x, ((0, B_pad - B), (0, 0)))

    flops = 2 * B_pad * IN_FEATURES * HIDDEN + 2 * B_pad * HIDDEN * OUT_PAD
    bytes_accessed = (
        B_pad * IN_FEATURES * 4          # x read (f32; bf16 cast happens in-kernel)
        + IN_FEATURES * HIDDEN * 2       # w1 (bf16)
        + HIDDEN * OUT_PAD * 2           # padded w2 (bf16)
        + HIDDEN * 4 + OUT_PAD * 4       # biases (f32)
        + B_pad * OUT_PAD * 2            # bf16 output slab
    )

    out_pad = pl.pallas_call(
        _classifier_kernel,
        out_shape=jax.ShapeDtypeStruct((B_pad, OUT_PAD), jnp.bfloat16),
        grid_spec=pltpu.PrefetchScalarGridSpec(
            num_scalar_prefetch=0,
            grid=(n_tiles,),
            in_specs=[
                # x: new batch tile each step -> auto double-buffered prefetch
                pl.BlockSpec((tile_m, IN_FEATURES), lambda i: (i, 0)),
                # weights / biases: constant block index -> stay VMEM-resident
                pl.BlockSpec((IN_FEATURES, HIDDEN), lambda i: (0, 0)),
                pl.BlockSpec((1, HIDDEN), lambda i: (0, 0)),
                pl.BlockSpec((HIDDEN, OUT_PAD), lambda i: (0, 0)),
                pl.BlockSpec((1, OUT_PAD), lambda i: (0, 0)),
            ],
            out_specs=pl.BlockSpec((tile_m, OUT_PAD), lambda i: (i, 0)),
        ),
        compiler_params=pltpu.CompilerParams(
            # batch tiles are independent -> shard across TCs on v7x megacore
            dimension_semantics=("parallel",),
            # headroom for tile_m=512 (f32 x tile double-buffered + resident weights)
            # on v5e's 16 MiB scoped-VMEM default; well under physical on all chips
            vmem_limit_bytes=32 * 1024 * 1024,
        ),
        cost_estimate=pl.CostEstimate(
            flops=flops, transcendentals=0, bytes_accessed=bytes_accessed),
    )(x, w1_bf16, b1_2d, w2_pad, b2_pad)

    # Strip batch padding + lane padding of the fc2 output.
    return out_pad[:B, :OUT_FEATURES].astype(jnp.float32)


def init_params(key):
    """Deterministic params mirroring the PyTorch _init_weights:
    kaiming_normal_ (fan_in, gain=sqrt(2)) on weights, zeros on biases.
    Returned transposed as (in, out) for the kernel's x @ W convention."""
    k1, k2 = jax.random.split(key, 2)
    std1 = math.sqrt(2.0 / IN_FEATURES)         # fc1: torch weight (512, 2048)
    w1 = (jax.random.normal(k1, (HIDDEN, IN_FEATURES), dtype=jnp.float32) * std1).T
    b1 = jnp.zeros((HIDDEN,), dtype=jnp.float32)
    std2 = math.sqrt(2.0 / HIDDEN)              # fc2: torch weight (2, 512)
    w2 = (jax.random.normal(k2, (OUT_FEATURES, HIDDEN), dtype=jnp.float32) * std2).T
    b2 = jnp.zeros((OUT_FEATURES,), dtype=jnp.float32)
    return w1, b1, w2, b2


if __name__ == "__main__":
    key = jax.random.PRNGKey(0)
    kx, kp = jax.random.split(key)

    B = 4
    x = jax.random.normal(kx, (B, IN_FEATURES), dtype=jnp.float32)
    w1, b1, w2, b2 = init_params(kp)
    params = prepare_params(w1, b1, w2, b2)     # one-time bf16 cast + lane padding

    out = new_classifier_forward(x, *params)
    out = jax.block_until_ready(out)

    # Pure-JAX f32 reference (tolerance relaxed for bf16 MXU inputs w/ f32 acc)
    ref = jnp.maximum(x @ w1 + b1, 0.0) @ w2 + b2
    assert out.shape == (B, OUT_FEATURES)
    assert jnp.allclose(out, ref, atol=5e-2, rtol=5e-2), "mismatch vs reference"

    print("KERNEL_OK")
</pallas_src>

<mosaic_0001>
module attributes {stable_mosaic.version = 11 : i64} {
  func.func @_classifier_kernel(%arg0: i32, %arg1: memref<8x2048xf32, #tpu.memory_space<vmem>>, %arg2: memref<2048x512xbf16, #tpu.memory_space<vmem>>, %arg3: memref<1x512xf32, #tpu.memory_space<vmem>>, %arg4: memref<512x128xbf16, #tpu.memory_space<vmem>>, %arg5: memref<1x128xf32, #tpu.memory_space<vmem>>, %arg6: memref<8x128xbf16, #tpu.memory_space<vmem>>) attributes {dimension_semantics = [#tpu.dimension_semantics<parallel>], iteration_bounds = array<i64: 1>, scalar_prefetch = 0 : i64, scratch_operands = 0 : i64, tpu.core_type = #tpu.core_type<tc>, window_params = [{transform_indices = @transform_0, window_bounds = array<i64: 8, 2048>}, {pipeline_mode = #tpu.pipeline_mode<synchronous>, transform_indices = @transform_1, window_bounds = array<i64: 2048, 512>}, {pipeline_mode = #tpu.pipeline_mode<synchronous>, transform_indices = @transform_2, window_bounds = array<i64: 1, 512>}, {pipeline_mode = #tpu.pipeline_mode<synchronous>, transform_indices = @transform_3, window_bounds = array<i64: 512, 128>}, {pipeline_mode = #tpu.pipeline_mode<synchronous>, transform_indices = @transform_4, window_bounds = array<i64: 1, 128>}, {transform_indices = @transform_5, window_bounds = array<i64: 8, 128>}]} {
    %c0 = arith.constant 0 : index
    %c0_0 = arith.constant 0 : index
    %0 = vector.load %arg1[%c0, %c0_0] : memref<8x2048xf32, #tpu.memory_space<vmem>>, vector<8x2048xf32>
    %1 = arith.truncf %0 : vector<8x2048xf32> to vector<8x2048xbf16>
    %c0_1 = arith.constant 0 : index
    %c0_2 = arith.constant 0 : index
    %2 = vector.load %arg2[%c0_1, %c0_2] : memref<2048x512xbf16, #tpu.memory_space<vmem>>, vector<2048x512xbf16>
    %cst = arith.constant dense<0.000000e+00> : vector<8x512xf32>
    %3 = tpu.matmul %1, %2, %cst {dimension_numbers = #tpu.dot_dimension_numbers<[1], [0], [0], [1], [0, 0, 1, 1], [], []>} : vector<8x2048xbf16>, vector<2048x512xbf16>, vector<8x512xf32> -> vector<8x512xf32>
    %c0_3 = arith.constant 0 : index
    %c0_4 = arith.constant 0 : index
    %4 = vector.load %arg3[%c0_3, %c0_4] : memref<1x512xf32, #tpu.memory_space<vmem>>, vector<1x512xf32>
    %5 = vector.broadcast %4 : vector<1x512xf32> to vector<8x512xf32>
    %6 = arith.addf %3, %5 : vector<8x512xf32>
    %cst_5 = arith.constant 0.000000e+00 : f32
    %7 = vector.broadcast %cst_5 : f32 to vector<8x512xf32>
    %8 = arith.maximumf %6, %7 : vector<8x512xf32>
    %9 = arith.truncf %8 : vector<8x512xf32> to vector<8x512xbf16>
    %c0_6 = arith.constant 0 : index
    %c0_7 = arith.constant 0 : index
    %10 = vector.load %arg4[%c0_6, %c0_7] : memref<512x128xbf16, #tpu.memory_space<vmem>>, vector<512x128xbf16>
    %cst_8 = arith.constant dense<0.000000e+00> : vector<8x128xf32>
    %11 = tpu.matmul %9, %10, %cst_8 {dimension_numbers = #tpu.dot_dimension_numbers<[1], [0], [0], [1], [0, 0, 1, 1], [], []>} : vector<8x512xbf16>, vector<512x128xbf16>, vector<8x128xf32> -> vector<8x128xf32>
    %c0_9 = arith.constant 0 : index
    %c0_10 = arith.constant 0 : index
    %12 = vector.load %arg5[%c0_9, %c0_10] : memref<1x128xf32, #tpu.memory_space<vmem>>, vector<1x128xf32>
    %13 = vector.broadcast %12 : vector<1x128xf32> to vector<8x128xf32>
    %14 = arith.addf %11, %13 : vector<8x128xf32>
    %15 = arith.truncf %14 : vector<8x128xf32> to vector<8x128xbf16>
    %c0_11 = arith.constant 0 : index
    %c0_12 = arith.constant 0 : index
    %16 = vector.load %arg6[%c0_11, %c0_12] : memref<8x128xbf16, #tpu.memory_space<vmem>>, vector<8x128xbf16>
    tpu.vector_store %arg6[%c0_11, %c0_12], %15 {strides = array<i32>} : memref<8x128xbf16, #tpu.memory_space<vmem>>, vector<8x128xbf16>,
    return
  }
  func.func @transform_0(%arg0: i32) -> (i32, i32) {
    %c0_i32 = arith.constant 0 : i32
    %c0_i32_0 = arith.constant 0 : i32
    return %arg0, %c0_i32 : i32, i32
  }
  func.func @transform_1(%arg0: i32) -> (i32, i32) {
    %c0_i32 = arith.constant 0 : i32
    %c0_i32_0 = arith.constant 0 : i32
    %c0_i32_1 = arith.constant 0 : i32
    return %c0_i32, %c0_i32_0 : i32, i32
  }
  func.func @transform_2(%arg0: i32) -> (i32, i32) {
    %c0_i32 = arith.constant 0 : i32
    %c0_i32_0 = arith.constant 0 : i32
    %c0_i32_1 = arith.constant 0 : i32
    return %c0_i32, %c0_i32_0 : i32, i32
  }
  func.func @transform_3(%arg0: i32) -> (i32, i32) {
    %c0_i32 = arith.constant 0 : i32
    %c0_i32_0 = arith.constant 0 : i32
    %c0_i32_1 = arith.constant 0 : i32
    return %c0_i32, %c0_i32_0 : i32, i32
  }
  func.func @transform_4(%arg0: i32) -> (i32, i32) {
    %c0_i32 = arith.constant 0 : i32
    %c0_i32_0 = arith.constant 0 : i32
    %c0_i32_1 = arith.constant 0 : i32
    return %c0_i32, %c0_i32_0 : i32, i32
  }
  func.func @transform_5(%arg0: i32) -> (i32, i32) {
    %c0_i32 = arith.constant 0 : i32
    %c0_i32_0 = arith.constant 0 : i32
    return %arg0, %c0_i32 : i32, i32
  }
}

</mosaic_0001>

<llo_original>
// kernel: new_classifier_forward.1
$region0: #{new_classifier_forward.1}
  #allocation0 [shape = 'u32[]', space=smem, size = 0x4, offset = 0x4, fixed_abs, tag = 'smem constant byte address 0x4 - core index']
  #allocation1 [shape = 'u32[144,128]{1,0:T(1,128)}', space=vmem, size = 0x12000, scoped, tag = 'internal scratch']
  %s0 = inlined_call_operand.vmem [shape: f32[8,2048], index: 0, kind: input, shape index: {}]
  %s1 = inlined_call_operand.hbm [shape: bf16[2048,512], index: 1, kind: input, shape index: {}]
  %s2 = inlined_call_operand.hbm [shape: f32[1,512], index: 2, kind: input, shape index: {}]
  %s3 = inlined_call_operand.hbm [shape: bf16[512,128], index: 3, kind: input, shape index: {}]
  %s4 = inlined_call_operand.hbm [shape: f32[1,128], index: 4, kind: input, shape index: {}]
  %s5 = inlined_call_operand.vmem [shape: bf16[8,128], index: 5, kind: output, shape index: {}]
  %s6 = sld [smem:[#allocation0]]
  $region46: #{new_classifier_forward.1} parent=0
    _
  %s8 = ssub.s32 1, %s6
  %s9 = scalar_select 0, %s8, %s6
  $region1: #{new_classifier_forward.1} parent=0
    #allocation2 [shape = 'u8[2097152]{0}', space=vmem, size = 0x200000, scoped, tag = 'input window, operand 1, single buffered']
    #allocation3 [shape = 's32[1]{0}', space=sflag, size = 0x4, scoped, tag = 'scoped memory for new_classifier_forward.1']
    #allocation4 [shape = 'u8[2048]{0}', space=vmem, size = 0x800, scoped, tag = 'input window, operand 2, single buffered']
    #allocation5 [shape = 's32[1]{0}', space=sflag, size = 0x4, scoped, tag = 'scoped memory for new_classifier_forward.1']
    #allocation6 [shape = 'u8[131072]{0}', space=vmem, size = 0x20000, scoped, tag = 'input window, operand 3, single buffered']
    #allocation7 [shape = 'u8[512]{0}', space=vmem, size = 0x400, scoped, tag = 'input window, operand 4, single buffered']
    #allocation8 [shape = 's32[1]{0}', space=sflag, size = 0x4, scoped, tag = 'scoped memory for new_classifier_forward.1']
    %10 = vsyncpa [#allocation3], 0
    %11 = vsyncpa [#allocation5], 0
    %12 = vsyncpa [#allocation8], 0
    // Predicated region
    $region2: #{new_classifier_forward.1} parent=1 // pred_check
      _
    $region3: #{new_classifier_forward.1} parent=1 // pred_check_branch
      %14 = sbr.rel (0) target = $region5
    $region4: #{new_classifier_forward.1} parent=1 // pred_region
      _
    $region5: #{new_classifier_forward.1} parent=1 // pred_fallthru
      _
    // Predicated region
    $region6: #{new_classifier_forward.1} parent=1 // pred_check
      _
    $region7: #{new_classifier_forward.1} parent=1 // pred_check_branch
      %16 = sbr.rel (0) target = $region9
    $region8: #{new_classifier_forward.1} parent=1 // pred_region
      %s18 = ssub.s32 65536, 65536
      %19 = vsyncadd [#allocation3], %s18
      %s20 = sshll.u32 [#allocation2], 4
      %s21 = int_to_ptr.vmem [resolvable:$true] %s20
      %26 = dma.hbm_to_vmem [thread:$0]  %s1, 65536, %s21, [#allocation3], 256, 256, 16
    $region9: #{new_classifier_forward.1} parent=1 // pred_fallthru
      _
    // Predicated region
    $region10: #{new_classifier_forward.1} parent=1 // pred_check
      _
    $region11: #{new_classifier_forward.1} parent=1 // pred_check_branch
      %28 = sbr.rel (0) target = $region13
    $region12: #{new_classifier_forward.1} parent=1 // pred_region
      %s30 = ssub.s32 64, 64
      %31 = vsyncadd [#allocation5], %s30
      %s33 = sshll.u32 [#allocation4], 4
      %s34 = int_to_ptr.vmem [resolvable:$true] %s33
      %36 = dma.hbm_to_vmem [thread:$0]  %s2, 64, %s34, [#allocation5]
    $region13: #{new_classifier_forward.1} parent=1 // pred_fallthru
      _
    // Predicated region
    $region14: #{new_classifier_forward.1} parent=1 // pred_check
      _
    $region15: #{new_classifier_forward.1} parent=1 // pred_check_branch
      %38 = sbr.rel (0) target = $region17
    $region16: #{new_classifier_forward.1} parent=1 // pred_region
      %s40 = ssub.s32 4096, 4096
      %41 = vsyncadd [#allocation5], %s40
      %s42 = sshll.u32 [#allocation6], 4
      %s43 = int_to_ptr.vmem [resolvable:$true] %s42
      %48 = dma.hbm_to_vmem [thread:$0]  %s3, 4096, %s43, [#allocation5], 64, 64, 4
    $region17: #{new_classifier_forward.1} parent=1 // pred_fallthru
      _
    // Predicated region
    $region18: #{new_classifier_forward.1} parent=1 // pred_check
      _
    $region19: #{new_classifier_forward.1} parent=1 // pred_check_branch
      %50 = sbr.rel (0) target = $region21
    $region20: #{new_classifier_forward.1} parent=1 // pred_region
      %s52 = ssub.s32 16, 16
      %53 = vsyncadd [#allocation8], %s52
      %s55 = sshll.u32 [#allocation7], 4
      %s56 = int_to_ptr.vmem [resolvable:$true] %s55
      %58 = dma.hbm_to_vmem [thread:$0]  %s4, 16, %s56, [#allocation8]
    $region21: #{new_classifier_forward.1} parent=1 // pred_fallthru
      _
    // Predicated region
    $region22: #{new_classifier_forward.1} parent=1 // pred_check
      _
    $region23: #{new_classifier_forward.1} parent=1 // pred_check_branch
      %60 = sbr.rel (0) target = $region25
    $region24: #{new_classifier_forward.1} parent=1 // pred_region
      %61 = dma.done [#allocation3], 65536
    $region25: #{new_classifier_forward.1} parent=1 // pred_fallthru
      _
    // Predicated region
    $region26: #{new_classifier_forward.1} parent=1 // pred_check
      _
    $region27: #{new_classifier_forward.1} parent=1 // pred_check_branch
      %63 = sbr.rel (0) target = $region29
    $region28: #{new_classifier_forward.1} parent=1 // pred_region
      %64 = dma.done [#allocation5], 64
    $region29: #{new_classifier_forward.1} parent=1 // pred_fallthru
      _
    // Predicated region
    $region30: #{new_classifier_forward.1} parent=1 // pred_check
      _
    $region31: #{new_classifier_forward.1} parent=1 // pred_check_branch
      %66 = sbr.rel (0) target = $region33
    $region32: #{new_classifier_forward.1} parent=1 // pred_region
      %67 = dma.done [#allocation5], 4096
    $region33: #{new_classifier_forward.1} parent=1 // pred_fallthru
      _
    // Predicated region
    $region34: #{new_classifier_forward.1} parent=1 // pred_check
      _
    $region35: #{new_classifier_forward.1} parent=1 // pred_check_branch
      %69 = sbr.rel (0) target = $region37
    $region36: #{new_classifier_forward.1} parent=1 // pred_region
      %70 = dma.done [#allocation8], 16
    $region37: #{new_classifier_forward.1} parent=1 // pred_fallthru
      _
    %v72 = vld [vmem:[%s0] sm:$0xff]
    %v73 = vld [vmem:[%s0 + $0x8] sm:$0xff]
    %v74 = vld [vmem:[%s0 + $0x10] sm:$0xff]
    %v75 = vld [vmem:[%s0 + $0x18] sm:$0xff]
    %v76 = vld [vmem:[%s0 + $0x20] sm:$0xff]
    %v77 = vld [vmem:[%s0 + $0x28] sm:$0xff]
    %v78 = vld [vmem:[%s0 + $0x30] sm:$0xff]
    %v79 = vld [vmem:[%s0 + $0x38] sm:$0xff]
    %v80 = vld [vmem:[%s0 + $0x40] sm:$0xff]
    %v81 = vld [vmem:[%s0 + $0x48] sm:$0xff]
    %v82 = vld [vmem:[%s0 + $0x50] sm:$0xff]
    %v83 = vld [vmem:[%s0 + $0x58] sm:$0xff]
    %v84 = vld [vmem:[%s0 + $0x60] sm:$0xff]
    %v85 = vld [vmem:[%s0 + $0x68] sm:$0xff]
    %v86 = vld [vmem:[%s0 + $0x70] sm:$0xff]
    %v87 = vld [vmem:[%s0 + $0x78] sm:$0xff]
    %v88 = vpack.c.bf16 %v72, %v72
    %v89 = vpack.c.bf16 %v73, %v73
    %v90 = vpack.c.bf16 %v74, %v74
    %v91 = vpack.c.bf16 %v75, %v75
    %v92 = vpack.c.bf16 %v76, %v76
    %v93 = vpack.c.bf16 %v77, %v77
    %v94 = vpack.c.bf16 %v78, %v78
    %v95 = vpack.c.bf16 %v79, %v79
    %v96 = vpack.c.bf16 %v80, %v80
    %v97 = vpack.c.bf16 %v81, %v81
    %v98 = vpack.c.bf16 %v82, %v82
    %v99 = vpack.c.bf16 %v83, %v83
    %v100 = vpack.c.bf16 %v84, %v84
    %v101 = vpack.c.bf16 %v85, %v85
    %v102 = vpack.c.bf16 %v86, %v86
    %v103 = vpack.c.bf16 %v87, %v87
    %v104 = vld [vmem:[#allocation2] sm:$0xff]
    %v105 = vld [vmem:[#allocation2 + $0x8] sm:$0xff]
    %v106 = vld [vmem:[#allocation2 + $0x10] sm:$0xff]
    %v107 = vld [vmem:[#allocation2 + $0x18] sm:$0xff]
    %v108 = vld [vmem:[#allocation2 + $0x20] sm:$0xff]
    %v109 = vld [vmem:[#allocation2 + $0x28] sm:$0xff]
    %v110 = vld [vmem:[#allocation2 + $0x30] sm:$0xff]
    %v111 = vld [vmem:[#allocation2 + $0x38] sm:$0xff]
    %v112 = vld [vmem:[#allocation2 + $0x40] sm:$0xff]
    %v113 = vld [vmem:[#allocation2 + $0x48] sm:$0xff]
    %v114 = vld [vmem:[#allocation2 + $0x50] sm:$0xff]
    %v115 = vld [vmem:[#allocation2 + $0x58] sm:$0xff]
    %v116 = vld [vmem:[#allocation2 + $0x60] sm:$0xff]
    %v117 = vld [vmem:[#allocation2 + $0x68] sm:$0xff]
    %v118 = vld [vmem:[#allocation2 + $0x70] sm:$0xff]
    %v119 = vld [vmem:[#allocation2 + $0x78] sm:$0xff]
    %v120 = vld [vmem:[#allocation2 + $0x80] sm:$0xff]
    %v121 = vld [vmem:[#allocation2 + $0x88] sm:$0xff]
    %v122 = vld [vmem:[#allocation2 + $0x90] sm:$0xff]
    %v123 = vld [vmem:[#allocation2 + $0x98] sm:$0xff]
    %v124 = vld [vmem:[#allocation2 + $0xa0] sm:$0xff]
    %v125 = vld [vmem:[#allocation2 + $0xa8] sm:$0xff]
    %v126 = vld [vmem:[#allocation2 + $0xb0] sm:$0xff]
    %v127 = vld [vmem:[#allocation2 + $0xb8] sm:$0xff]
    %v128 = vld [vmem:[#allocation2 + $0xc0] sm:$0xff]
    %v129 = vld [vmem:[#allocation2 + $0xc8] sm:$0xff]
    %v130 = vld [vmem:[#allocation2 + $0xd0] sm:$0xff]
    %v131 = vld [vmem:[#allocation2 + $0xd8] sm:$0xff]
    %v132 = vld [vmem:[#allocation2 + $0xe0] sm:$0xff]
    %v133 = vld [vmem:[#allocation2 + $0xe8] sm:$0xff]
    %v134 = vld [vmem:[#allocation2 + $0xf0] sm:$0xff]
    %v135 = vld [vmem:[#allocation2 + $0xf8] sm:$0xff]
    %v136 = vld [vmem:[#allocation2 + $0x100] sm:$0xff]
    %v137 = vld [vmem:[#allocation2 + $0x108] sm:$0xff]
    %v138 = vld [vmem:[#allocation2 + $0x110] sm:$0xff]
    %v139 = vld [vmem:[#allocation2 + $0x118] sm:$0xff]
    %v140 = vld [vmem:[#allocation2 + $0x120] sm:$0xff]
    %v141 = vld [vmem:[#allocation2 + $0x128] sm:$0xff]
    %v142 = vld [vmem:[#allocation2 + $0x130] sm:$0xff]
    %v143 = vld [vmem:[#allocation2 + $0x138] sm:$0xff]
    %v144 = vld [vmem:[#allocation2 + $0x140] sm:$0xff]
    %v145 = vld [vmem:[#allocation2 + $0x148] sm:$0xff]
    %v146 = vld [vmem:[#allocation2 + $0x150] sm:$0xff]
    %v147 = vld [vmem:[#allocation2 + $0x158] sm:$0xff]
    %v148 = vld [vmem:[#allocation2 + $0x160] sm:$0xff]
    %v149 = vld [vmem:[#allocation2 + $0x168] sm:$0xff]
    %v150 = vld [vmem:[#allocation2 + $0x170] sm:$0xff]
    %v151 = vld [vmem:[#allocation2 + $0x178] sm:$0xff]
    %v152 = vld [vmem:[#allocation2 + $0x180] sm:$0xff]
    %v153 = vld [vmem:[#allocation2 + $0x188] sm:$0xff]
    %v154 = vld [vmem:[#allocation2 + $0x190] sm:$0xff]
    %v155 = vld [vmem:[#allocation2 + $0x198] sm:$0xff]
    %v156 = vld [vmem:[#allocation2 + $0x1a0] sm:$0xff]
    %v157 = vld [vmem:[#allocation2 + $0x1a8] sm:$0xff]
    %v158 = vld [vmem:[#allocation2 + $0x1b0] sm:$0xff]
    %v159 = vld [vmem:[#allocation2 + $0x1b8] sm:$0xff]
    %v160 = vld [vmem:[#allocation2 + $0x1c0] sm:$0xff]
    %v161 = vld [vmem:[#allocation2 + $0x1c8] sm:$0xff]
    %v162 = vld [vmem:[#allocation2 + $0x1d0] sm:$0xff]
    %v163 = vld [vmem:[#allocation2 + $0x1d8] sm:$0xff]
    %v164 = vld [vmem:[#allocation2 + $0x1e0] sm:$0xff]
    %v165 = vld [vmem:[#allocation2 + $0x1e8] sm:$0xff]
    %v166 = vld [vmem:[#allocation2 + $0x1f0] sm:$0xff]
    %v167 = vld [vmem:[#allocation2 + $0x1f8] sm:$0xff]
    %v168 = vld [vmem:[#allocation2 + $0x200] sm:$0xff]
    %v169 = vld [vmem:[#allocation2 + $0x208] sm:$0xff]
    %v170 = vld [vmem:[#allocation2 + $0x210] sm:$0xff]
    %v171 = vld [vmem:[#allocation2 + $0x218] sm:$0xff]
    %v172 = vld [vmem:[#allocation2 + $0x220] sm:$0xff]
    %v173 = vld [vmem:[#allocation2 + $0x228] sm:$0xff]
    %v174 = vld [vmem:[#allocation2 + $0x230] sm:$0xff]
    %v175 = vld [vmem:[#allocation2 + $0x238] sm:$0xff]
    %v176 = vld [vmem:[#allocation2 + $0x240] sm:$0xff]
    %v177 = vld [vmem:[#allocation2 + $0x248] sm:$0xff]
    %v178 = vld [vmem:[#allocation2 + $0x250] sm:$0xff]
    %v179 = vld [vmem:[#allocation2 + $0x258] sm:$0xff]
    %v180 = vld [vmem:[#allocation2 + $0x260] sm:$0xff]
    %v181 = vld [vmem:[#allocation2 + $0x268] sm:$0xff]
    %v182 = vld [vmem:[#allocation2 + $0x270] sm:$0xff]
    %v183 = vld [vmem:[#allocation2 + $0x278] sm:$0xff]
    %v184 = vld [vmem:[#allocation2 + $0x280] sm:$0xff]
    %v185 = vld [vmem:[#allocation2 + $0x288] sm:$0xff]
    %v186 = vld [vmem:[#allocation2 + $0x290] sm:$0xff]
    %v187 = vld [vmem:[#allocation2 + $0x298] sm:$0xff]
    %v188 = vld [vmem:[#allocation2 + $0x2a0] sm:$0xff]
    %v189 = vld [vmem:[#allocation2 + $0x2a8] sm:$0xff]
    %v190 = vld [vmem:[#allocation2 + $0x2b0] sm:$0xff]
    %v191 = vld [vmem:[#allocation2 + $0x2b8] sm:$0xff]
    %v192 = vld [vmem:[#allocation2 + $0x2c0] sm:$0xff]
    %v193 = vld [vmem:[#allocation2 + $0x2c8] sm:$0xff]
    %v194 = vld [vmem:[#allocation2 + $0x2d0] sm:$0xff]
    %v195 = vld [vmem:[#allocation2 + $0x2d8] sm:$0xff]
    %v196 = vld [vmem:[#allocation2 + $0x2e0] sm:$0xff]
    %v197 = vld [vmem:[#allocation2 + $0x2e8] sm:$0xff]
    %v198 = vld [vmem:[#allocation2 + $0x2f0] sm:$0xff]
    %v199 = vld [vmem:[#allocation2 + $0x2f8] sm:$0xff]
    %v200 = vld [vmem:[#allocation2 + $0x300] sm:$0xff]
    %v201 = vld [vmem:[#allocation2 + $0x308] sm:$0xff]
    %v202 = vld [vmem:[#allocation2 + $0x310] sm:$0xff]
    %v203 = vld [vmem:[#allocation2 + $0x318] sm:$0xff]
    %v204 = vld [vmem:[#allocation2 + $0x320] sm:$0xff]
    %v205 = vld [vmem:[#allocation2 + $0x328] sm:$0xff]
    %v206 = vld [vmem:[#allocation2 + $0x330] sm:$0xff]
    %v207 = vld [vmem:[#allocation2 + $0x338] sm:$0xff]
    %v208 = vld [vmem:[#allocation2 + $0x340] sm:$0xff]
    %v209 = vld [vmem:[#allocation2 + $0x348] sm:$0xff]
    %v210 = vld [vmem:[#allocation2 + $0x350] sm:$0xff]
    %v211 = vld [vmem:[#allocation2 + $0x358] sm:$0xff]
    %v212 = vld [vmem:[#allocation2 + $0x360] sm:$0xff]
    %v213 = vld [vmem:[#allocation2 + $0x368] sm:$0xff]
    %v214 = vld [vmem:[#allocation2 + $0x370] sm:$0xff]
    %v215 = vld [vmem:[#allocation2 + $0x378] sm:$0xff]
    %v216 = vld [vmem:[#allocation2 + $0x380] sm:$0xff]
    %v217 = vld [vmem:[#allocation2 + $0x388] sm:$0xff]
    %v218 = vld [vmem:[#allocation2 + $0x390] sm:$0xff]
    %v219 = vld [vmem:[#allocation2 + $0x398] sm:$0xff]
    %v220 = vld [vmem:[#allocation2 + $0x3a0] sm:$0xff]
    %v221 = vld [vmem:[#allocation2 + $0x3a8] sm:$0xff]
    %v222 = vld [vmem:[#allocation2 + $0x3b0] sm:$0xff]
    %v223 = vld [vmem:[#allocation2 + $0x3b8] sm:$0xff]
    %v224 = vld [vmem:[#allocation2 + $0x3c0] sm:$0xff]
    %v225 = vld [vmem:[#allocation2 + $0x3c8] sm:$0xff]
    %v226 = vld [vmem:[#allocation2 + $0x3d0] sm:$0xff]
    %v227 = vld [vmem:[#allocation2 + $0x3d8] sm:$0xff]
    %v228 = vld [vmem:[#allocation2 + $0x3e0] sm:$0xff]
    %v229 = vld [vmem:[#allocation2 + $0x3e8] sm:$0xff]
    %v230 = vld [vmem:[#allocation2 + $0x3f0] sm:$0xff]
    %v231 = vld [vmem:[#allocation2 + $0x3f8] sm:$0xff]
    %v232 = vld [vmem:[#allocation2 + $0x400] sm:$0xff]
    %v233 = vld [vmem:[#allocation2 + $0x408] sm:$0xff]
    %v234 = vld [vmem:[#allocation2 + $0x410] sm:$0xff]
    %v235 = vld [vmem:[#allocation2 + $0x418] sm:$0xff]
    %v236 = vld [vmem:[#allocation2 + $0x420] sm:$0xff]
    %v237 = vld [vmem:[#allocation2 + $0x428] sm:$0xff]
    %v238 = vld [vmem:[#allocation2 + $0x430] sm:$0xff]
    %v239 = vld [vmem:[#allocation2 + $0x438] sm:$0xff]
    %v240 = vld [vmem:[#allocation2 + $0x440] sm:$0xff]
    %v241 = vld [vmem:[#allocation2 + $0x448] sm:$0xff]
    %v242 = vld [vmem:[#allocation2 + $0x450] sm:$0xff]
    %v243 = vld [vmem:[#allocation2 + $0x458] sm:$0xff]
    %v244 = vld [vmem:[#allocation2 + $0x460] sm:$0xff]
    %v245 = vld [vmem:[#allocation2 + $0x468] sm:$0xff]
    %v246 = vld [vmem:[#allocation2 + $0x470] sm:$0xff]
    %v247 = vld [vmem:[#allocation2 + $0x478] sm:$0xff]
    %v248 = vld [vmem:[#allocation2 + $0x480] sm:$0xff]
    %v249 = vld [vmem:[#allocation2 + $0x488] sm:$0xff]
    %v250 = vld [vmem:[#allocation2 + $0x490] sm:$0xff]
    %v251 = vld [vmem:[#allocation2 + $0x498] sm:$0xff]
    %v252 = vld [vmem:[#allocation2 + $0x4a0] sm:$0xff]
    %v253 = vld [vmem:[#allocation2 + $0x4a8] sm:$0xff]
    %v254 = vld [vmem:[#allocation2 + $0x4b0] sm:$0xff]
    %v255 = vld [vmem:[#allocation2 + $0x4b8] sm:$0xff]
    %v256 = vld [vmem:[#allocation2 + $0x4c0] sm:$0xff]
    %v257 = vld [vmem:[#allocation2 + $0x4c8] sm:$0xff]
    %v258 = vld [vmem:[#allocation2 + $0x4d0] sm:$0xff]
    %v259 = vld [vmem:[#allocation2 + $0x4d8] sm:$0xff]
    %v260 = vld [vmem:[#allocation2 + $0x4e0] sm:$0xff]
    %v261 = vld [vmem:[#allocation2 + $0x4e8] sm:$0xff]
    %v262 = vld [vmem:[#allocation2 + $0x4f0] sm:$0xff]
    %v263 = vld [vmem:[#allocation2 + $0x4f8] sm:$0xff]
    %v264 = vld [vmem:[#allocation2 + $0x500] sm:$0xff]
    %v265 = vld [vmem:[#allocation2 + $0x508] sm:$0xff]
    %v266 = vld [vmem:[#allocation2 + $0x510] sm:$0xff]
    %v267 = vld [vmem:[#allocation2 + $0x518] sm:$0xff]
    %v268 = vld [vmem:[#allocation2 + $0x520] sm:$0xff]
    %v269 = vld [vmem:[#allocation2 + $0x528] sm:$0xff]
    %v270 = vld [vmem:[#allocation2 + $0x530] sm:$0xff]
    %v271 = vld [vmem:[#allocation2 + $0x538] sm:$0xff]
    %v272 = vld [vmem:[#allocation2 + $0x540] sm:$0xff]
    %v273 = vld [vmem:[#allocation2 + $0x548] sm:$0xff]
    %v274 = vld [vmem:[#allocation2 + $0x550] sm:$0xff]
    %v275 = vld [vmem:[#allocation2 + $0x558] sm:$0xff]
    %v276 = vld [vmem:[#allocation2 + $0x560] sm:$0xff]
    %v277 = vld [vmem:[#allocation2 + $0x568] sm:$0xff]
    %v278 = vld [vmem:[#allocation2 + $0x570] sm:$0xff]
    %v279 = vld [vmem:[#allocation2 + $0x578] sm:$0xff]
    %v280 = vld [vmem:[#allocation2 + $0x580] sm:$0xff]
    %v281 = vld [vmem:[#allocation2 + $0x588] sm:$0xff]
    %v282 = vld [vmem:[#allocation2 + $0x590] sm:$0xff]
    %v283 = vld [vmem:[#allocation2 + $0x598] sm:$0xff]
    %v284 = vld [vmem:[#allocation2 + $0x5a0] sm:$0xff]
    %v285 = vld [vmem:[#allocation2 + $0x5a8] sm:$0xff]
    %v286 = vld [vmem:[#allocation2 + $0x5b0] sm:$0xff]
    %v287 = vld [vmem:[#allocation2 + $0x5b8] sm:$0xff]
    %v288 = vld [vmem:[#allocation2 + $0x5c0] sm:$0xff]
    %v289 = vld [vmem:[#allocation2 + $0x5c8] sm:$0xff]
    %v290 = vld [vmem:[#allocation2 + $0x5d0] sm:$0xff]
    %v291 = vld [vmem:[#allocation2 + $0x5d8] sm:$0xff]
    %v292 = vld [vmem:[#allocation2 + $0x5e0] sm:$0xff]
    %v293 = vld [vmem:[#allocation2 + $0x5e8] sm:$0xff]
    %v294 = vld [vmem:[#allocation2 + $0x5f0] sm:$0xff]
    %v295 = vld [vmem:[#allocation2 + $0x5f8] sm:$0xff]
    %v296 = vld [vmem:[#allocation2 + $0x600] sm:$0xff]
    %v297 = vld [vmem:[#allocation2 + $0x608] sm:$0xff]
    %v298 = vld [vmem:[#allocation2 + $0x610] sm:$0xff]
    %v299 = vld [vmem:[#allocation2 + $0x618] sm:$0xff]
    %v300 = vld [vmem:[#allocation2 + $0x620] sm:$0xff]
    %v301 = vld [vmem:[#allocation2 + $0x628] sm:$0xff]
    %v302 = vld [vmem:[#allocation2 + $0x630] sm:$0xff]
    %v303 = vld [vmem:[#allocation2 + $0x638] sm:$0xff]
    %v304 = vld [vmem:[#allocation2 + $0x640] sm:$0xff]
    %v305 = vld [vmem:[#allocation2 + $0x648] sm:$0xff]
    %v306 = vld [vmem:[#allocation2 + $0x650] sm:$0xff]
    %v307 = vld [vmem:[#allocation2 + $0x658] sm:$0xff]
    %v308 = vld [vmem:[#allocation2 + $0x660] sm:$0xff]
    %v309 = vld [vmem:[#allocation2 + $0x668] sm:$0xff]
    %v310 = vld [vmem:[#allocation2 + $0x670] sm:$0xff]
    %v311 = vld [vmem:[#allocation2 + $0x678] sm:$0xff]
    %v312 = vld [vmem:[#allocation2 + $0x680] sm:$0xff]
    %v313 = vld [vmem:[#allocation2 + $0x688] sm:$0xff]
    %v314 = vld [vmem:[#allocation2 + $0x690] sm:$0xff]
    %v315 = vld [vmem:[#allocation2 + $0x698] sm:$0xff]
    %v316 = vld [vmem:[#allocation2 + $0x6a0] sm:$0xff]
    %v317 = vld [vmem:[#allocation2 + $0x6a8] sm:$0xff]
    %v318 = vld [vmem:[#allocation2 + $0x6b0] sm:$0xff]
    %v319 = vld [vmem:[#allocation2 + $0x6b8] sm:$0xff]
    %v320 = vld [vmem:[#allocation2 + $0x6c0] sm:$0xff]
    %v321 = vld [vmem:[#allocation2 + $0x6c8] sm:$0xff]
    %v322 = vld [vmem:[#allocation2 + $0x6d0] sm:$0xff]
    %v323 = vld [vmem:[#allocation2 + $0x6d8] sm:$0xff]
    %v324 = vld [vmem:[#allocation2 + $0x6e0] sm:$0xff]
    %v325 = vld [vmem:[#allocation2 + $0x6e8] sm:$0xff]
    %v326 = vld [vmem:[#allocation2 + $0x6f0] sm:$0xff]
    %v327 = vld [vmem:[#allocation2 + $0x6f8] sm:$0xff]
    %v328 = vld [vmem:[#allocation2 + $0x700] sm:$0xff]
    %v329 = vld [vmem:[#allocation2 + $0x708] sm:$0xff]
    %v330 = vld [vmem:[#allocation2 + $0x710] sm:$0xff]
    %v331 = vld [vmem:[#allocation2 + $0x718] sm:$0xff]
    %v332 = vld [vmem:[#allocation2 + $0x720] sm:$0xff]
    %v333 = vld [vmem:[#allocation2 + $0x728] sm:$0xff]
    %v334 = vld [vmem:[#allocation2 + $0x730] sm:$0xff]
    %v335 = vld [vmem:[#allocation2 + $0x738] sm:$0xff]
    %v336 = vld [vmem:[#allocation2 + $0x740] sm:$0xff]
    %v337 = vld [vmem:[#allocation2 + $0x748] sm:$0xff]
    %v338 = vld [vmem:[#allocation2 + $0x750] sm:$0xff]
    %v339 = vld [vmem:[#allocation2 + $0x758] sm:$0xff]
    %v340 = vld [vmem:[#allocation2 + $0x760] sm:$0xff]
    %v341 = vld [vmem:[#allocation2 + $0x768] sm:$0xff]
    %v342 = vld [vmem:[#allocation2 + $0x770] sm:$0xff]
    %v343 = vld [vmem:[#allocation2 + $0x778] sm:$0xff]
    %v344 = vld [vmem:[#allocation2 + $0x780] sm:$0xff]
    %v345 = vld [vmem:[#allocation2 + $0x788] sm:$0xff]
    %v346 = vld [vmem:[#allocation2 + $0x790] sm:$0xff]
    %v347 = vld [vmem:[#allocation2 + $0x798] sm:$0xff]
    %v348 = vld [vmem:[#allocation2 + $0x7a0] sm:$0xff]
    %v349 = vld [vmem:[#allocation2 + $0x7a8] sm:$0xff]
    %v350 = vld [vmem:[#allocation2 + $0x7b0] sm:$0xff]
    %v351 = vld [vmem:[#allocation2 + $0x7b8] sm:$0xff]
    %v352 = vld [vmem:[#allocation2 + $0x7c0] sm:$0xff]
    %v353 = vld [vmem:[#allocation2 + $0x7c8] sm:$0xff]
    %v354 = vld [vmem:[#allocation2 + $0x7d0] sm:$0xff]
    %v355 = vld [vmem:[#allocation2 + $0x7d8] sm:$0xff]
    %v356 = vld [vmem:[#allocation2 + $0x7e0] sm:$0xff]
    %v357 = vld [vmem:[#allocation2 + $0x7e8] sm:$0xff]
    %v358 = vld [vmem:[#allocation2 + $0x7f0] sm:$0xff]
    %v359 = vld [vmem:[#allocation2 + $0x7f8] sm:$0xff]
    %v360 = vld [vmem:[#allocation2 + $0x800] sm:$0xff]
    %v361 = vld [vmem:[#allocation2 + $0x808] sm:$0xff]
    %v362 = vld [vmem:[#allocation2 + $0x810] sm:$0xff]
    %v363 = vld [vmem:[#allocation2 + $0x818] sm:$0xff]
    %v364 = vld [vmem:[#allocation2 + $0x820] sm:$0xff]
    %v365 = vld [vmem:[#allocation2 + $0x828] sm:$0xff]
    %v366 = vld [vmem:[#allocation2 + $0x830] sm:$0xff]
    %v367 = vld [vmem:[#allocation2 + $0x838] sm:$0xff]
    %v368 = vld [vmem:[#allocation2 + $0x840] sm:$0xff]
    %v369 = vld [vmem:[#allocation2 + $0x848] sm:$0xff]
    %v370 = vld [vmem:[#allocation2 + $0x850] sm:$0xff]
    %v371 = vld [vmem:[#allocation2 + $0x858] sm:$0xff]
    %v372 = vld [vmem:[#allocation2 + $0x860] sm:$0xff]
    %v373 = vld [vmem:[#allocation2 + $0x868] sm:$0xff]
    %v374 = vld [vmem:[#allocation2 + $0x870] sm:$0xff]
    %v375 = vld [vmem:[#allocation2 + $0x878] sm:$0xff]
    %v376 = vld [vmem:[#allocation2 + $0x880] sm:$0xff]
    %v377 = vld [vmem:[#allocation2 + $0x888] sm:$0xff]
    %v378 = vld [vmem:[#allocation2 + $0x890] sm:$0xff]
    %v379 = vld [vmem:[#allocation2 + $0x898] sm:$0xff]
    %v380 = vld [vmem:[#allocation2 + $0x8a0] sm:$0xff]
    %v381 = vld [vmem:[#allocation2 + $0x8a8] sm:$0xff]
    %v382 = vld [vmem:[#allocation2 + $0x8b0] sm:$0xff]
    %v383 = vld [vmem:[#allocation2 + $0x8b8] sm:$0xff]
    %v384 = vld [vmem:[#allocation2 + $0x8c0] sm:$0xff]
    %v385 = vld [vmem:[#allocation2 + $0x8c8] sm:$0xff]
    %v386 = vld [vmem:[#allocation2 + $0x8d0] sm:$0xff]
    %v387 = vld [vmem:[#allocation2 + $0x8d8] sm:$0xff]
    %v388 = vld [vmem:[#allocation2 + $0x8e0] sm:$0xff]
    %v389 = vld [vmem:[#allocation2 + $0x8e8] sm:$0xff]
    %v390 = vld [vmem:[#allocation2 + $0x8f0] sm:$0xff]
    %v391 = vld [vmem:[#allocation2 + $0x8f8] sm:$0xff]
    %v392 = vld [vmem:[#allocation2 + $0x900] sm:$0xff]
    %v393 = vld [vmem:[#allocation2 + $0x908] sm:$0xff]
    %v394 = vld [vmem:[#allocation2 + $0x910] sm:$0xff]
    %v395 = vld [vmem:[#allocation2 + $0x918] sm:$0xff]
    %v396 = vld [vmem:[#allocation2 + $0x920] sm:$0xff]
    %v397 = vld [vmem:[#allocation2 + $0x928] sm:$0xff]
    %v398 = vld [vmem:[#allocation2 + $0x930] sm:$0xff]
    %v399 = vld [vmem:[#allocation2 + $0x938] sm:$0xff]
    %v400 = vld [vmem:[#allocation2 + $0x940] sm:$0xff]
    %v401 = vld [vmem:[#allocation2 + $0x948] sm:$0xff]
    %v402 = vld [vmem:[#allocation2 + $0x950] sm:$0xff]
    %v403 = vld [vmem:[#allocation2 + $0x958] sm:$0xff]
    %v404 = vld [vmem:[#allocation2 + $0x960] sm:$0xff]
    %v405 = vld [vmem:[#allocation2 + $0x968] sm:$0xff]
    %v406 = vld [vmem:[#allocation2 + $0x970] sm:$0xff]
    %v407 = vld [vmem:[#allocation2 + $0x978] sm:$0xff]
    %v408 = vld [vmem:[#allocation2 + $0x980] sm:$0xff]
    %v409 = vld [vmem:[#allocation2 + $0x988] sm:$0xff]
    %v410 = vld [vmem:[#allocation2 + $0x990] sm:$0xff]
    %v411 = vld [vmem:[#allocation2 + $0x998] sm:$0xff]
    %v412 = vld [vmem:[#allocation2 + $0x9a0] sm:$0xff]
    %v413 = vld [vmem:[#allocation2 + $0x9a8] sm:$0xff]
    %v414 = vld [vmem:[#allocation2 + $0x9b0] sm:$0xff]
    %v415 = vld [vmem:[#allocation2 + $0x9b8] sm:$0xff]
    %v416 = vld [vmem:[#allocation2 + $0x9c0] sm:$0xff]
    %v417 = vld [vmem:[#allocation2 + $0x9c8] sm:$0xff]
    %v418 = vld [vmem:[#allocation2 + $0x9d0] sm:$0xff]
    %v419 = vld [vmem:[#allocation2 + $0x9d8] sm:$0xff]
    %v420 = vld [vmem:[#allocation2 + $0x9e0] sm:$0xff]
    %v421 = vld [vmem:[#allocation2 + $0x9e8] sm:$0xff]
    %v422 = vld [vmem:[#allocation2 + $0x9f0] sm:$0xff]
    %v423 = vld [vmem:[#allocation2 + $0x9f8] sm:$0xff]
    %v424 = vld [vmem:[#allocation2 + $0xa00] sm:$0xff]
    %v425 = vld [vmem:[#allocation2 + $0xa08] sm:$0xff]
    %v426 = vld [vmem:[#allocation2 + $0xa10] sm:$0xff]
    %v427 = vld [vmem:[#allocation2 + $0xa18] sm:$0xff]
    %v428 = vld [vmem:[#allocation2 + $0xa20] sm:$0xff]
    %v429 = vld [vmem:[#allocation2 + $0xa28] sm:$0xff]
    %v430 = vld [vmem:[#allocation2 + $0xa30] sm:$0xff]
    %v431 = vld [vmem:[#allocation2 + $0xa38] sm:$0xff]
    %v432 = vld [vmem:[#allocation2 + $0xa40] sm:$0xff]
    %v433 = vld [vmem:[#allocation2 + $0xa48] sm:$0xff]
    %v434 = vld [vmem:[#allocation2 + $0xa50] sm:$0xff]
    %v435 = vld [vmem:[#allocation2 + $0xa58] sm:$0xff]
    %v436 = vld [vmem:[#allocation2 + $0xa60] sm:$0xff]
    %v437 = vld [vmem:[#allocation2 + $0xa68] sm:$0xff]
    %v438 = vld [vmem:[#allocation2 + $0xa70] sm:$0xff]
    %v439 = vld [vmem:[#allocation2 + $0xa78] sm:$0xff]
    %v440 = vld [vmem:[#allocation2 + $0xa80] sm:$0xff]
    %v441 = vld [vmem:[#allocation2 + $0xa88] sm:$0xff]
    %v442 = vld [vmem:[#allocation2 + $0xa90] sm:$0xff]
    %v443 = vld [vmem:[#allocation2 + $0xa98] sm:$0xff]
    %v444 = vld [vmem:[#allocation2 + $0xaa0] sm:$0xff]
    %v445 = vld [vmem:[#allocation2 + $0xaa8] sm:$0xff]
    %v446 = vld [vmem:[#allocation2 + $0xab0] sm:$0xff]
    %v447 = vld [vmem:[#allocation2 + $0xab8] sm:$0xff]
    %v448 = vld [vmem:[#allocation2 + $0xac0] sm:$0xff]
    %v449 = vld [vmem:[#allocation2 + $0xac8] sm:$0xff]
    %v450 = vld [vmem:[#allocation2 + $0xad0] sm:$0xff]
    %v451 = vld [vmem:[#allocation2 + $0xad8] sm:$0xff]
    %v452 = vld [vmem:[#allocation2 + $0xae0] sm:$0xff]
    %v453 = vld [vmem:[#allocation2 + $0xae8] sm:$0xff]
    %v454 = vld [vmem:[#allocation2 + $0xaf0] sm:$0xff]
    %v455 = vld [vmem:[#allocation2 + $0xaf8] sm:$0xff]
    %v456 = vld [vmem:[#allocation2 + $0xb00] sm:$0xff]
    %v457 = vld [vmem:[#allocation2 + $0xb08] sm:$0xff]
    %v458 = vld [vmem:[#allocation2 + $0xb10] sm:$0xff]
    %v459 = vld [vmem:[#allocation2 + $0xb18] sm:$0xff]
    %v460 = vld [vmem:[#allocation2 + $0xb20] sm:$0xff]
    %v461 = vld [vmem:[#allocation2 + $0xb28] sm:$0xff]
    %v462 = vld [vmem:[#allocation2 + $0xb30] sm:$0xff]
    %v463 = vld [vmem:[#allocation2 + $0xb38] sm:$0xff]
    %v464 = vld [vmem:[#allocation2 + $0xb40] sm:$0xff]
    %v465 = vld [vmem:[#allocation2 + $0xb48] sm:$0xff]
    %v466 = vld [vmem:[#allocation2 + $0xb50] sm:$0xff]
    %v467 = vld [vmem:[#allocation2 + $0xb58] sm:$0xff]
    %v468 = vld [vmem:[#allocation2 + $0xb60] sm:$0xff]
    %v469 = vld [vmem:[#allocation2 + $0xb68] sm:$0xff]
    %v470 = vld [vmem:[#allocation2 + $0xb70] sm:$0xff]
    %v471 = vld [vmem:[#allocation2 + $0xb78] sm:$0xff]
    %v472 = vld [vmem:[#allocation2 + $0xb80] sm:$0xff]
    %v473 = vld [vmem:[#allocation2 + $0xb88] sm:$0xff]
    %v474 = vld [vmem:[#allocation2 + $0xb90] sm:$0xff]
    %v475 = vld [vmem:[#allocation2 + $0xb98] sm:$0xff]
    %v476 = vld [vmem:[#allocation2 + $0xba0] sm:$0xff]
    %v477 = vld [vmem:[#allocation2 + $0xba8] sm:$0xff]
    %v478 = vld [vmem:[#allocation2 + $0xbb0] sm:$0xff]
    %v479 = vld [vmem:[#allocation2 + $0xbb8] sm:$0xff]
    %v480 = vld [vmem:[#allocation2 + $0xbc0] sm:$0xff]
    %v481 = vld [vmem:[#allocation2 + $0xbc8] sm:$0xff]
    %v482 = vld [vmem:[#allocation2 + $0xbd0] sm:$0xff]
    %v483 = vld [vmem:[#allocation2 + $0xbd8] sm:$0xff]
    %v484 = vld [vmem:[#allocation2 + $0xbe0] sm:$0xff]
    %v485 = vld [vmem:[#allocation2 + $0xbe8] sm:$0xff]
    %v486 = vld [vmem:[#allocation2 + $0xbf0] sm:$0xff]
    %v487 = vld [vmem:[#allocation2 + $0xbf8] sm:$0xff]
    %v488 = vld [vmem:[#allocation2 + $0xc00] sm:$0xff]
    %v489 = vld [vmem:[#allocation2 + $0xc08] sm:$0xff]
    %v490 = vld [vmem:[#allocation2 + $0xc10] sm:$0xff]
    %v491 = vld [vmem:[#allocation2 + $0xc18] sm:$0xff]
    %v492 = vld [vmem:[#allocation2 + $0xc20] sm:$0xff]
    %v493 = vld [vmem:[#allocation2 + $0xc28] sm:$0xff]
    %v494 = vld [vmem:[#allocation2 + $0xc30] sm:$0xff]
    %v495 = vld [vmem:[#allocation2 + $0xc38] sm:$0xff]
    %v496 = vld [vmem:[#allocation2 + $0xc40] sm:$0xff]
    %v497 = vld [vmem:[#allocation2 + $0xc48] sm:$0xff]
    %v498 = vld [vmem:[#allocation2 + $0xc50] sm:$0xff]
    %v499 = vld [vmem:[#allocation2 + $0xc58] sm:$0xff]
    %v500 = vld [vmem:[#allocation2 + $0xc60] sm:$0xff]
    %v501 = vld [vmem:[#allocation2 + $0xc68] sm:$0xff]
    %v502 = vld [vmem:[#allocation2 + $0xc70] sm:$0xff]
    %v503 = vld [vmem:[#allocation2 + $0xc78] sm:$0xff]
    %v504 = vld [vmem:[#allocation2 + $0xc80] sm:$0xff]
    %v505 = vld [vmem:[#allocation2 + $0xc88] sm:$0xff]
    %v506 = vld [vmem:[#allocation2 + $0xc90] sm:$0xff]
    %v507 = vld [vmem:[#allocation2 + $0xc98] sm:$0xff]
    %v508 = vld [vmem:[#allocation2 + $0xca0] sm:$0xff]
    %v509 = vld [vmem:[#allocation2 + $0xca8] sm:$0xff]
    %v510 = vld [vmem:[#allocation2 + $0xcb0] sm:$0xff]
    %v511 = vld [vmem:[#allocation2 + $0xcb8] sm:$0xff]
    %v512 = vld [vmem:[#allocation2 + $0xcc0] sm:$0xff]
    %v513 = vld [vmem:[#allocation2 + $0xcc8] sm:$0xff]
    %v514 = vld [vmem:[#allocation2 + $0xcd0] sm:$0xff]
    %v515 = vld [vmem:[#allocation2 + $0xcd8] sm:$0xff]
    %v516 = vld [vmem:[#allocation2 + $0xce0] sm:$0xff]
    %v517 = vld [vmem:[#allocation2 + $0xce8] sm:$0xff]
    %v518 = vld [vmem:[#allocation2 + $0xcf0] sm:$0xff]
    %v519 = vld [vmem:[#allocation2 + $0xcf8] sm:$0xff]
    %v520 = vld [vmem:[#allocation2 + $0xd00] sm:$0xff]
    %v521 = vld [vmem:[#allocation2 + $0xd08] sm:$0xff]
    %v522 = vld [vmem:[#allocation2 + $0xd10] sm:$0xff]
    %v523 = vld [vmem:[#allocation2 + $0xd18] sm:$0xff]
    %v524 = vld [vmem:[#allocation2 + $0xd20] sm:$0xff]
    %v525 = vld [vmem:[#allocation2 + $0xd28] sm:$0xff]
    %v526 = vld [vmem:[#allocation2 + $0xd30] sm:$0xff]
    %v527 = vld [vmem:[#allocation2 + $0xd38] sm:$0xff]
    %v528 = vld [vmem:[#allocation2 + $0xd40] sm:$0xff]
    %v529 = vld [vmem:[#allocation2 + $0xd48] sm:$0xff]
    %v530 = vld [vmem:[#allocation2 + $0xd50] sm:$0xff]
    %v531 = vld [vmem:[#allocation2 + $0xd58] sm:$0xff]
    %v532 = vld [vmem:[#allocation2 + $0xd60] sm:$0xff]
    %v533 = vld [vmem:[#allocation2 + $0xd68] sm:$0xff]
    %v534 = vld [vmem:[#allocation2 + $0xd70] sm:$0xff]
    %v535 = vld [vmem:[#allocation2 + $0xd78] sm:$0xff]
    %v536 = vld [vmem:[#allocation2 + $0xd80] sm:$0xff]
    %v537 = vld [vmem:[#allocation2 + $0xd88] sm:$0xff]
    %v538 = vld [vmem:[#allocation2 + $0xd90] sm:$0xff]
    %v539 = vld [vmem:[#allocation2 + $0xd98] sm:$0xff]
    %v540 = vld [vmem:[#allocation2 + $0xda0] sm:$0xff]
    %v541 = vld [vmem:[#allocation2 + $0xda8] sm:$0xff]
    %v542 = vld [vmem:[#allocation2 + $0xdb0] sm:$0xff]
    %v543 = vld [vmem:[#allocation2 + $0xdb8] sm:$0xff]
    %v544 = vld [vmem:[#allocation2 + $0xdc0] sm:$0xff]
    %v545 = vld [vmem:[#allocation2 + $0xdc8] sm:$0xff]
    %v546 = vld [vmem:[#allocation2 + $0xdd0] sm:$0xff]
    %v547 = vld [vmem:[#allocation2 + $0xdd8] sm:$0xff]
    %v548 = vld [vmem:[#allocation2 + $0xde0] sm:$0xff]
    %v549 = vld [vmem:[#allocation2 + $0xde8] sm:$0xff]
    %v550 = vld [vmem:[#allocation2 + $0xdf0] sm:$0xff]
    %v551 = vld [vmem:[#allocation2 + $0xdf8] sm:$0xff]
    %v552 = vld [vmem:[#allocation2 + $0xe00] sm:$0xff]
    %v553 = vld [vmem:[#allocation2 + $0xe08] sm:$0xff]
    %v554 = vld [vmem:[#allocation2 + $0xe10] sm:$0xff]
    %v555 = vld [vmem:[#allocation2 + $0xe18] sm:$0xff]
    %v556 = vld [vmem:[#allocation2 + $0xe20] sm:$0xff]
    %v557 = vld [vmem:[#allocation2 + $0xe28] sm:$0xff]
    %v558 = vld [vmem:[#allocation2 + $0xe30] sm:$0xff]
    %v559 = vld [vmem:[#allocation2 + $0xe38] sm:$0xff]
    %v560 = vld [vmem:[#allocation2 + $0xe40] sm:$0xff]
    %v561 = vld [vmem:[#allocation2 + $0xe48] sm:$0xff]
    %v562 = vld [vmem:[#allocation2 + $0xe50] sm:$0xff]
    %v563 = vld [vmem:[#allocation2 + $0xe58] sm:$0xff]
    %v564 = vld [vmem:[#allocation2 + $0xe60] sm:$0xff]
    %v565 = vld [vmem:[#allocation2 + $0xe68] sm:$0xff]
    %v566 = vld [vmem:[#allocation2 + $0xe70] sm:$0xff]
    %v567 = vld [vmem:[#allocation2 + $0xe78] sm:$0xff]
    %v568 = vld [vmem:[#allocation2 + $0xe80] sm:$0xff]
    %v569 = vld [vmem:[#allocation2 + $0xe88] sm:$0xff]
    %v570 = vld [vmem:[#allocation2 + $0xe90] sm:$0xff]
    %v571 = vld [vmem:[#allocation2 + $0xe98] sm:$0xff]
    %v572 = vld [vmem:[#allocation2 + $0xea0] sm:$0xff]
    %v573 = vld [vmem:[#allocation2 + $0xea8] sm:$0xff]
    %v574 = vld [vmem:[#allocation2 + $0xeb0] sm:$0xff]
    %v575 = vld [vmem:[#allocation2 + $0xeb8] sm:$0xff]
    %v576 = vld [vmem:[#allocation2 + $0xec0] sm:$0xff]
    %v577 = vld [vmem:[#allocation2 + $0xec8] sm:$0xff]
    %v578 = vld [vmem:[#allocation2 + $0xed0] sm:$0xff]
    %v579 = vld [vmem:[#allocation2 + $0xed8] sm:$0xff]
    %v580 = vld [vmem:[#allocation2 + $0xee0] sm:$0xff]
    %v581 = vld [vmem:[#allocation2 + $0xee8] sm:$0xff]
    %v582 = vld [vmem:[#allocation2 + $0xef0] sm:$0xff]
    %v583 = vld [vmem:[#allocation2 + $0xef8] sm:$0xff]
    %v584 = vld [vmem:[#allocation2 + $0xf00] sm:$0xff]
    %v585 = vld [vmem:[#allocation2 + $0xf08] sm:$0xff]
    %v586 = vld [vmem:[#allocation2 + $0xf10] sm:$0xff]
    %v587 = vld [vmem:[#allocation2 + $0xf18] sm:$0xff]
    %v588 = vld [vmem:[#allocation2 + $0xf20] sm:$0xff]
    %v589 = vld [vmem:[#allocation2 + $0xf28] sm:$0xff]
    %v590 = vld [vmem:[#allocation2 + $0xf30] sm:$0xff]
    %v591 = vld [vmem:[#allocation2 + $0xf38] sm:$0xff]
    %v592 = vld [vmem:[#allocation2 + $0xf40] sm:$0xff]
    %v593 = vld [vmem:[#allocation2 + $0xf48] sm:$0xff]
    %v594 = vld [vmem:[#allocation2 + $0xf50] sm:$0xff]
    %v595 = vld [vmem:[#allocation2 + $0xf58] sm:$0xff]
    %v596 = vld [vmem:[#allocation2 + $0xf60] sm:$0xff]
    %v597 = vld [vmem:[#allocation2 + $0xf68] sm:$0xff]
    %v598 = vld [vmem:[#allocation2 + $0xf70] sm:$0xff]
    %v599 = vld [vmem:[#allocation2 + $0xf78] sm:$0xff]
    %v600 = vld [vmem:[#allocation2 + $0xf80] sm:$0xff]
    %v601 = vld [vmem:[#allocation2 + $0xf88] sm:$0xff]
    %v602 = vld [vmem:[#allocation2 + $0xf90] sm:$0xff]
    %v603 = vld [vmem:[#allocation2 + $0xf98] sm:$0xff]
    %v604 = vld [vmem:[#allocation2 + $0xfa0] sm:$0xff]
    %v605 = vld [vmem:[#allocation2 + $0xfa8] sm:$0xff]
    %v606 = vld [vmem:[#allocation2 + $0xfb0] sm:$0xff]
    %v607 = vld [vmem:[#allocation2 + $0xfb8] sm:$0xff]
    %v608 = vld [vmem:[#allocation2 + $0xfc0] sm:$0xff]
    %v609 = vld [vmem:[#allocation2 + $0xfc8] sm:$0xff]
    %v610 = vld [vmem:[#allocation2 + $0xfd0] sm:$0xff]
    %v611 = vld [vmem:[#allocation2 + $0xfd8] sm:$0xff]
    %v612 = vld [vmem:[#allocation2 + $0xfe0] sm:$0xff]
    %v613 = vld [vmem:[#allocation2 + $0xfe8] sm:$0xff]
    %v614 = vld [vmem:[#allocation2 + $0xff0] sm:$0xff]
    %v615 = vld [vmem:[#allocation2 + $0xff8] sm:$0xff]
    %v616 = vld [vmem:[#allocation4] sm:$0xf]
    %v618 = vlaneseq
    %v619 = vshrl.u32 %v618, 7
    %v620 = vsub.s32 0, %v619
    %v621 = vrot.slane %v616, %v620
    %v622 = vlaneseq
    %v623 = vshrl.u32 %v622, 7
    %v624 = vsub.s32 1, %v623
    %v625 = vrot.slane %v616, %v624
    %v626 = vlaneseq
    %v627 = vshrl.u32 %v626, 7
    %v628 = vsub.s32 2, %v627
    %v629 = vrot.slane %v616, %v628
    %v630 = vlaneseq
    %v631 = vshrl.u32 %v630, 7
    %v632 = vsub.s32 3, %v631
    %v633 = vrot.slane %v616, %v632
    %v1150 = vunpack.c.l.b16 %v104
    %v1151 = vunpack.c.h.b16 %v104
    %v1152 = vunpack.c.l.b16 %v105
    %v1153 = vunpack.c.h.b16 %v105
    %v1154 = vunpack.c.l.b16 %v106
    %v1155 = vunpack.c.h.b16 %v106
    %v1156 = vunpack.c.l.b16 %v107
    %v1157 = vunpack.c.h.b16 %v107
    %v1158 = vunpack.c.l.b16 %v108
    %v1159 = vunpack.c.h.b16 %v108
    %v1160 = vunpack.c.l.b16 %v109
    %v1161 = vunpack.c.h.b16 %v109
    %v1162 = vunpack.c.l.b16 %v110
    %v1163 = vunpack.c.h.b16 %v110
    %v1164 = vunpack.c.l.b16 %v111
    %v1165 = vunpack.c.h.b16 %v111
    %v1166 = vunpack.c.l.b16 %v112
    %v1167 = vunpack.c.h.b16 %v112
    %v1168 = vunpack.c.l.b16 %v113
    %v1169 = vunpack.c.h.b16 %v113
    %v1170 = vunpack.c.l.b16 %v114
    %v1171 = vunpack.c.h.b16 %v114
    %v1172 = vunpack.c.l.b16 %v115
    %v1173 = vunpack.c.h.b16 %v115
    %v1174 = vunpack.c.l.b16 %v116
    %v1175 = vunpack.c.h.b16 %v116
    %v1176 = vunpack.c.l.b16 %v117
    %v1177 = vunpack.c.h.b16 %v117
    %v1178 = vunpack.c.l.b16 %v118
    %v1179 = vunpack.c.h.b16 %v118
    %v1180 = vunpack.c.l.b16 %v119
    %v1181 = vunpack.c.h.b16 %v119
    %v1182 = vunpack.c.l.b16 %v120
    %v1183 = vunpack.c.h.b16 %v120
    %v1184 = vunpack.c.l.b16 %v121
    %v1185 = vunpack.c.h.b16 %v121
    %v1186 = vunpack.c.l.b16 %v122
    %v1187 = vunpack.c.h.b16 %v122
    %v1188 = vunpack.c.l.b16 %v123
    %v1189 = vunpack.c.h.b16 %v123
    %v1190 = vunpack.c.l.b16 %v124
    %v1191 = vunpack.c.h.b16 %v124
    %v1192 = vunpack.c.l.b16 %v125
    %v1193 = vunpack.c.h.b16 %v125
    %v1194 = vunpack.c.l.b16 %v126
    %v1195 = vunpack.c.h.b16 %v126
    %v1196 = vunpack.c.l.b16 %v127
    %v1197 = vunpack.c.h.b16 %v127
    %v1198 = vunpack.c.l.b16 %v128
    %v1199 = vunpack.c.h.b16 %v128
    %v1200 = vunpack.c.l.b16 %v129
    %v1201 = vunpack.c.h.b16 %v129
    %v1202 = vunpack.c.l.b16 %v130
    %v1203 = vunpack.c.h.b16 %v130
    %v1204 = vunpack.c.l.b16 %v131
    %v1205 = vunpack.c.h.b16 %v131
    %v1206 = vunpack.c.l.b16 %v132
    %v1207 = vunpack.c.h.b16 %v132
    %v1208 = vunpack.c.l.b16 %v133
    %v1209 = vunpack.c.h.b16 %v133
    %v1210 = vunpack.c.l.b16 %v134
    %v1211 = vunpack.c.h.b16 %v134
    %v1212 = vunpack.c.l.b16 %v135
    %v1213 = vunpack.c.h.b16 %v135
    %v1214 = vunpack.c.l.b16 %v136
    %v1215 = vunpack.c.h.b16 %v136
    %v1216 = vunpack.c.l.b16 %v137
    %v1217 = vunpack.c.h.b16 %v137
    %v1218 = vunpack.c.l.b16 %v138
    %v1219 = vunpack.c.h.b16 %v138
    %v1220 = vunpack.c.l.b16 %v139
    %v1221 = vunpack.c.h.b16 %v139
    %v1222 = vunpack.c.l.b16 %v140
    %v1223 = vunpack.c.h.b16 %v140
    %v1224 = vunpack.c.l.b16 %v141
    %v1225 = vunpack.c.h.b16 %v141
    %v1226 = vunpack.c.l.b16 %v142
    %v1227 = vunpack.c.h.b16 %v142
    %v1228 = vunpack.c.l.b16 %v143
    %v1229 = vunpack.c.h.b16 %v143
    %v1230 = vunpack.c.l.b16 %v144
    %v1231 = vunpack.c.h.b16 %v144
    %v1232 = vunpack.c.l.b16 %v145
    %v1233 = vunpack.c.h.b16 %v145
    %v1234 = vunpack.c.l.b16 %v146
    %v1235 = vunpack.c.h.b16 %v146
    %v1236 = vunpack.c.l.b16 %v147
    %v1237 = vunpack.c.h.b16 %v147
    %v1238 = vunpack.c.l.b16 %v148
    %v1239 = vunpack.c.h.b16 %v148
    %v1240 = vunpack.c.l.b16 %v149
    %v1241 = vunpack.c.h.b16 %v149
    %v1242 = vunpack.c.l.b16 %v150
    %v1243 = vunpack.c.h.b16 %v150
    %v1244 = vunpack.c.l.b16 %v151
    %v1245 = vunpack.c.h.b16 %v151
    %v1246 = vunpack.c.l.b16 %v152
    %v1247 = vunpack.c.h.b16 %v152
    %v1248 = vunpack.c.l.b16 %v153
    %v1249 = vunpack.c.h.b16 %v153
    %v1250 = vunpack.c.l.b16 %v154
    %v1251 = vunpack.c.h.b16 %v154
    %v1252 = vunpack.c.l.b16 %v155
    %v1253 = vunpack.c.h.b16 %v155
    %v1254 = vunpack.c.l.b16 %v156
    %v1255 = vunpack.c.h.b16 %v156
    %v1256 = vunpack.c.l.b16 %v157
    %v1257 = vunpack.c.h.b16 %v157
    %v1258 = vunpack.c.l.b16 %v158
    %v1259 = vunpack.c.h.b16 %v158
    %v1260 = vunpack.c.l.b16 %v159
    %v1261 = vunpack.c.h.b16 %v159
    %v1262 = vunpack.c.l.b16 %v160
    %v1263 = vunpack.c.h.b16 %v160
    %v1264 = vunpack.c.l.b16 %v161
    %v1265 = vunpack.c.h.b16 %v161
    %v1266 = vunpack.c.l.b16 %v162
    %v1267 = vunpack.c.h.b16 %v162
    %v1268 = vunpack.c.l.b16 %v163
    %v1269 = vunpack.c.h.b16 %v163
    %v1270 = vunpack.c.l.b16 %v164
    %v1271 = vunpack.c.h.b16 %v164
    %v1272 = vunpack.c.l.b16 %v165
    %v1273 = vunpack.c.h.b16 %v165
    %v1274 = vunpack.c.l.b16 %v166
    %v1275 = vunpack.c.h.b16 %v166
    %v1276 = vunpack.c.l.b16 %v167
    %v1277 = vunpack.c.h.b16 %v167
    %v1278 = vunpack.c.l.b16 %v168
    %v1279 = vunpack.c.h.b16 %v168
    %v1280 = vunpack.c.l.b16 %v169
    %v1281 = vunpack.c.h.b16 %v169
    %v1282 = vunpack.c.l.b16 %v170
    %v1283 = vunpack.c.h.b16 %v170
    %v1284 = vunpack.c.l.b16 %v171
    %v1285 = vunpack.c.h.b16 %v171
    %v1286 = vunpack.c.l.b16 %v172
    %v1287 = vunpack.c.h.b16 %v172
    %v1288 = vunpack.c.l.b16 %v173
    %v1289 = vunpack.c.h.b16 %v173
    %v1290 = vunpack.c.l.b16 %v174
    %v1291 = vunpack.c.h.b16 %v174
    %v1292 = vunpack.c.l.b16 %v175
    %v1293 = vunpack.c.h.b16 %v175
    %v1294 = vunpack.c.l.b16 %v176
    %v1295 = vunpack.c.h.b16 %v176
    %v1296 = vunpack.c.l.b16 %v177
    %v1297 = vunpack.c.h.b16 %v177
    %v1298 = vunpack.c.l.b16 %v178
    %v1299 = vunpack.c.h.b16 %v178
    %v1300 = vunpack.c.l.b16 %v179
    %v1301 = vunpack.c.h.b16 %v179
    %v1302 = vunpack.c.l.b16 %v180
    %v1303 = vunpack.c.h.b16 %v180
    %v1304 = vunpack.c.l.b16 %v181
    %v1305 = vunpack.c.h.b16 %v181
    %v1306 = vunpack.c.l.b16 %v182
    %v1307 = vunpack.c.h.b16 %v182
    %v1308 = vunpack.c.l.b16 %v183
    %v1309 = vunpack.c.h.b16 %v183
    %v1310 = vunpack.c.l.b16 %v184
    %v1311 = vunpack.c.h.b16 %v184
    %v1312 = vunpack.c.l.b16 %v185
    %v1313 = vunpack.c.h.b16 %v185
    %v1314 = vunpack.c.l.b16 %v186
    %v1315 = vunpack.c.h.b16 %v186
    %v1316 = vunpack.c.l.b16 %v187
    %v1317 = vunpack.c.h.b16 %v187
    %v1318 = vunpack.c.l.b16 %v188
    %v1319 = vunpack.c.h.b16 %v188
    %v1320 = vunpack.c.l.b16 %v189
    %v1321 = vunpack.c.h.b16 %v189
    %v1322 = vunpack.c.l.b16 %v190
    %v1323 = vunpack.c.h.b16 %v190
    %v1324 = vunpack.c.l.b16 %v191
    %v1325 = vunpack.c.h.b16 %v191
    %v1326 = vunpack.c.l.b16 %v192
    %v1327 = vunpack.c.h.b16 %v192
    %v1328 = vunpack.c.l.b16 %v193
    %v1329 = vunpack.c.h.b16 %v193
    %v1330 = vunpack.c.l.b16 %v194
    %v1331 = vunpack.c.h.b16 %v194
    %v1332 = vunpack.c.l.b16 %v195
    %v1333 = vunpack.c.h.b16 %v195
    %v1334 = vunpack.c.l.b16 %v196
    %v1335 = vunpack.c.h.b16 %v196
    %v1336 = vunpack.c.l.b16 %v197
    %v1337 = vunpack.c.h.b16 %v197
    %v1338 = vunpack.c.l.b16 %v198
    %v1339 = vunpack.c.h.b16 %v198
    %v1340 = vunpack.c.l.b16 %v199
    %v1341 = vunpack.c.h.b16 %v199
    %v1342 = vunpack.c.l.b16 %v200
    %v1343 = vunpack.c.h.b16 %v200
    %v1344 = vunpack.c.l.b16 %v201
    %v1345 = vunpack.c.h.b16 %v201
    %v1346 = vunpack.c.l.b16 %v202
    %v1347 = vunpack.c.h.b16 %v202
    %v1348 = vunpack.c.l.b16 %v203
    %v1349 = vunpack.c.h.b16 %v203
    %v1350 = vunpack.c.l.b16 %v204
    %v1351 = vunpack.c.h.b16 %v204
    %v1352 = vunpack.c.l.b16 %v205
    %v1353 = vunpack.c.h.b16 %v205
    %v1354 = vunpack.c.l.b16 %v206
    %v1355 = vunpack.c.h.b16 %v206
    %v1356 = vunpack.c.l.b16 %v207
    %v1357 = vunpack.c.h.b16 %v207
    %v1358 = vunpack.c.l.b16 %v208
    %v1359 = vunpack.c.h.b16 %v208
    %v1360 = vunpack.c.l.b16 %v209
    %v1361 = vunpack.c.h.b16 %v209
    %v1362 = vunpack.c.l.b16 %v210
    %v1363 = vunpack.c.h.b16 %v210
    %v1364 = vunpack.c.l.b16 %v211
    %v1365 = vunpack.c.h.b16 %v211
    %v1366 = vunpack.c.l.b16 %v212
    %v1367 = vunpack.c.h.b16 %v212
    %v1368 = vunpack.c.l.b16 %v213
    %v1369 = vunpack.c.h.b16 %v213
    %v1370 = vunpack.c.l.b16 %v214
    %v1371 = vunpack.c.h.b16 %v214
    %v1372 = vunpack.c.l.b16 %v215
    %v1373 = vunpack.c.h.b16 %v215
    %v1374 = vunpack.c.l.b16 %v216
    %v1375 = vunpack.c.h.b16 %v216
    %v1376 = vunpack.c.l.b16 %v217
    %v1377 = vunpack.c.h.b16 %v217
    %v1378 = vunpack.c.l.b16 %v218
    %v1379 = vunpack.c.h.b16 %v218
    %v1380 = vunpack.c.l.b16 %v219
    %v1381 = vunpack.c.h.b16 %v219
    %v1382 = vunpack.c.l.b16 %v220
    %v1383 = vunpack.c.h.b16 %v220
    %v1384 = vunpack.c.l.b16 %v221
    %v1385 = vunpack.c.h.b16 %v221
    %v1386 = vunpack.c.l.b16 %v222
    %v1387 = vunpack.c.h.b16 %v222
    %v1388 = vunpack.c.l.b16 %v223
    %v1389 = vunpack.c.h.b16 %v223
    %v1390 = vunpack.c.l.b16 %v224
    %v1391 = vunpack.c.h.b16 %v224
    %v1392 = vunpack.c.l.b16 %v225
    %v1393 = vunpack.c.h.b16 %v225
    %v1394 = vunpack.c.l.b16 %v226
    %v1395 = vunpack.c.h.b16 %v226
    %v1396 = vunpack.c.l.b16 %v227
    %v1397 = vunpack.c.h.b16 %v227
    %v1398 = vunpack.c.l.b16 %v228
    %v1399 = vunpack.c.h.b16 %v228
    %v1400 = vunpack.c.l.b16 %v229
    %v1401 = vunpack.c.h.b16 %v229
    %v1402 = vunpack.c.l.b16 %v230
    %v1403 = vunpack.c.h.b16 %v230
    %v1404 = vunpack.c.l.b16 %v231
    %v1405 = vunpack.c.h.b16 %v231
    %v1406 = vunpack.c.l.b16 %v232
    %v1407 = vunpack.c.h.b16 %v232
    %v1408 = vunpack.c.l.b16 %v233
    %v1409 = vunpack.c.h.b16 %v233
    %v1410 = vunpack.c.l.b16 %v234
    %v1411 = vunpack.c.h.b16 %v234
    %v1412 = vunpack.c.l.b16 %v235
    %v1413 = vunpack.c.h.b16 %v235
    %v1414 = vunpack.c.l.b16 %v236
    %v1415 = vunpack.c.h.b16 %v236
    %v1416 = vunpack.c.l.b16 %v237
    %v1417 = vunpack.c.h.b16 %v237
    %v1418 = vunpack.c.l.b16 %v238
    %v1419 = vunpack.c.h.b16 %v238
    %v1420 = vunpack.c.l.b16 %v239
    %v1421 = vunpack.c.h.b16 %v239
    %v1422 = vunpack.c.l.b16 %v240
    %v1423 = vunpack.c.h.b16 %v240
    %v1424 = vunpack.c.l.b16 %v241
    %v1425 = vunpack.c.h.b16 %v241
    %v1426 = vunpack.c.l.b16 %v242
    %v1427 = vunpack.c.h.b16 %v242
    %v1428 = vunpack.c.l.b16 %v243
    %v1429 = vunpack.c.h.b16 %v243
    %v1430 = vunpack.c.l.b16 %v244
    %v1431 = vunpack.c.h.b16 %v244
    %v1432 = vunpack.c.l.b16 %v245
    %v1433 = vunpack.c.h.b16 %v245
    %v1434 = vunpack.c.l.b16 %v246
    %v1435 = vunpack.c.h.b16 %v246
    %v1436 = vunpack.c.l.b16 %v247
    %v1437 = vunpack.c.h.b16 %v247
    %v1438 = vunpack.c.l.b16 %v248
    %v1439 = vunpack.c.h.b16 %v248
    %v1440 = vunpack.c.l.b16 %v249
    %v1441 = vunpack.c.h.b16 %v249
    %v1442 = vunpack.c.l.b16 %v250
    %v1443 = vunpack.c.h.b16 %v250
    %v1444 = vunpack.c.l.b16 %v251
    %v1445 = vunpack.c.h.b16 %v251
    %v1446 = vunpack.c.l.b16 %v252
    %v1447 = vunpack.c.h.b16 %v252
    %v1448 = vunpack.c.l.b16 %v253
    %v1449 = vunpack.c.h.b16 %v253
    %v1450 = vunpack.c.l.b16 %v254
    %v1451 = vunpack.c.h.b16 %v254
    %v1452 = vunpack.c.l.b16 %v255
    %v1453 = vunpack.c.h.b16 %v255
    %v1454 = vunpack.c.l.b16 %v256
    %v1455 = vunpack.c.h.b16 %v256
    %v1456 = vunpack.c.l.b16 %v257
    %v1457 = vunpack.c.h.b16 %v257
    %v1458 = vunpack.c.l.b16 %v258
    %v1459 = vunpack.c.h.b16 %v258
    %v1460 = vunpack.c.l.b16 %v259
    %v1461 = vunpack.c.h.b16 %v259
    %v1462 = vunpack.c.l.b16 %v260
    %v1463 = vunpack.c.h.b16 %v260
    %v1464 = vunpack.c.l.b16 %v261
    %v1465 = vunpack.c.h.b16 %v261
    %v1466 = vunpack.c.l.b16 %v262
    %v1467 = vunpack.c.h.b16 %v262
    %v1468 = vunpack.c.l.b16 %v263
    %v1469 = vunpack.c.h.b16 %v263
    %v1470 = vunpack.c.l.b16 %v264
    %v1471 = vunpack.c.h.b16 %v264
    %v1472 = vunpack.c.l.b16 %v265
    %v1473 = vunpack.c.h.b16 %v265
    %v1474 = vunpack.c.l.b16 %v266
    %v1475 = vunpack.c.h.b16 %v266
    %v1476 = vunpack.c.l.b16 %v267
    %v1477 = vunpack.c.h.b16 %v267
    %v1478 = vunpack.c.l.b16 %v268
    %v1479 = vunpack.c.h.b16 %v268
    %v1480 = vunpack.c.l.b16 %v269
    %v1481 = vunpack.c.h.b16 %v269
    %v1482 = vunpack.c.l.b16 %v270
    %v1483 = vunpack.c.h.b16 %v270
    %v1484 = vunpack.c.l.b16 %v271
    %v1485 = vunpack.c.h.b16 %v271
    %v1486 = vunpack.c.l.b16 %v272
    %v1487 = vunpack.c.h.b16 %v272
    %v1488 = vunpack.c.l.b16 %v273
    %v1489 = vunpack.c.h.b16 %v273
    %v1490 = vunpack.c.l.b16 %v274
    %v1491 = vunpack.c.h.b16 %v274
    %v1492 = vunpack.c.l.b16 %v275
    %v1493 = vunpack.c.h.b16 %v275
    %v1494 = vunpack.c.l.b16 %v276
    %v1495 = vunpack.c.h.b16 %v276
    %v1496 = vunpack.c.l.b16 %v277
    %v1497 = vunpack.c.h.b16 %v277
    %v1498 = vunpack.c.l.b16 %v278
    %v1499 = vunpack.c.h.b16 %v278
    %v1500 = vunpack.c.l.b16 %v279
    %v1501 = vunpack.c.h.b16 %v279
    %v1502 = vunpack.c.l.b16 %v280
    %v1503 = vunpack.c.h.b16 %v280
    %v1504 = vunpack.c.l.b16 %v281
    %v1505 = vunpack.c.h.b16 %v281
    %v1506 = vunpack.c.l.b16 %v282
    %v1507 = vunpack.c.h.b16 %v282
    %v1508 = vunpack.c.l.b16 %v283
    %v1509 = vunpack.c.h.b16 %v283
    %v1510 = vunpack.c.l.b16 %v284
    %v1511 = vunpack.c.h.b16 %v284
    %v1512 = vunpack.c.l.b16 %v285
    %v1513 = vunpack.c.h.b16 %v285
    %v1514 = vunpack.c.l.b16 %v286
    %v1515 = vunpack.c.h.b16 %v286
    %v1516 = vunpack.c.l.b16 %v287
    %v1517 = vunpack.c.h.b16 %v287
    %v1518 = vunpack.c.l.b16 %v288
    %v1519 = vunpack.c.h.b16 %v288
    %v1520 = vunpack.c.l.b16 %v289
    %v1521 = vunpack.c.h.b16 %v289
    %v1522 = vunpack.c.l.b16 %v290
    %v1523 = vunpack.c.h.b16 %v290
    %v1524 = vunpack.c.l.b16 %v291
    %v1525 = vunpack.c.h.b16 %v291
    %v1526 = vunpack.c.l.b16 %v292
    %v1527 = vunpack.c.h.b16 %v292
    %v1528 = vunpack.c.l.b16 %v293
    %v1529 = vunpack.c.h.b16 %v293
    %v1530 = vunpack.c.l.b16 %v294
    %v1531 = vunpack.c.h.b16 %v294
    %v1532 = vunpack.c.l.b16 %v295
    %v1533 = vunpack.c.h.b16 %v295
    %v1534 = vunpack.c.l.b16 %v296
    %v1535 = vunpack.c.h.b16 %v296
    %v1536 = vunpack.c.l.b16 %v297
    %v1537 = vunpack.c.h.b16 %v297
    %v1538 = vunpack.c.l.b16 %v298
    %v1539 = vunpack.c.h.b16 %v298
    %v1540 = vunpack.c.l.b16 %v299
    %v1541 = vunpack.c.h.b16 %v299
    %v1542 = vunpack.c.l.b16 %v300
    %v1543 = vunpack.c.h.b16 %v300
    %v1544 = vunpack.c.l.b16 %v301
    %v1545 = vunpack.c.h.b16 %v301
    %v1546 = vunpack.c.l.b16 %v302
    %v1547 = vunpack.c.h.b16 %v302
    %v1548 = vunpack.c.l.b16 %v303
    %v1549 = vunpack.c.h.b16 %v303
    %v1550 = vunpack.c.l.b16 %v304
    %v1551 = vunpack.c.h.b16 %v304
    %v1552 = vunpack.c.l.b16 %v305
    %v1553 = vunpack.c.h.b16 %v305
    %v1554 = vunpack.c.l.b16 %v306
    %v1555 = vunpack.c.h.b16 %v306
    %v1556 = vunpack.c.l.b16 %v307
    %v1557 = vunpack.c.h.b16 %v307
    %v1558 = vunpack.c.l.b16 %v308
    %v1559 = vunpack.c.h.b16 %v308
    %v1560 = vunpack.c.l.b16 %v309
    %v1561 = vunpack.c.h.b16 %v309
    %v1562 = vunpack.c.l.b16 %v310
    %v1563 = vunpack.c.h.b16 %v310
    %v1564 = vunpack.c.l.b16 %v311
    %v1565 = vunpack.c.h.b16 %v311
    %v1566 = vunpack.c.l.b16 %v312
    %v1567 = vunpack.c.h.b16 %v312
    %v1568 = vunpack.c.l.b16 %v313
    %v1569 = vunpack.c.h.b16 %v313
    %v1570 = vunpack.c.l.b16 %v314
    %v1571 = vunpack.c.h.b16 %v314
    %v1572 = vunpack.c.l.b16 %v315
    %v1573 = vunpack.c.h.b16 %v315
    %v1574 = vunpack.c.l.b16 %v316
    %v1575 = vunpack.c.h.b16 %v316
    %v1576 = vunpack.c.l.b16 %v317
    %v1577 = vunpack.c.h.b16 %v317
    %v1578 = vunpack.c.l.b16 %v318
    %v1579 = vunpack.c.h.b16 %v318
    %v1580 = vunpack.c.l.b16 %v319
    %v1581 = vunpack.c.h.b16 %v319
    %v1582 = vunpack.c.l.b16 %v320
    %v1583 = vunpack.c.h.b16 %v320
    %v1584 = vunpack.c.l.b16 %v321
    %v1585 = vunpack.c.h.b16 %v321
    %v1586 = vunpack.c.l.b16 %v322
    %v1587 = vunpack.c.h.b16 %v322
    %v1588 = vunpack.c.l.b16 %v323
    %v1589 = vunpack.c.h.b16 %v323
    %v1590 = vunpack.c.l.b16 %v324
    %v1591 = vunpack.c.h.b16 %v324
    %v1592 = vunpack.c.l.b16 %v325
    %v1593 = vunpack.c.h.b16 %v325
    %v1594 = vunpack.c.l.b16 %v326
    %v1595 = vunpack.c.h.b16 %v326
    %v1596 = vunpack.c.l.b16 %v327
    %v1597 = vunpack.c.h.b16 %v327
    %v1598 = vunpack.c.l.b16 %v328
    %v1599 = vunpack.c.h.b16 %v328
    %v1600 = vunpack.c.l.b16 %v329
    %v1601 = vunpack.c.h.b16 %v329
    %v1602 = vunpack.c.l.b16 %v330
    %v1603 = vunpack.c.h.b16 %v330
    %v1604 = vunpack.c.l.b16 %v331
    %v1605 = vunpack.c.h.b16 %v331
    %v1606 = vunpack.c.l.b16 %v332
    %v1607 = vunpack.c.h.b16 %v332
    %v1608 = vunpack.c.l.b16 %v333
    %v1609 = vunpack.c.h.b16 %v333
    %v1610 = vunpack.c.l.b16 %v334
    %v1611 = vunpack.c.h.b16 %v334
    %v1612 = vunpack.c.l.b16 %v335
    %v1613 = vunpack.c.h.b16 %v335
    %v1614 = vunpack.c.l.b16 %v336
    %v1615 = vunpack.c.h.b16 %v336
    %v1616 = vunpack.c.l.b16 %v337
    %v1617 = vunpack.c.h.b16 %v337
    %v1618 = vunpack.c.l.b16 %v338
    %v1619 = vunpack.c.h.b16 %v338
    %v1620 = vunpack.c.l.b16 %v339
    %v1621 = vunpack.c.h.b16 %v339
    %v1622 = vunpack.c.l.b16 %v340
    %v1623 = vunpack.c.h.b16 %v340
    %v1624 = vunpack.c.l.b16 %v341
    %v1625 = vunpack.c.h.b16 %v341
    %v1626 = vunpack.c.l.b16 %v342
    %v1627 = vunpack.c.h.b16 %v342
    %v1628 = vunpack.c.l.b16 %v343
    %v1629 = vunpack.c.h.b16 %v343
    %v1630 = vunpack.c.l.b16 %v344
    %v1631 = vunpack.c.h.b16 %v344
    %v1632 = vunpack.c.l.b16 %v345
    %v1633 = vunpack.c.h.b16 %v345
    %v1634 = vunpack.c.l.b16 %v346
    %v1635 = vunpack.c.h.b16 %v346
    %v1636 = vunpack.c.l.b16 %v347
    %v1637 = vunpack.c.h.b16 %v347
    %v1638 = vunpack.c.l.b16 %v348
    %v1639 = vunpack.c.h.b16 %v348
    %v1640 = vunpack.c.l.b16 %v349
    %v1641 = vunpack.c.h.b16 %v349
    %v1642 = vunpack.c.l.b16 %v350
    %v1643 = vunpack.c.h.b16 %v350
    %v1644 = vunpack.c.l.b16 %v351
    %v1645 = vunpack.c.h.b16 %v351
    %v1646 = vunpack.c.l.b16 %v352
    %v1647 = vunpack.c.h.b16 %v352
    %v1648 = vunpack.c.l.b16 %v353
    %v1649 = vunpack.c.h.b16 %v353
    %v1650 = vunpack.c.l.b16 %v354
    %v1651 = vunpack.c.h.b16 %v354
    %v1652 = vunpack.c.l.b16 %v355
    %v1653 = vunpack.c.h.b16 %v355
    %v1654 = vunpack.c.l.b16 %v356
    %v1655 = vunpack.c.h.b16 %v356
    %v1656 = vunpack.c.l.b16 %v357
    %v1657 = vunpack.c.h.b16 %v357
    %v1658 = vunpack.c.l.b16 %v358
    %v1659 = vunpack.c.h.b16 %v358
    %v1660 = vunpack.c.l.b16 %v359
    %v1661 = vunpack.c.h.b16 %v359
    %v1662 = vunpack.c.l.b16 %v360
    %v1663 = vunpack.c.h.b16 %v360
    %v1664 = vunpack.c.l.b16 %v361
    %v1665 = vunpack.c.h.b16 %v361
    %v1666 = vunpack.c.l.b16 %v362
    %v1667 = vunpack.c.h.b16 %v362
    %v1668 = vunpack.c.l.b16 %v363
    %v1669 = vunpack.c.h.b16 %v363
    %v1670 = vunpack.c.l.b16 %v364
    %v1671 = vunpack.c.h.b16 %v364
    %v1672 = vunpack.c.l.b16 %v365
    %v1673 = vunpack.c.h.b16 %v365
    %v1674 = vunpack.c.l.b16 %v366
    %v1675 = vunpack.c.h.b16 %v366
    %v1676 = vunpack.c.l.b16 %v367
    %v1677 = vunpack.c.h.b16 %v367
    %v1678 = vunpack.c.l.b16 %v368
    %v1679 = vunpack.c.h.b16 %v368
    %v1680 = vunpack.c.l.b16 %v369
    %v1681 = vunpack.c.h.b16 %v369
    %v1682 = vunpack.c.l.b16 %v370
    %v1683 = vunpack.c.h.b16 %v370
    %v1684 = vunpack.c.l.b16 %v371
    %v1685 = vunpack.c.h.b16 %v371
    %v1686 = vunpack.c.l.b16 %v372
    %v1687 = vunpack.c.h.b16 %v372
    %v1688 = vunpack.c.l.b16 %v373
    %v1689 = vunpack.c.h.b16 %v373
    %v1690 = vunpack.c.l.b16 %v374
    %v1691 = vunpack.c.h.b16 %v374
    %v1692 = vunpack.c.l.b16 %v375
    %v1693 = vunpack.c.h.b16 %v375
    %v1694 = vunpack.c.l.b16 %v376
    %v1695 = vunpack.c.h.b16 %v376
    %v1696 = vunpack.c.l.b16 %v377
    %v1697 = vunpack.c.h.b16 %v377
    %v1698 = vunpack.c.l.b16 %v378
    %v1699 = vunpack.c.h.b16 %v378
    %v1700 = vunpack.c.l.b16 %v379
    %v1701 = vunpack.c.h.b16 %v379
    %v1702 = vunpack.c.l.b16 %v380
    %v1703 = vunpack.c.h.b16 %v380
    %v1704 = vunpack.c.l.b16 %v381
    %v1705 = vunpack.c.h.b16 %v381
    %v1706 = vunpack.c.l.b16 %v382
    %v1707 = vunpack.c.h.b16 %v382
    %v1708 = vunpack.c.l.b16 %v383
    %v1709 = vunpack.c.h.b16 %v383
    %v1710 = vunpack.c.l.b16 %v384
    %v1711 = vunpack.c.h.b16 %v384
    %v1712 = vunpack.c.l.b16 %v385
    %v1713 = vunpack.c.h.b16 %v385
    %v1714 = vunpack.c.l.b16 %v386
    %v1715 = vunpack.c.h.b16 %v386
    %v1716 = vunpack.c.l.b16 %v387
    %v1717 = vunpack.c.h.b16 %v387
    %v1718 = vunpack.c.l.b16 %v388
    %v1719 = vunpack.c.h.b16 %v388
    %v1720 = vunpack.c.l.b16 %v389
    %v1721 = vunpack.c.h.b16 %v389
    %v1722 = vunpack.c.l.b16 %v390
    %v1723 = vunpack.c.h.b16 %v390
    %v1724 = vunpack.c.l.b16 %v391
    %v1725 = vunpack.c.h.b16 %v391
    %v1726 = vunpack.c.l.b16 %v392
    %v1727 = vunpack.c.h.b16 %v392
    %v1728 = vunpack.c.l.b16 %v393
    %v1729 = vunpack.c.h.b16 %v393
    %v1730 = vunpack.c.l.b16 %v394
    %v1731 = vunpack.c.h.b16 %v394
    %v1732 = vunpack.c.l.b16 %v395
    %v1733 = vunpack.c.h.b16 %v395
    %v1734 = vunpack.c.l.b16 %v396
    %v1735 = vunpack.c.h.b16 %v396
    %v1736 = vunpack.c.l.b16 %v397
    %v1737 = vunpack.c.h.b16 %v397
    %v1738 = vunpack.c.l.b16 %v398
    %v1739 = vunpack.c.h.b16 %v398
    %v1740 = vunpack.c.l.b16 %v399
    %v1741 = vunpack.c.h.b16 %v399
    %v1742 = vunpack.c.l.b16 %v400
    %v1743 = vunpack.c.h.b16 %v400
    %v1744 = vunpack.c.l.b16 %v401
    %v1745 = vunpack.c.h.b16 %v401
    %v1746 = vunpack.c.l.b16 %v402
    %v1747 = vunpack.c.h.b16 %v402
    %v1748 = vunpack.c.l.b16 %v403
    %v1749 = vunpack.c.h.b16 %v403
    %v1750 = vunpack.c.l.b16 %v404
    %v1751 = vunpack.c.h.b16 %v404
    %v1752 = vunpack.c.l.b16 %v405
    %v1753 = vunpack.c.h.b16 %v405
    %v1754 = vunpack.c.l.b16 %v406
    %v1755 = vunpack.c.h.b16 %v406
    %v1756 = vunpack.c.l.b16 %v407
    %v1757 = vunpack.c.h.b16 %v407
    %v1758 = vunpack.c.l.b16 %v408
    %v1759 = vunpack.c.h.b16 %v408
    %v1760 = vunpack.c.l.b16 %v409
    %v1761 = vunpack.c.h.b16 %v409
    %v1762 = vunpack.c.l.b16 %v410
    %v1763 = vunpack.c.h.b16 %v410
    %v1764 = vunpack.c.l.b16 %v411
    %v1765 = vunpack.c.h.b16 %v411
    %v1766 = vunpack.c.l.b16 %v412
    %v1767 = vunpack.c.h.b16 %v412
    %v1768 = vunpack.c.l.b16 %v413
    %v1769 = vunpack.c.h.b16 %v413
    %v1770 = vunpack.c.l.b16 %v414
    %v1771 = vunpack.c.h.b16 %v414
    %v1772 = vunpack.c.l.b16 %v415
    %v1773 = vunpack.c.h.b16 %v415
    %v1774 = vunpack.c.l.b16 %v416
    %v1775 = vunpack.c.h.b16 %v416
    %v1776 = vunpack.c.l.b16 %v417
    %v1777 = vunpack.c.h.b16 %v417
    %v1778 = vunpack.c.l.b16 %v418
    %v1779 = vunpack.c.h.b16 %v418
    %v1780 = vunpack.c.l.b16 %v419
    %v1781 = vunpack.c.h.b16 %v419
    %v1782 = vunpack.c.l.b16 %v420
    %v1783 = vunpack.c.h.b16 %v420
    %v1784 = vunpack.c.l.b16 %v421
    %v1785 = vunpack.c.h.b16 %v421
    %v1786 = vunpack.c.l.b16 %v422
    %v1787 = vunpack.c.h.b16 %v422
    %v1788 = vunpack.c.l.b16 %v423
    %v1789 = vunpack.c.h.b16 %v423
    %v1790 = vunpack.c.l.b16 %v424
    %v1791 = vunpack.c.h.b16 %v424
    %v1792 = vunpack.c.l.b16 %v425
    %v1793 = vunpack.c.h.b16 %v425
    %v1794 = vunpack.c.l.b16 %v426
    %v1795 = vunpack.c.h.b16 %v426
    %v1796 = vunpack.c.l.b16 %v427
    %v1797 = vunpack.c.h.b16 %v427
    %v1798 = vunpack.c.l.b16 %v428
    %v1799 = vunpack.c.h.b16 %v428
    %v1800 = vunpack.c.l.b16 %v429
    %v1801 = vunpack.c.h.b16 %v429
    %v1802 = vunpack.c.l.b16 %v430
    %v1803 = vunpack.c.h.b16 %v430
    %v1804 = vunpack.c.l.b16 %v431
    %v1805 = vunpack.c.h.b16 %v431
    %v1806 = vunpack.c.l.b16 %v432
    %v1807 = vunpack.c.h.b16 %v432
    %v1808 = vunpack.c.l.b16 %v433
    %v1809 = vunpack.c.h.b16 %v433
    %v1810 = vunpack.c.l.b16 %v434
    %v1811 = vunpack.c.h.b16 %v434
    %v1812 = vunpack.c.l.b16 %v435
    %v1813 = vunpack.c.h.b16 %v435
    %v1814 = vunpack.c.l.b16 %v436
    %v1815 = vunpack.c.h.b16 %v436
    %v1816 = vunpack.c.l.b16 %v437
    %v1817 = vunpack.c.h.b16 %v437
    %v1818 = vunpack.c.l.b16 %v438
    %v1819 = vunpack.c.h.b16 %v438
    %v1820 = vunpack.c.l.b16 %v439
    %v1821 = vunpack.c.h.b16 %v439
    %v1822 = vunpack.c.l.b16 %v440
    %v1823 = vunpack.c.h.b16 %v440
    %v1824 = vunpack.c.l.b16 %v441
    %v1825 = vunpack.c.h.b16 %v441
    %v1826 = vunpack.c.l.b16 %v442
    %v1827 = vunpack.c.h.b16 %v442
    %v1828 = vunpack.c.l.b16 %v443
    %v1829 = vunpack.c.h.b16 %v443
    %v1830 = vunpack.c.l.b16 %v444
    %v1831 = vunpack.c.h.b16 %v444
    %v1832 = vunpack.c.l.b16 %v445
    %v1833 = vunpack.c.h.b16 %v445
    %v1834 = vunpack.c.l.b16 %v446
    %v1835 = vunpack.c.h.b16 %v446
    %v1836 = vunpack.c.l.b16 %v447
    %v1837 = vunpack.c.h.b16 %v447
    %v1838 = vunpack.c.l.b16 %v448
    %v1839 = vunpack.c.h.b16 %v448
    %v1840 = vunpack.c.l.b16 %v449
    %v1841 = vunpack.c.h.b16 %v449
    %v1842 = vunpack.c.l.b16 %v450
    %v1843 = vunpack.c.h.b16 %v450
    %v1844 = vunpack.c.l.b16 %v451
    %v1845 = vunpack.c.h.b16 %v451
    %v1846 = vunpack.c.l.b16 %v452
    %v1847 = vunpack.c.h.b16 %v452
    %v1848 = vunpack.c.l.b16 %v453
    %v1849 = vunpack.c.h.b16 %v453
    %v1850 = vunpack.c.l.b16 %v454
    %v1851 = vunpack.c.h.b16 %v454
    %v1852 = vunpack.c.l.b16 %v455
    %v1853 = vunpack.c.h.b16 %v455
    %v1854 = vunpack.c.l.b16 %v456
    %v1855 = vunpack.c.h.b16 %v456
    %v1856 = vunpack.c.l.b16 %v457
    %v1857 = vunpack.c.h.b16 %v457
    %v1858 = vunpack.c.l.b16 %v458
    %v1859 = vunpack.c.h.b16 %v458
    %v1860 = vunpack.c.l.b16 %v459
    %v1861 = vunpack.c.h.b16 %v459
    %v1862 = vunpack.c.l.b16 %v460
    %v1863 = vunpack.c.h.b16 %v460
    %v1864 = vunpack.c.l.b16 %v461
    %v1865 = vunpack.c.h.b16 %v461
    %v1866 = vunpack.c.l.b16 %v462
    %v1867 = vunpack.c.h.b16 %v462
    %v1868 = vunpack.c.l.b16 %v463
    %v1869 = vunpack.c.h.b16 %v463
    %v1870 = vunpack.c.l.b16 %v464
    %v1871 = vunpack.c.h.b16 %v464
    %v1872 = vunpack.c.l.b16 %v465
    %v1873 = vunpack.c.h.b16 %v465
    %v1874 = vunpack.c.l.b16 %v466
    %v1875 = vunpack.c.h.b16 %v466
    %v1876 = vunpack.c.l.b16 %v467
    %v1877 = vunpack.c.h.b16 %v467
    %v1878 = vunpack.c.l.b16 %v468
    %v1879 = vunpack.c.h.b16 %v468
    %v1880 = vunpack.c.l.b16 %v469
    %v1881 = vunpack.c.h.b16 %v469
    %v1882 = vunpack.c.l.b16 %v470
    %v1883 = vunpack.c.h.b16 %v470
    %v1884 = vunpack.c.l.b16 %v471
    %v1885 = vunpack.c.h.b16 %v471
    %v1886 = vunpack.c.l.b16 %v472
    %v1887 = vunpack.c.h.b16 %v472
    %v1888 = vunpack.c.l.b16 %v473
    %v1889 = vunpack.c.h.b16 %v473
    %v1890 = vunpack.c.l.b16 %v474
    %v1891 = vunpack.c.h.b16 %v474
    %v1892 = vunpack.c.l.b16 %v475
    %v1893 = vunpack.c.h.b16 %v475
    %v1894 = vunpack.c.l.b16 %v476
    %v1895 = vunpack.c.h.b16 %v476
    %v1896 = vunpack.c.l.b16 %v477
    %v1897 = vunpack.c.h.b16 %v477
    %v1898 = vunpack.c.l.b16 %v478
    %v1899 = vunpack.c.h.b16 %v478
    %v1900 = vunpack.c.l.b16 %v479
    %v1901 = vunpack.c.h.b16 %v479
    %v1902 = vunpack.c.l.b16 %v480
    %v1903 = vunpack.c.h.b16 %v480
    %v1904 = vunpack.c.l.b16 %v481
    %v1905 = vunpack.c.h.b16 %v481
    %v1906 = vunpack.c.l.b16 %v482
    %v1907 = vunpack.c.h.b16 %v482
    %v1908 = vunpack.c.l.b16 %v483
    %v1909 = vunpack.c.h.b16 %v483
    %v1910 = vunpack.c.l.b16 %v484
    %v1911 = vunpack.c.h.b16 %v484
    %v1912 = vunpack.c.l.b16 %v485
    %v1913 = vunpack.c.h.b16 %v485
    %v1914 = vunpack.c.l.b16 %v486
    %v1915 = vunpack.c.h.b16 %v486
    %v1916 = vunpack.c.l.b16 %v487
    %v1917 = vunpack.c.h.b16 %v487
    %v1918 = vunpack.c.l.b16 %v488
    %v1919 = vunpack.c.h.b16 %v488
    %v1920 = vunpack.c.l.b16 %v489
    %v1921 = vunpack.c.h.b16 %v489
    %v1922 = vunpack.c.l.b16 %v490
    %v1923 = vunpack.c.h.b16 %v490
    %v1924 = vunpack.c.l.b16 %v491
    %v1925 = vunpack.c.h.b16 %v491
    %v1926 = vunpack.c.l.b16 %v492
    %v1927 = vunpack.c.h.b16 %v492
    %v1928 = vunpack.c.l.b16 %v493
    %v1929 = vunpack.c.h.b16 %v493
    %v1930 = vunpack.c.l.b16 %v494
    %v1931 = vunpack.c.h.b16 %v494
    %v1932 = vunpack.c.l.b16 %v495
    %v1933 = vunpack.c.h.b16 %v495
    %v1934 = vunpack.c.l.b16 %v496
    %v1935 = vunpack.c.h.b16 %v496
    %v1936 = vunpack.c.l.b16 %v497
    %v1937 = vunpack.c.h.b16 %v497
    %v1938 = vunpack.c.l.b16 %v498
    %v1939 = vunpack.c.h.b16 %v498
    %v1940 = vunpack.c.l.b16 %v499
    %v1941 = vunpack.c.h.b16 %v499
    %v1942 = vunpack.c.l.b16 %v500
    %v1943 = vunpack.c.h.b16 %v500
    %v1944 = vunpack.c.l.b16 %v501
    %v1945 = vunpack.c.h.b16 %v501
    %v1946 = vunpack.c.l.b16 %v502
    %v1947 = vunpack.c.h.b16 %v502
    %v1948 = vunpack.c.l.b16 %v503
    %v1949 = vunpack.c.h.b16 %v503
    %v1950 = vunpack.c.l.b16 %v504
    %v1951 = vunpack.c.h.b16 %v504
    %v1952 = vunpack.c.l.b16 %v505
    %v1953 = vunpack.c.h.b16 %v505
    %v1954 = vunpack.c.l.b16 %v506
    %v1955 = vunpack.c.h.b16 %v506
    %v1956 = vunpack.c.l.b16 %v507
    %v1957 = vunpack.c.h.b16 %v507
    %v1958 = vunpack.c.l.b16 %v508
    %v1959 = vunpack.c.h.b16 %v508
    %v1960 = vunpack.c.l.b16 %v509
    %v1961 = vunpack.c.h.b16 %v509
    %v1962 = vunpack.c.l.b16 %v510
    %v1963 = vunpack.c.h.b16 %v510
    %v1964 = vunpack.c.l.b16 %v511
    %v1965 = vunpack.c.h.b16 %v511
    %v1966 = vunpack.c.l.b16 %v512
    %v1967 = vunpack.c.h.b16 %v512
    %v1968 = vunpack.c.l.b16 %v513
    %v1969 = vunpack.c.h.b16 %v513
    %v1970 = vunpack.c.l.b16 %v514
    %v1971 = vunpack.c.h.b16 %v514
    %v1972 = vunpack.c.l.b16 %v515
    %v1973 = vunpack.c.h.b16 %v515
    %v1974 = vunpack.c.l.b16 %v516
    %v1975 = vunpack.c.h.b16 %v516
    %v1976 = vunpack.c.l.b16 %v517
    %v1977 = vunpack.c.h.b16 %v517
    %v1978 = vunpack.c.l.b16 %v518
    %v1979 = vunpack.c.h.b16 %v518
    %v1980 = vunpack.c.l.b16 %v519
    %v1981 = vunpack.c.h.b16 %v519
    %v1982 = vunpack.c.l.b16 %v520
    %v1983 = vunpack.c.h.b16 %v520
    %v1984 = vunpack.c.l.b16 %v521
    %v1985 = vunpack.c.h.b16 %v521
    %v1986 = vunpack.c.l.b16 %v522
    %v1987 = vunpack.c.h.b16 %v522
    %v1988 = vunpack.c.l.b16 %v523
    %v1989 = vunpack.c.h.b16 %v523
    %v1990 = vunpack.c.l.b16 %v524
    %v1991 = vunpack.c.h.b16 %v524
    %v1992 = vunpack.c.l.b16 %v525
    %v1993 = vunpack.c.h.b16 %v525
    %v1994 = vunpack.c.l.b16 %v526
    %v1995 = vunpack.c.h.b16 %v526
    %v1996 = vunpack.c.l.b16 %v527
    %v1997 = vunpack.c.h.b16 %v527
    %v1998 = vunpack.c.l.b16 %v528
    %v1999 = vunpack.c.h.b16 %v528
    %v2000 = vunpack.c.l.b16 %v529
    %v2001 = vunpack.c.h.b16 %v529
    %v2002 = vunpack.c.l.b16 %v530
    %v2003 = vunpack.c.h.b16 %v530
    %v2004 = vunpack.c.l.b16 %v531
    %v2005 = vunpack.c.h.b16 %v531
    %v2006 = vunpack.c.l.b16 %v532
    %v2007 = vunpack.c.h.b16 %v532
    %v2008 = vunpack.c.l.b16 %v533
    %v2009 = vunpack.c.h.b16 %v533
    %v2010 = vunpack.c.l.b16 %v534
    %v2011 = vunpack.c.h.b16 %v534
    %v2012 = vunpack.c.l.b16 %v535
    %v2013 = vunpack.c.h.b16 %v535
    %v2014 = vunpack.c.l.b16 %v536
    %v2015 = vunpack.c.h.b16 %v536
    %v2016 = vunpack.c.l.b16 %v537
    %v2017 = vunpack.c.h.b16 %v537
    %v2018 = vunpack.c.l.b16 %v538
    %v2019 = vunpack.c.h.b16 %v538
    %v2020 = vunpack.c.l.b16 %v539
    %v2021 = vunpack.c.h.b16 %v539
    %v2022 = vunpack.c.l.b16 %v540
    %v2023 = vunpack.c.h.b16 %v540
    %v2024 = vunpack.c.l.b16 %v541
    %v2025 = vunpack.c.h.b16 %v541
    %v2026 = vunpack.c.l.b16 %v542
    %v2027 = vunpack.c.h.b16 %v542
    %v2028 = vunpack.c.l.b16 %v543
    %v2029 = vunpack.c.h.b16 %v543
    %v2030 = vunpack.c.l.b16 %v544
    %v2031 = vunpack.c.h.b16 %v544
    %v2032 = vunpack.c.l.b16 %v545
    %v2033 = vunpack.c.h.b16 %v545
    %v2034 = vunpack.c.l.b16 %v546
    %v2035 = vunpack.c.h.b16 %v546
    %v2036 = vunpack.c.l.b16 %v547
    %v2037 = vunpack.c.h.b16 %v547
    %v2038 = vunpack.c.l.b16 %v548
    %v2039 = vunpack.c.h.b16 %v548
    %v2040 = vunpack.c.l.b16 %v549
    %v2041 = vunpack.c.h.b16 %v549
    %v2042 = vunpack.c.l.b16 %v550
    %v2043 = vunpack.c.h.b16 %v550
    %v2044 = vunpack.c.l.b16 %v551
    %v2045 = vunpack.c.h.b16 %v551
    %v2046 = vunpack.c.l.b16 %v552
    %v2047 = vunpack.c.h.b16 %v552
    %v2048 = vunpack.c.l.b16 %v553
    %v2049 = vunpack.c.h.b16 %v553
    %v2050 = vunpack.c.l.b16 %v554
    %v2051 = vunpack.c.h.b16 %v554
    %v2052 = vunpack.c.l.b16 %v555
    %v2053 = vunpack.c.h.b16 %v555
    %v2054 = vunpack.c.l.b16 %v556
    %v2055 = vunpack.c.h.b16 %v556
    %v2056 = vunpack.c.l.b16 %v557
    %v2057 = vunpack.c.h.b16 %v557
    %v2058 = vunpack.c.l.b16 %v558
    %v2059 = vunpack.c.h.b16 %v558
    %v2060 = vunpack.c.l.b16 %v559
    %v2061 = vunpack.c.h.b16 %v559
    %v2062 = vunpack.c.l.b16 %v560
    %v2063 = vunpack.c.h.b16 %v560
    %v2064 = vunpack.c.l.b16 %v561
    %v2065 = vunpack.c.h.b16 %v561
    %v2066 = vunpack.c.l.b16 %v562
    %v2067 = vunpack.c.h.b16 %v562
    %v2068 = vunpack.c.l.b16 %v563
    %v2069 = vunpack.c.h.b16 %v563
    %v2070 = vunpack.c.l.b16 %v564
    %v2071 = vunpack.c.h.b16 %v564
    %v2072 = vunpack.c.l.b16 %v565
    %v2073 = vunpack.c.h.b16 %v565
    %v2074 = vunpack.c.l.b16 %v566
    %v2075 = vunpack.c.h.b16 %v566
    %v2076 = vunpack.c.l.b16 %v567
    %v2077 = vunpack.c.h.b16 %v567
    %v2078 = vunpack.c.l.b16 %v568
    %v2079 = vunpack.c.h.b16 %v568
    %v2080 = vunpack.c.l.b16 %v569
    %v2081 = vunpack.c.h.b16 %v569
    %v2082 = vunpack.c.l.b16 %v570
    %v2083 = vunpack.c.h.b16 %v570
    %v2084 = vunpack.c.l.b16 %v571
    %v2085 = vunpack.c.h.b16 %v571
    %v2086 = vunpack.c.l.b16 %v572
    %v2087 = vunpack.c.h.b16 %v572
    %v2088 = vunpack.c.l.b16 %v573
    %v2089 = vunpack.c.h.b16 %v573
    %v2090 = vunpack.c.l.b16 %v574
    %v2091 = vunpack.c.h.b16 %v574
    %v2092 = vunpack.c.l.b16 %v575
    %v2093 = vunpack.c.h.b16 %v575
    %v2094 = vunpack.c.l.b16 %v576
    %v2095 = vunpack.c.h.b16 %v576
    %v2096 = vunpack.c.l.b16 %v577
    %v2097 = vunpack.c.h.b16 %v577
    %v2098 = vunpack.c.l.b16 %v578
    %v2099 = vunpack.c.h.b16 %v578
    %v2100 = vunpack.c.l.b16 %v579
    %v2101 = vunpack.c.h.b16 %v579
    %v2102 = vunpack.c.l.b16 %v580
    %v2103 = vunpack.c.h.b16 %v580
    %v2104 = vunpack.c.l.b16 %v581
    %v2105 = vunpack.c.h.b16 %v581
    %v2106 = vunpack.c.l.b16 %v582
    %v2107 = vunpack.c.h.b16 %v582
    %v2108 = vunpack.c.l.b16 %v583
    %v2109 = vunpack.c.h.b16 %v583
    %v2110 = vunpack.c.l.b16 %v584
    %v2111 = vunpack.c.h.b16 %v584
    %v2112 = vunpack.c.l.b16 %v585
    %v2113 = vunpack.c.h.b16 %v585
    %v2114 = vunpack.c.l.b16 %v586
    %v2115 = vunpack.c.h.b16 %v586
    %v2116 = vunpack.c.l.b16 %v587
    %v2117 = vunpack.c.h.b16 %v587
    %v2118 = vunpack.c.l.b16 %v588
    %v2119 = vunpack.c.h.b16 %v588
    %v2120 = vunpack.c.l.b16 %v589
    %v2121 = vunpack.c.h.b16 %v589
    %v2122 = vunpack.c.l.b16 %v590
    %v2123 = vunpack.c.h.b16 %v590
    %v2124 = vunpack.c.l.b16 %v591
    %v2125 = vunpack.c.h.b16 %v591
    %v2126 = vunpack.c.l.b16 %v592
    %v2127 = vunpack.c.h.b16 %v592
    %v2128 = vunpack.c.l.b16 %v593
    %v2129 = vunpack.c.h.b16 %v593
    %v2130 = vunpack.c.l.b16 %v594
    %v2131 = vunpack.c.h.b16 %v594
    %v2132 = vunpack.c.l.b16 %v595
    %v2133 = vunpack.c.h.b16 %v595
    %v2134 = vunpack.c.l.b16 %v596
    %v2135 = vunpack.c.h.b16 %v596
    %v2136 = vunpack.c.l.b16 %v597
    %v2137 = vunpack.c.h.b16 %v597
    %v2138 = vunpack.c.l.b16 %v598
    %v2139 = vunpack.c.h.b16 %v598
    %v2140 = vunpack.c.l.b16 %v599
    %v2141 = vunpack.c.h.b16 %v599
    %v2142 = vunpack.c.l.b16 %v600
    %v2143 = vunpack.c.h.b16 %v600
    %v2144 = vunpack.c.l.b16 %v601
    %v2145 = vunpack.c.h.b16 %v601
    %v2146 = vunpack.c.l.b16 %v602
    %v2147 = vunpack.c.h.b16 %v602
    %v2148 = vunpack.c.l.b16 %v603
    %v2149 = vunpack.c.h.b16 %v603
    %v2150 = vunpack.c.l.b16 %v604
    %v2151 = vunpack.c.h.b16 %v604
    %v2152 = vunpack.c.l.b16 %v605
    %v2153 = vunpack.c.h.b16 %v605
    %v2154 = vunpack.c.l.b16 %v606
    %v2155 = vunpack.c.h.b16 %v606
    %v2156 = vunpack.c.l.b16 %v607
    %v2157 = vunpack.c.h.b16 %v607
    %v2158 = vunpack.c.l.b16 %v608
    %v2159 = vunpack.c.h.b16 %v608
    %v2160 = vunpack.c.l.b16 %v609
    %v2161 = vunpack.c.h.b16 %v609
    %v2162 = vunpack.c.l.b16 %v610
    %v2163 = vunpack.c.h.b16 %v610
    %v2164 = vunpack.c.l.b16 %v611
    %v2165 = vunpack.c.h.b16 %v611
    %v2166 = vunpack.c.l.b16 %v612
    %v2167 = vunpack.c.h.b16 %v612
    %v2168 = vunpack.c.l.b16 %v613
    %v2169 = vunpack.c.h.b16 %v613
    %v2170 = vunpack.c.l.b16 %v614
    %v2171 = vunpack.c.h.b16 %v614
    %v2172 = vunpack.c.l.b16 %v615
    %v2173 = vunpack.c.h.b16 %v615
    %v2174 = vpack.c.b16 %v1154, %v1150
    %v2175 = vpack.c.b16 %v1155, %v1151
    %v2176 = vpack.c.b16 %v1156, %v1152
    %v2177 = vpack.c.b16 %v1157, %v1153
    %v2178 = vpack.c.b16 %v1162, %v1158
    %v2179 = vpack.c.b16 %v1163, %v1159
    %v2180 = vpack.c.b16 %v1164, %v1160
    %v2181 = vpack.c.b16 %v1165, %v1161
    %v2182 = vpack.c.b16 %v1170, %v1166
    %v2183 = vpack.c.b16 %v1171, %v1167
    %v2184 = vpack.c.b16 %v1172, %v1168
    %v2185 = vpack.c.b16 %v1173, %v1169
    %v2186 = vpack.c.b16 %v1178, %v1174
    %v2187 = vpack.c.b16 %v1179, %v1175
    %v2188 = vpack.c.b16 %v1180, %v1176
    %v2189 = vpack.c.b16 %v1181, %v1177
    %v2190 = vpack.c.b16 %v1186, %v1182
    %v2191 = vpack.c.b16 %v1187, %v1183
    %v2192 = vpack.c.b16 %v1188, %v1184
    %v2193 = vpack.c.b16 %v1189, %v1185
    %v2194 = vpack.c.b16 %v1194, %v1190
    %v2195 = vpack.c.b16 %v1195, %v1191
    %v2196 = vpack.c.b16 %v1196, %v1192
    %v2197 = vpack.c.b16 %v1197, %v1193
    %v2198 = vpack.c.b16 %v1202, %v1198
    %v2199 = vpack.c.b16 %v1203, %v1199
    %v2200 = vpack.c.b16 %v1204, %v1200
    %v2201 = vpack.c.b16 %v1205, %v1201
    %v2202 = vpack.c.b16 %v1210, %v1206
    %v2203 = vpack.c.b16 %v1211, %v1207
    %v2204 = vpack.c.b16 %v1212, %v1208
    %v2205 = vpack.c.b16 %v1213, %v1209
    %v2206 = vpack.c.b16 %v1218, %v1214
    %v2207 = vpack.c.b16 %v1219, %v1215
    %v2208 = vpack.c.b16 %v1220, %v1216
    %v2209 = vpack.c.b16 %v1221, %v1217
    %v2210 = vpack.c.b16 %v1226, %v1222
    %v2211 = vpack.c.b16 %v1227, %v1223
    %v2212 = vpack.c.b16 %v1228, %v1224
    %v2213 = vpack.c.b16 %v1229, %v1225
    %v2214 = vpack.c.b16 %v1234, %v1230
    %v2215 = vpack.c.b16 %v1235, %v1231
    %v2216 = vpack.c.b16 %v1236, %v1232
    %v2217 = vpack.c.b16 %v1237, %v1233
    %v2218 = vpack.c.b16 %v1242, %v1238
    %v2219 = vpack.c.b16 %v1243, %v1239
    %v2220 = vpack.c.b16 %v1244, %v1240
    %v2221 = vpack.c.b16 %v1245, %v1241
    %v2222 = vpack.c.b16 %v1250, %v1246
    %v2223 = vpack.c.b16 %v1251, %v1247
    %v2224 = vpack.c.b16 %v1252, %v1248
    %v2225 = vpack.c.b16 %v1253, %v1249
    %v2226 = vpack.c.b16 %v1258, %v1254
    %v2227 = vpack.c.b16 %v1259, %v1255
    %v2228 = vpack.c.b16 %v1260, %v1256
    %v2229 = vpack.c.b16 %v1261, %v1257
    %v2230 = vpack.c.b16 %v1266, %v1262
    %v2231 = vpack.c.b16 %v1267, %v1263
    %v2232 = vpack.c.b16 %v1268, %v1264
    %v2233 = vpack.c.b16 %v1269, %v1265
    %v2234 = vpack.c.b16 %v1274, %v1270
    %v2235 = vpack.c.b16 %v1275, %v1271
    %v2236 = vpack.c.b16 %v1276, %v1272
    %v2237 = vpack.c.b16 %v1277, %v1273
    %v2238 = vpack.c.b16 %v1282, %v1278
    %v2239 = vpack.c.b16 %v1283, %v1279
    %v2240 = vpack.c.b16 %v1284, %v1280
    %v2241 = vpack.c.b16 %v1285, %v1281
    %v2242 = vpack.c.b16 %v1290, %v1286
    %v2243 = vpack.c.b16 %v1291, %v1287
    %v2244 = vpack.c.b16 %v1292, %v1288
    %v2245 = vpack.c.b16 %v1293, %v1289
    %v2246 = vpack.c.b16 %v1298, %v1294
    %v2247 = vpack.c.b16 %v1299, %v1295
    %v2248 = vpack.c.b16 %v1300, %v1296
    %v2249 = vpack.c.b16 %v1301, %v1297
    %v2250 = vpack.c.b16 %v1306, %v1302
    %v2251 = vpack.c.b16 %v1307, %v1303
    %v2252 = vpack.c.b16 %v1308, %v1304
    %v2253 = vpack.c.b16 %v1309, %v1305
    %v2254 = vpack.c.b16 %v1314, %v1310
    %v2255 = vpack.c.b16 %v1315, %v1311
    %v2256 = vpack.c.b16 %v1316, %v1312
    %v2257 = vpack.c.b16 %v1317, %v1313
    %v2258 = vpack.c.b16 %v1322, %v1318
    %v2259 = vpack.c.b16 %v1323, %v1319
    %v2260 = vpack.c.b16 %v1324, %v1320
    %v2261 = vpack.c.b16 %v1325, %v1321
    %v2262 = vpack.c.b16 %v1330, %v1326
    %v2263 = vpack.c.b16 %v1331, %v1327
    %v2264 = vpack.c.b16 %v1332, %v1328
    %v2265 = vpack.c.b16 %v1333, %v1329
    %v2266 = vpack.c.b16 %v1338, %v1334
    %v2267 = vpack.c.b16 %v1339, %v1335
    %v2268 = vpack.c.b16 %v1340, %v1336
    %v2269 = vpack.c.b16 %v1341, %v1337
    %v2270 = vpack.c.b16 %v1346, %v1342
    %v2271 = vpack.c.b16 %v1347, %v1343
    %v2272 = vpack.c.b16 %v1348, %v1344
    %v2273 = vpack.c.b16 %v1349, %v1345
    %v2274 = vpack.c.b16 %v1354, %v1350
    %v2275 = vpack.c.b16 %v1355, %v1351
    %v2276 = vpack.c.b16 %v1356, %v1352
    %v2277 = vpack.c.b16 %v1357, %v1353
    %v2278 = vpack.c.b16 %v1362, %v1358
    %v2279 = vpack.c.b16 %v1363, %v1359
    %v2280 = vpack.c.b16 %v1364, %v1360
    %v2281 = vpack.c.b16 %v1365, %v1361
    %v2282 = vpack.c.b16 %v1370, %v1366
    %v2283 = vpack.c.b16 %v1371, %v1367
    %v2284 = vpack.c.b16 %v1372, %v1368
    %v2285 = vpack.c.b16 %v1373, %v1369
    %v2286 = vpack.c.b16 %v1378, %v1374
    %v2287 = vpack.c.b16 %v1379, %v1375
    %v2288 = vpack.c.b16 %v1380, %v1376
    %v2289 = vpack.c.b16 %v1381, %v1377
    %v2290 = vpack.c.b16 %v1386, %v1382
    %v2291 = vpack.c.b16 %v1387, %v1383
    %v2292 = vpack.c.b16 %v1388, %v1384
    %v2293 = vpack.c.b16 %v1389, %v1385
    %v2294 = vpack.c.b16 %v1394, %v1390
    %v2295 = vpack.c.b16 %v1395, %v1391
    %v2296 = vpack.c.b16 %v1396, %v1392
    %v2297 = vpack.c.b16 %v1397, %v1393
    %v2298 = vpack.c.b16 %v1402, %v1398
    %v2299 = vpack.c.b16 %v1403, %v1399
    %v2300 = vpack.c.b16 %v1404, %v1400
    %v2301 = vpack.c.b16 %v1405, %v1401
    %v2302 = vpack.c.b16 %v1410, %v1406
    %v2303 = vpack.c.b16 %v1411, %v1407
    %v2304 = vpack.c.b16 %v1412, %v1408
    %v2305 = vpack.c.b16 %v1413, %v1409
    %v2306 = vpack.c.b16 %v1418, %v1414
    %v2307 = vpack.c.b16 %v1419, %v1415
    %v2308 = vpack.c.b16 %v1420, %v1416
    %v2309 = vpack.c.b16 %v1421, %v1417
    %v2310 = vpack.c.b16 %v1426, %v1422
    %v2311 = vpack.c.b16 %v1427, %v1423
    %v2312 = vpack.c.b16 %v1428, %v1424
    %v2313 = vpack.c.b16 %v1429, %v1425
    %v2314 = vpack.c.b16 %v1434, %v1430
    %v2315 = vpack.c.b16 %v1435, %v1431
    %v2316 = vpack.c.b16 %v1436, %v1432
    %v2317 = vpack.c.b16 %v1437, %v1433
    %v2318 = vpack.c.b16 %v1442, %v1438
    %v2319 = vpack.c.b16 %v1443, %v1439
    %v2320 = vpack.c.b16 %v1444, %v1440
    %v2321 = vpack.c.b16 %v1445, %v1441
    %v2322 = vpack.c.b16 %v1450, %v1446
    %v2323 = vpack.c.b16 %v1451, %v1447
    %v2324 = vpack.c.b16 %v1452, %v1448
    %v2325 = vpack.c.b16 %v1453, %v1449
    %v2326 = vpack.c.b16 %v1458, %v1454
    %v2327 = vpack.c.b16 %v1459, %v1455
    %v2328 = vpack.c.b16 %v1460, %v1456
    %v2329 = vpack.c.b16 %v1461, %v1457
    %v2330 = vpack.c.b16 %v1466, %v1462
    %v2331 = vpack.c.b16 %v1467, %v1463
    %v2332 = vpack.c.b16 %v1468, %v1464
    %v2333 = vpack.c.b16 %v1469, %v1465
    %v2334 = vpack.c.b16 %v1474, %v1470
    %v2335 = vpack.c.b16 %v1475, %v1471
    %v2336 = vpack.c.b16 %v1476, %v1472
    %v2337 = vpack.c.b16 %v1477, %v1473
    %v2338 = vpack.c.b16 %v1482, %v1478
    %v2339 = vpack.c.b16 %v1483, %v1479
    %v2340 = vpack.c.b16 %v1484, %v1480
    %v2341 = vpack.c.b16 %v1485, %v1481
    %v2342 = vpack.c.b16 %v1490, %v1486
    %v2343 = vpack.c.b16 %v1491, %v1487
    %v2344 = vpack.c.b16 %v1492, %v1488
    %v2345 = vpack.c.b16 %v1493, %v1489
    %v2346 = vpack.c.b16 %v1498, %v1494
    %v2347 = vpack.c.b16 %v1499, %v1495
    %v2348 = vpack.c.b16 %v1500, %v1496
    %v2349 = vpack.c.b16 %v1501, %v1497
    %v2350 = vpack.c.b16 %v1506, %v1502
    %v2351 = vpack.c.b16 %v1507, %v1503
    %v2352 = vpack.c.b16 %v1508, %v1504
    %v2353 = vpack.c.b16 %v1509, %v1505
    %v2354 = vpack.c.b16 %v1514, %v1510
    %v2355 = vpack.c.b16 %v1515, %v1511
    %v2356 = vpack.c.b16 %v1516, %v1512
    %v2357 = vpack.c.b16 %v1517, %v1513
    %v2358 = vpack.c.b16 %v1522, %v1518
    %v2359 = vpack.c.b16 %v1523, %v1519
    %v2360 = vpack.c.b16 %v1524, %v1520
    %v2361 = vpack.c.b16 %v1525, %v1521
    %v2362 = vpack.c.b16 %v1530, %v1526
    %v2363 = vpack.c.b16 %v1531, %v1527
    %v2364 = vpack.c.b16 %v1532, %v1528
    %v2365 = vpack.c.b16 %v1533, %v1529
    %v2366 = vpack.c.b16 %v1538, %v1534
    %v2367 = vpack.c.b16 %v1539, %v1535
    %v2368 = vpack.c.b16 %v1540, %v1536
    %v2369 = vpack.c.b16 %v1541, %v1537
    %v2370 = vpack.c.b16 %v1546, %v1542
    %v2371 = vpack.c.b16 %v1547, %v1543
    %v2372 = vpack.c.b16 %v1548, %v1544
    %v2373 = vpack.c.b16 %v1549, %v1545
    %v2374 = vpack.c.b16 %v1554, %v1550
    %v2375 = vpack.c.b16 %v1555, %v1551
    %v2376 = vpack.c.b16 %v1556, %v1552
    %v2377 = vpack.c.b16 %v1557, %v1553
    %v2378 = vpack.c.b16 %v1562, %v1558
    %v2379 = vpack.c.b16 %v1563, %v1559
    %v2380 = vpack.c.b16 %v1564, %v1560
    %v2381 = vpack.c.b16 %v1565, %v1561
    %v2382 = vpack.c.b16 %v1570, %v1566
    %v2383 = vpack.c.b16 %v1571, %v1567
    %v2384 = vpack.c.b16 %v1572, %v1568
    %v2385 = vpack.c.b16 %v1573, %v1569
    %v2386 = vpack.c.b16 %v1578, %v1574
    %v2387 = vpack.c.b16 %v1579, %v1575
    %v2388 = vpack.c.b16 %v1580, %v1576
    %v2389 = vpack.c.b16 %v1581, %v1577
    %v2390 = vpack.c.b16 %v1586, %v1582
    %v2391 = vpack.c.b16 %v1587, %v1583
    %v2392 = vpack.c.b16 %v1588, %v1584
    %v2393 = vpack.c.b16 %v1589, %v1585
    %v2394 = vpack.c.b16 %v1594, %v1590
    %v2395 = vpack.c.b16 %v1595, %v1591
    %v2396 = vpack.c.b16 %v1596, %v1592
    %v2397 = vpack.c.b16 %v1597, %v1593
    %v2398 = vpack.c.b16 %v1602, %v1598
    %v2399 = vpack.c.b16 %v1603, %v1599
    %v2400 = vpack.c.b16 %v1604, %v1600
    %v2401 = vpack.c.b16 %v1605, %v1601
    %v2402 = vpack.c.b16 %v1610, %v1606
    %v2403 = vpack.c.b16 %v1611, %v1607
    %v2404 = vpack.c.b16 %v1612, %v1608
    %v2405 = vpack.c.b16 %v1613, %v1609
    %v2406 = vpack.c.b16 %v1618, %v1614
    %v2407 = vpack.c.b16 %v1619, %v1615
    %v2408 = vpack.c.b16 %v1620, %v1616
    %v2409 = vpack.c.b16 %v1621, %v1617
    %v2410 = vpack.c.b16 %v1626, %v1622
    %v2411 = vpack.c.b16 %v1627, %v1623
    %v2412 = vpack.c.b16 %v1628, %v1624
    %v2413 = vpack.c.b16 %v1629, %v1625
    %v2414 = vpack.c.b16 %v1634, %v1630
    %v2415 = vpack.c.b16 %v1635, %v1631
    %v2416 = vpack.c.b16 %v1636, %v1632
    %v2417 = vpack.c.b16 %v1637, %v1633
    %v2418 = vpack.c.b16 %v1642, %v1638
    %v2419 = vpack.c.b16 %v1643, %v1639
    %v2420 = vpack.c.b16 %v1644, %v1640
    %v2421 = vpack.c.b16 %v1645, %v1641
    %v2422 = vpack.c.b16 %v1650, %v1646
    %v2423 = vpack.c.b16 %v1651, %v1647
    %v2424 = vpack.c.b16 %v1652, %v1648
    %v2425 = vpack.c.b16 %v1653, %v1649
    %v2426 = vpack.c.b16 %v1658, %v1654
    %v2427 = vpack.c.b16 %v1659, %v1655
    %v2428 = vpack.c.b16 %v1660, %v1656
    %v2429 = vpack.c.b16 %v1661, %v1657
    %v2430 = vpack.c.b16 %v1666, %v1662
    %v2431 = vpack.c.b16 %v1667, %v1663
    %v2432 = vpack.c.b16 %v1668, %v1664
    %v2433 = vpack.c.b16 %v1669, %v1665
    %v2434 = vpack.c.b16 %v1674, %v1670
    %v2435 = vpack.c.b16 %v1675, %v1671
    %v2436 = vpack.c.b16 %v1676, %v1672
    %v2437 = vpack.c.b16 %v1677, %v1673
    %v2438 = vpack.c.b16 %v1682, %v1678
    %v2439 = vpack.c.b16 %v1683, %v1679
    %v2440 = vpack.c.b16 %v1684, %v1680
    %v2441 = vpack.c.b16 %v1685, %v1681
    %v2442 = vpack.c.b16 %v1690, %v1686
    %v2443 = vpack.c.b16 %v1691, %v1687
    %v2444 = vpack.c.b16 %v1692, %v1688
    %v2445 = vpack.c.b16 %v1693, %v1689
    %v2446 = vpack.c.b16 %v1698, %v1694
    %v2447 = vpack.c.b16 %v1699, %v1695
    %v2448 = vpack.c.b16 %v1700, %v1696
    %v2449 = vpack.c.b16 %v1701, %v1697
    %v2450 = vpack.c.b16 %v1706, %v1702
    %v2451 = vpack.c.b16 %v1707, %v1703
    %v2452 = vpack.c.b16 %v1708, %v1704
    %v2453 = vpack.c.b16 %v1709, %v1705
    %v2454 = vpack.c.b16 %v1714, %v1710
    %v2455 = vpack.c.b16 %v1715, %v1711
    %v2456 = vpack.c.b16 %v1716, %v1712
    %v2457 = vpack.c.b16 %v1717, %v1713
    %v2458 = vpack.c.b16 %v1722, %v1718
    %v2459 = vpack.c.b16 %v1723, %v1719
    %v2460 = vpack.c.b16 %v1724, %v1720
    %v2461 = vpack.c.b16 %v1725, %v1721
    %v2462 = vpack.c.b16 %v1730, %v1726
    %v2463 = vpack.c.b16 %v1731, %v1727
    %v2464 = vpack.c.b16 %v1732, %v1728
    %v2465 = vpack.c.b16 %v1733, %v1729
    %v2466 = vpack.c.b16 %v1738, %v1734
    %v2467 = vpack.c.b16 %v1739, %v1735
    %v2468 = vpack.c.b16 %v1740, %v1736
    %v2469 = vpack.c.b16 %v1741, %v1737
    %v2470 = vpack.c.b16 %v1746, %v1742
    %v2471 = vpack.c.b16 %v1747, %v1743
    %v2472 = vpack.c.b16 %v1748, %v1744
    %v2473 = vpack.c.b16 %v1749, %v1745
    %v2474 = vpack.c.b16 %v1754, %v1750
    %v2475 = vpack.c.b16 %v1755, %v1751
    %v2476 = vpack.c.b16 %v1756, %v1752
    %v2477 = vpack.c.b16 %v1757, %v1753
    %v2478 = vpack.c.b16 %v1762, %v1758
    %v2479 = vpack.c.b16 %v1763, %v1759
    %v2480 = vpack.c.b16 %v1764, %v1760
    %v2481 = vpack.c.b16 %v1765, %v1761
    %v2482 = vpack.c.b16 %v1770, %v1766
    %v2483 = vpack.c.b16 %v1771, %v1767
    %v2484 = vpack.c.b16 %v1772, %v1768
    %v2485 = vpack.c.b16 %v1773, %v1769
    %v2486 = vpack.c.b16 %v1778, %v1774
    %v2487 = vpack.c.b16 %v1779, %v1775
    %v2488 = vpack.c.b16 %v1780, %v1776
    %v2489 = vpack.c.b16 %v1781, %v1777
    %v2490 = vpack.c.b16 %v1786, %v1782
    %v2491 = vpack.c.b16 %v1787, %v1783
    %v2492 = vpack.c.b16 %v1788, %v1784
    %v2493 = vpack.c.b16 %v1789, %v1785
    %v2494 = vpack.c.b16 %v1794, %v1790
    %v2495 = vpack.c.b16 %v1795, %v1791
    %v2496 = vpack.c.b16 %v1796, %v1792
    %v2497 = vpack.c.b16 %v1797, %v1793
    %v2498 = vpack.c.b16 %v1802, %v1798
    %v2499 = vpack.c.b16 %v1803, %v1799
    %v2500 = vpack.c.b16 %v1804, %v1800
    %v2501 = vpack.c.b16 %v1805, %v1801
    %v2502 = vpack.c.b16 %v1810, %v1806
    %v2503 = vpack.c.b16 %v1811, %v1807
    %v2504 = vpack.c.b16 %v1812, %v1808
    %v2505 = vpack.c.b16 %v1813, %v1809
    %v2506 = vpack.c.b16 %v1818, %v1814
    %v2507 = vpack.c.b16 %v1819, %v1815
    %v2508 = vpack.c.b16 %v1820, %v1816
    %v2509 = vpack.c.b16 %v1821, %v1817
    %v2510 = vpack.c.b16 %v1826, %v1822
    %v2511 = vpack.c.b16 %v1827, %v1823
    %v2512 = vpack.c.b16 %v1828, %v1824
    %v2513 = vpack.c.b16 %v1829, %v1825
    %v2514 = vpack.c.b16 %v1834, %v1830
    %v2515 = vpack.c.b16 %v1835, %v1831
    %v2516 = vpack.c.b16 %v1836, %v1832
    %v2517 = vpack.c.b16 %v1837, %v1833
    %v2518 = vpack.c.b16 %v1842, %v1838
    %v2519 = vpack.c.b16 %v1843, %v1839
    %v2520 = vpack.c.b16 %v1844, %v1840
    %v2521 = vpack.c.b16 %v1845, %v1841
    %v2522 = vpack.c.b16 %v1850, %v1846
    %v2523 = vpack.c.b16 %v1851, %v1847
    %v2524 = vpack.c.b16 %v1852, %v1848
    %v2525 = vpack.c.b16 %v1853, %v1849
    %v2526 = vpack.c.b16 %v1858, %v1854
    %v2527 = vpack.c.b16 %v1859, %v1855
    %v2528 = vpack.c.b16 %v1860, %v1856
    %v2529 = vpack.c.b16 %v1861, %v1857
    %v2530 = vpack.c.b16 %v1866, %v1862
    %v2531 = vpack.c.b16 %v1867, %v1863
    %v2532 = vpack.c.b16 %v1868, %v1864
    %v2533 = vpack.c.b16 %v1869, %v1865
    %v2534 = vpack.c.b16 %v1874, %v1870
    %v2535 = vpack.c.b16 %v1875, %v1871
    %v2536 = vpack.c.b16 %v1876, %v1872
    %v2537 = vpack.c.b16 %v1877, %v1873
    %v2538 = vpack.c.b16 %v1882, %v1878
    %v2539 = vpack.c.b16 %v1883, %v1879
    %v2540 = vpack.c.b16 %v1884, %v1880
    %v2541 = vpack.c.b16 %v1885, %v1881
    %v2542 = vpack.c.b16 %v1890, %v1886
    %v2543 = vpack.c.b16 %v1891, %v1887
    %v2544 = vpack.c.b16 %v1892, %v1888
    %v2545 = vpack.c.b16 %v1893, %v1889
    %v2546 = vpack.c.b16 %v1898, %v1894
    %v2547 = vpack.c.b16 %v1899, %v1895
    %v2548 = vpack.c.b16 %v1900, %v1896
    %v2549 = vpack.c.b16 %v1901, %v1897
    %v2550 = vpack.c.b16 %v1906, %v1902
    %v2551 = vpack.c.b16 %v1907, %v1903
    %v2552 = vpack.c.b16 %v1908, %v1904
    %v2553 = vpack.c.b16 %v1909, %v1905
    %v2554 = vpack.c.b16 %v1914, %v1910
    %v2555 = vpack.c.b16 %v1915, %v1911
    %v2556 = vpack.c.b16 %v1916, %v1912
    %v2557 = vpack.c.b16 %v1917, %v1913
    %v2558 = vpack.c.b16 %v1922, %v1918
    %v2559 = vpack.c.b16 %v1923, %v1919
    %v2560 = vpack.c.b16 %v1924, %v1920
    %v2561 = vpack.c.b16 %v1925, %v1921
    %v2562 = vpack.c.b16 %v1930, %v1926
    %v2563 = vpack.c.b16 %v1931, %v1927
    %v2564 = vpack.c.b16 %v1932, %v1928
    %v2565 = vpack.c.b16 %v1933, %v1929
    %v2566 = vpack.c.b16 %v1938, %v1934
    %v2567 = vpack.c.b16 %v1939, %v1935
    %v2568 = vpack.c.b16 %v1940, %v1936
    %v2569 = vpack.c.b16 %v1941, %v1937
    %v2570 = vpack.c.b16 %v1946, %v1942
    %v2571 = vpack.c.b16 %v1947, %v1943
    %v2572 = vpack.c.b16 %v1948, %v1944
    %v2573 = vpack.c.b16 %v1949, %v1945
    %v2574 = vpack.c.b16 %v1954, %v1950
    %v2575 = vpack.c.b16 %v1955, %v1951
    %v2576 = vpack.c.b16 %v1956, %v1952
    %v2577 = vpack.c.b16 %v1957, %v1953
    %v2578 = vpack.c.b16 %v1962, %v1958
    %v2579 = vpack.c.b16 %v1963, %v1959
    %v2580 = vpack.c.b16 %v1964, %v1960
    %v2581 = vpack.c.b16 %v1965, %v1961
    %v2582 = vpack.c.b16 %v1970, %v1966
    %v2583 = vpack.c.b16 %v1971, %v1967
    %v2584 = vpack.c.b16 %v1972, %v1968
    %v2585 = vpack.c.b16 %v1973, %v1969
    %v2586 = vpack.c.b16 %v1978, %v1974
    %v2587 = vpack.c.b16 %v1979, %v1975
    %v2588 = vpack.c.b16 %v1980, %v1976
    %v2589 = vpack.c.b16 %v1981, %v1977
    %v2590 = vpack.c.b16 %v1986, %v1982
    %v2591 = vpack.c.b16 %v1987, %v1983
    %v2592 = vpack.c.b16 %v1988, %v1984
    %v2593 = vpack.c.b16 %v1989, %v1985
    %v2594 = vpack.c.b16 %v1994, %v1990
    %v2595 = vpack.c.b16 %v1995, %v1991
    %v2596 = vpack.c.b16 %v1996, %v1992
    %v2597 = vpack.c.b16 %v1997, %v1993
    %v2598 = vpack.c.b16 %v2002, %v1998
    %v2599 = vpack.c.b16 %v2003, %v1999
    %v2600 = vpack.c.b16 %v2004, %v2000
    %v2601 = vpack.c.b16 %v2005, %v2001
    %v2602 = vpack.c.b16 %v2010, %v2006
    %v2603 = vpack.c.b16 %v2011, %v2007
    %v2604 = vpack.c.b16 %v2012, %v2008
    %v2605 = vpack.c.b16 %v2013, %v2009
    %v2606 = vpack.c.b16 %v2018, %v2014
    %v2607 = vpack.c.b16 %v2019, %v2015
    %v2608 = vpack.c.b16 %v2020, %v2016
    %v2609 = vpack.c.b16 %v2021, %v2017
    %v2610 = vpack.c.b16 %v2026, %v2022
    %v2611 = vpack.c.b16 %v2027, %v2023
    %v2612 = vpack.c.b16 %v2028, %v2024
    %v2613 = vpack.c.b16 %v2029, %v2025
    %v2614 = vpack.c.b16 %v2034, %v2030
    %v2615 = vpack.c.b16 %v2035, %v2031
    %v2616 = vpack.c.b16 %v2036, %v2032
    %v2617 = vpack.c.b16 %v2037, %v2033
    %v2618 = vpack.c.b16 %v2042, %v2038
    %v2619 = vpack.c.b16 %v2043, %v2039
    %v2620 = vpack.c.b16 %v2044, %v2040
    %v2621 = vpack.c.b16 %v2045, %v2041
    %v2622 = vpack.c.b16 %v2050, %v2046
    %v2623 = vpack.c.b16 %v2051, %v2047
    %v2624 = vpack.c.b16 %v2052, %v2048
    %v2625 = vpack.c.b16 %v2053, %v2049
    %v2626 = vpack.c.b16 %v2058, %v2054
    %v2627 = vpack.c.b16 %v2059, %v2055
    %v2628 = vpack.c.b16 %v2060, %v2056
    %v2629 = vpack.c.b16 %v2061, %v2057
    %v2630 = vpack.c.b16 %v2066, %v2062
    %v2631 = vpack.c.b16 %v2067, %v2063
    %v2632 = vpack.c.b16 %v2068, %v2064
    %v2633 = vpack.c.b16 %v2069, %v2065
    %v2634 = vpack.c.b16 %v2074, %v2070
    %v2635 = vpack.c.b16 %v2075, %v2071
    %v2636 = vpack.c.b16 %v2076, %v2072
    %v2637 = vpack.c.b16 %v2077, %v2073
    %v2638 = vpack.c.b16 %v2082, %v2078
    %v2639 = vpack.c.b16 %v2083, %v2079
    %v2640 = vpack.c.b16 %v2084, %v2080
    %v2641 = vpack.c.b16 %v2085, %v2081
    %v2642 = vpack.c.b16 %v2090, %v2086
    %v2643 = vpack.c.b16 %v2091, %v2087
    %v2644 = vpack.c.b16 %v2092, %v2088
    %v2645 = vpack.c.b16 %v2093, %v2089
    %v2646 = vpack.c.b16 %v2098, %v2094
    %v2647 = vpack.c.b16 %v2099, %v2095
    %v2648 = vpack.c.b16 %v2100, %v2096
    %v2649 = vpack.c.b16 %v2101, %v2097
    %v2650 = vpack.c.b16 %v2106, %v2102
    %v2651 = vpack.c.b16 %v2107, %v2103
    %v2652 = vpack.c.b16 %v2108, %v2104
    %v2653 = vpack.c.b16 %v2109, %v2105
    %v2654 = vpack.c.b16 %v2114, %v2110
    %v2655 = vpack.c.b16 %v2115, %v2111
    %v2656 = vpack.c.b16 %v2116, %v2112
    %v2657 = vpack.c.b16 %v2117, %v2113
    %v2658 = vpack.c.b16 %v2122, %v2118
    %v2659 = vpack.c.b16 %v2123, %v2119
    %v2660 = vpack.c.b16 %v2124, %v2120
    %v2661 = vpack.c.b16 %v2125, %v2121
    %v2662 = vpack.c.b16 %v2130, %v2126
    %v2663 = vpack.c.b16 %v2131, %v2127
    %v2664 = vpack.c.b16 %v2132, %v2128
    %v2665 = vpack.c.b16 %v2133, %v2129
    %v2666 = vpack.c.b16 %v2138, %v2134
    %v2667 = vpack.c.b16 %v2139, %v2135
    %v2668 = vpack.c.b16 %v2140, %v2136
    %v2669 = vpack.c.b16 %v2141, %v2137
    %v2670 = vpack.c.b16 %v2146, %v2142
    %v2671 = vpack.c.b16 %v2147, %v2143
    %v2672 = vpack.c.b16 %v2148, %v2144
    %v2673 = vpack.c.b16 %v2149, %v2145
    %v2674 = vpack.c.b16 %v2154, %v2150
    %v2675 = vpack.c.b16 %v2155, %v2151
    %v2676 = vpack.c.b16 %v2156, %v2152
    %v2677 = vpack.c.b16 %v2157, %v2153
    %v2678 = vpack.c.b16 %v2162, %v2158
    %v2679 = vpack.c.b16 %v2163, %v2159
    %v2680 = vpack.c.b16 %v2164, %v2160
    %v2681 = vpack.c.b16 %v2165, %v2161
    %v2682 = vpack.c.b16 %v2170, %v2166
    %v2683 = vpack.c.b16 %v2171, %v2167
    %v2684 = vpack.c.b16 %v2172, %v2168
    %v2685 = vpack.c.b16 %v2173, %v2169
    %3198 = vmatprep.subr.bf16.mxu0 %v2175
    %3199 = vmatpush1.bf16.msra.mxu0 %v2174
    %3200 = vmatprep.subr.bf16.mxu0 %v2179
    %3201 = vmatpush1.bf16.msra.mxu0 %v2178
    %3202 = vmatprep.subr.bf16.mxu0 %v2183
    %3203 = vmatpush1.bf16.msra.mxu0 %v2182
    %3204 = vmatprep.subr.bf16.mxu0 %v2187
    %3205 = vmatpush1.bf16.msra.mxu0 %v2186
    %3206 = vmatprep.subr.bf16.mxu0 %v2191
    %3207 = vmatpush1.bf16.msra.mxu0 %v2190
    %3208 = vmatprep.subr.bf16.mxu0 %v2195
    %3209 = vmatpush1.bf16.msra.mxu0 %v2194
    %3210 = vmatprep.subr.bf16.mxu0 %v2199
    %3211 = vmatpush1.bf16.msra.mxu0 %v2198
    %3212 = vmatprep.subr.bf16.mxu0 %v2203
    %3213 = vmatpush1.bf16.msra.mxu0 %v2202
    %3214 = vmatprep.subr.bf16.mxu0 %v2207
    %3215 = vmatpush1.bf16.msra.mxu0 %v2206
    %3216 = vmatprep.subr.bf16.mxu0 %v2211
    %3217 = vmatpush1.bf16.msra.mxu0 %v2210
    %3218 = vmatprep.subr.bf16.mxu0 %v2215
    %3219 = vmatpush1.bf16.msra.mxu0 %v2214
    %3220 = vmatprep.subr.bf16.mxu0 %v2219
    %3221 = vmatpush1.bf16.msra.mxu0 %v2218
    %3222 = vmatprep.subr.bf16.mxu0 %v2223
    %3223 = vmatpush1.bf16.msra.mxu0 %v2222
    %3224 = vmatprep.subr.bf16.mxu0 %v2227
    %3225 = vmatpush1.bf16.msra.mxu0 %v2226
    %3226 = vmatprep.subr.bf16.mxu0 %v2231
    %3227 = vmatpush1.bf16.msra.mxu0 %v2230
    %3228 = vmatprep.subr.bf16.mxu0 %v2235
    %3229 = vmatpush1.bf16.msra.mxu0 %v2234
    %3230 = vmatprep.mubr.bf16.mxu0 %v89
    %3231 = vmatmul.mubr.bf16.gmra.mrb[0].mxu0 %v88
    %v3232 = vpop.f32.mrb[0].mxu0
    %v3233 = vadd.f32 %v621, %v3232
    %v3234 = vpop.f32.mrb[0].mxu0
    %v3235 = vadd.f32 %v625, %v3234
    %v3236 = vpop.f32.mrb[0].mxu0
    %v3237 = vpop.f32.mrb[0].mxu0
    %3238 = vdwg.mxu0
    %3239 = vmatprep.subr.bf16.mxu0 %v2239
    %3240 = vmatpush1.bf16.msra.mxu0 %v2238
    %3241 = vmatprep.subr.bf16.mxu0 %v2243
    %3242 = vmatpush1.bf16.msra.mxu0 %v2242
    %3243 = vmatprep.subr.bf16.mxu0 %v2247
    %3244 = vmatpush1.bf16.msra.mxu0 %v2246
    %3245 = vmatprep.subr.bf16.mxu0 %v2251
    %3246 = vmatpush1.bf16.msra.mxu0 %v2250
    %3247 = vmatprep.subr.bf16.mxu0 %v2255
    %3248 = vmatpush1.bf16.msra.mxu0 %v2254
    %3249 = vmatprep.subr.bf16.mxu0 %v2259
    %3250 = vmatpush1.bf16.msra.mxu0 %v2258
    %3251 = vmatprep.subr.bf16.mxu0 %v2263
    %3252 = vmatpush1.bf16.msra.mxu0 %v2262
    %3253 = vmatprep.subr.bf16.mxu0 %v2267
    %3254 = vmatpush1.bf16.msra.mxu0 %v2266
    %3255 = vmatprep.subr.bf16.mxu0 %v2271
    %3256 = vmatpush1.bf16.msra.mxu0 %v2270
    %3257 = vmatprep.subr.bf16.mxu0 %v2275
    %3258 = vmatpush1.bf16.msra.mxu0 %v2274
    %3259 = vmatprep.subr.bf16.mxu0 %v2279
    %3260 = vmatpush1.bf16.msra.mxu0 %v2278
    %3261 = vmatprep.subr.bf16.mxu0 %v2283
    %3262 = vmatpush1.bf16.msra.mxu0 %v2282
    %3263 = vmatprep.subr.bf16.mxu0 %v2287
    %3264 = vmatpush1.bf16.msra.mxu0 %v2286
    %3265 = vmatprep.subr.bf16.mxu0 %v2291
    %3266 = vmatpush1.bf16.msra.mxu0 %v2290
    %3267 = vmatprep.subr.bf16.mxu0 %v2295
    %3268 = vmatpush1.bf16.msra.mxu0 %v2294
    %3269 = vmatprep.subr.bf16.mxu0 %v2299
    %3270 = vmatpush1.bf16.msra.mxu0 %v2298
    %3271 = vmatprep.mubr.bf16.mxu0 %v91
    %3272 = vmatmul.mubr.bf16.gmra.mrb[0].mxu0 %v90
    %v3273 = vpop.f32.mrb[0].mxu0
    %v3274 = vadd.f32 %v3233, %v3273
    %v3275 = vpop.f32.mrb[0].mxu0
    %v3276 = vadd.f32 %v3235, %v3275
    %v3277 = vpop.f32.mrb[0].mxu0
    %v3278 = vpop.f32.mrb[0].mxu0
    %3279 = vdwg.mxu0
    %3280 = vmatprep.subr.bf16.mxu0 %v2303
    %3281 = vmatpush1.bf16.msra.mxu0 %v2302
    %3282 = vmatprep.subr.bf16.mxu0 %v2307
    %3283 = vmatpush1.bf16.msra.mxu0 %v2306
    %3284 = vmatprep.subr.bf16.mxu0 %v2311
    %3285 = vmatpush1.bf16.msra.mxu0 %v2310
    %3286 = vmatprep.subr.bf16.mxu0 %v2315
    %3287 = vmatpush1.bf16.msra.mxu0 %v2314
    %3288 = vmatprep.subr.bf16.mxu0 %v2319
    %3289 = vmatpush1.bf16.msra.mxu0 %v2318
    %3290 = vmatprep.subr.bf16.mxu0 %v2323
    %3291 = vmatpush1.bf16.msra.mxu0 %v2322
    %3292 = vmatprep.subr.bf16.mxu0 %v2327
    %3293 = vmatpush1.bf16.msra.mxu0 %v2326
    %3294 = vmatprep.subr.bf16.mxu0 %v2331
    %3295 = vmatpush1.bf16.msra.mxu0 %v2330
    %3296 = vmatprep.subr.bf16.mxu0 %v2335
    %3297 = vmatpush1.bf16.msra.mxu0 %v2334
    %3298 = vmatprep.subr.bf16.mxu0 %v2339
    %3299 = vmatpush1.bf16.msra.mxu0 %v2338
    %3300 = vmatprep.subr.bf16.mxu0 %v2343
    %3301 = vmatpush1.bf16.msra.mxu0 %v2342
    %3302 = vmatprep.subr.bf16.mxu0 %v2347
    %3303 = vmatpush1.bf16.msra.mxu0 %v2346
    %3304 = vmatprep.subr.bf16.mxu0 %v2351
    %3305 = vmatpush1.bf16.msra.mxu0 %v2350
    %3306 = vmatprep.subr.bf16.mxu0 %v2355
    %3307 = vmatpush1.bf16.msra.mxu0 %v2354
    %3308 = vmatprep.subr.bf16.mxu0 %v2359
    %3309 = vmatpush1.bf16.msra.mxu0 %v2358
    %3310 = vmatprep.subr.bf16.mxu0 %v2363
    %3311 = vmatpush1.bf16.msra.mxu0 %v2362
    %3312 = vmatprep.mubr.bf16.mxu0 %v93
    %3313 = vmatmul.mubr.bf16.gmra.mrb[0].mxu0 %v92
    %v3314 = vpop.f32.mrb[0].mxu0
    %v3315 = vadd.f32 %v3274, %v3314
    %v3316 = vpop.f32.mrb[0].mxu0
    %v3317 = vadd.f32 %v3276, %v3316
    %v3318 = vpop.f32.mrb[0].mxu0
    %v3319 = vpop.f32.mrb[0].mxu0
    %3320 = vdwg.mxu0
    %3321 = vmatprep.subr.bf16.mxu0 %v2367
    %3322 = vmatpush1.bf16.msra.mxu0 %v2366
    %3323 = vmatprep.subr.bf16.mxu0 %v2371
    %3324 = vmatpush1.bf16.msra.mxu0 %v2370
    %3325 = vmatprep.subr.bf16.mxu0 %v2375
    %3326 = vmatpush1.bf16.msra.mxu0 %v2374
    %3327 = vmatprep.subr.bf16.mxu0 %v2379
    %3328 = vmatpush1.bf16.msra.mxu0 %v2378
    %3329 = vmatprep.subr.bf16.mxu0 %v2383
    %3330 = vmatpush1.bf16.msra.mxu0 %v2382
    %3331 = vmatprep.subr.bf16.mxu0 %v2387
    %3332 = vmatpush1.bf16.msra.mxu0 %v2386
    %3333 = vmatprep.subr.bf16.mxu0 %v2391
    %3334 = vmatpush1.bf16.msra.mxu0 %v2390
    %3335 = vmatprep.subr.bf16.mxu0 %v2395
    %3336 = vmatpush1.bf16.msra.mxu0 %v2394
    %3337 = vmatprep.subr.bf16.mxu0 %v2399
    %3338 = vmatpush1.bf16.msra.mxu0 %v2398
    %3339 = vmatprep.subr.bf16.mxu0 %v2403
    %3340 = vmatpush1.bf16.msra.mxu0 %v2402
    %3341 = vmatprep.subr.bf16.mxu0 %v2407
    %3342 = vmatpush1.bf16.msra.mxu0 %v2406
    %3343 = vmatprep.subr.bf16.mxu0 %v2411
    %3344 = vmatpush1.bf16.msra.mxu0 %v2410
    %3345 = vmatprep.subr.bf16.mxu0 %v2415
    %3346 = vmatpush1.bf16.msra.mxu0 %v2414
    %3347 = vmatprep.subr.bf16.mxu0 %v2419
    %3348 = vmatpush1.bf16.msra.mxu0 %v2418
    %3349 = vmatprep.subr.bf16.mxu0 %v2423
    %3350 = vmatpush1.bf16.msra.mxu0 %v2422
    %3351 = vmatprep.subr.bf16.mxu0 %v2427
    %3352 = vmatpush1.bf16.msra.mxu0 %v2426
    %3353 = vmatprep.mubr.bf16.mxu0 %v95
    %3354 = vmatmul.mubr.bf16.gmra.mrb[0].mxu0 %v94
    %v3355 = vpop.f32.mrb[0].mxu0
    %v3356 = vadd.f32 %v3315, %v3355
    %v3357 = vpop.f32.mrb[0].mxu0
    %v3358 = vadd.f32 %v3317, %v3357
    %v3359 = vpop.f32.mrb[0].mxu0
    %v3360 = vpop.f32.mrb[0].mxu0
    %3361 = vdwg.mxu0
    %3362 = vmatprep.subr.bf16.mxu0 %v2431
    %3363 = vmatpush1.bf16.msra.mxu0 %v2430
    %3364 = vmatprep.subr.bf16.mxu0 %v2435
    %3365 = vmatpush1.bf16.msra.mxu0 %v2434
    %3366 = vmatprep.subr.bf16.mxu0 %v2439
    %3367 = vmatpush1.bf16.msra.mxu0 %v2438
    %3368 = vmatprep.subr.bf16.mxu0 %v2443
    %3369 = vmatpush1.bf16.msra.mxu0 %v2442
    %3370 = vmatprep.subr.bf16.mxu0 %v2447
    %3371 = vmatpush1.bf16.msra.mxu0 %v2446
    %3372 = vmatprep.subr.bf16.mxu0 %v2451
    %3373 = vmatpush1.bf16.msra.mxu0 %v2450
    %3374 = vmatprep.subr.bf16.mxu0 %v2455
    %3375 = vmatpush1.bf16.msra.mxu0 %v2454
    %3376 = vmatprep.subr.bf16.mxu0 %v2459
    %3377 = vmatpush1.bf16.msra.mxu0 %v2458
    %3378 = vmatprep.subr.bf16.mxu0 %v2463
    %3379 = vmatpush1.bf16.msra.mxu0 %v2462
    %3380 = vmatprep.subr.bf16.mxu0 %v2467
    %3381 = vmatpush1.bf16.msra.mxu0 %v2466
    %3382 = vmatprep.subr.bf16.mxu0 %v2471
    %3383 = vmatpush1.bf16.msra.mxu0 %v2470
    %3384 = vmatprep.subr.bf16.mxu0 %v2475
    %3385 = vmatpush1.bf16.msra.mxu0 %v2474
    %3386 = vmatprep.subr.bf16.mxu0 %v2479
    %3387 = vmatpush1.bf16.msra.mxu0 %v2478
    %3388 = vmatprep.subr.bf16.mxu0 %v2483
    %3389 = vmatpush1.bf16.msra.mxu0 %v2482
    %3390 = vmatprep.subr.bf16.mxu0 %v2487
    %3391 = vmatpush1.bf16.msra.mxu0 %v2486
    %3392 = vmatprep.subr.bf16.mxu0 %v2491
    %3393 = vmatpush1.bf16.msra.mxu0 %v2490
    %3394 = vmatprep.mubr.bf16.mxu0 %v97
    %3395 = vmatmul.mubr.bf16.gmra.mrb[0].mxu0 %v96
    %v3396 = vpop.f32.mrb[0].mxu0
    %v3397 = vadd.f32 %v3356, %v3396
    %v3398 = vpop.f32.mrb[0].mxu0
    %v3399 = vadd.f32 %v3358, %v3398
    %v3400 = vpop.f32.mrb[0].mxu0
    %v3401 = vpop.f32.mrb[0].mxu0
    %3402 = vdwg.mxu0
    %3403 = vmatprep.subr.bf16.mxu0 %v2495
    %3404 = vmatpush1.bf16.msra.mxu0 %v2494
    %3405 = vmatprep.subr.bf16.mxu0 %v2499
    %3406 = vmatpush1.bf16.msra.mxu0 %v2498
    %3407 = vmatprep.subr.bf16.mxu0 %v2503
    %3408 = vmatpush1.bf16.msra.mxu0 %v2502
    %3409 = vmatprep.subr.bf16.mxu0 %v2507
    %3410 = vmatpush1.bf16.msra.mxu0 %v2506
    %3411 = vmatprep.subr.bf16.mxu0 %v2511
    %3412 = vmatpush1.bf16.msra.mxu0 %v2510
    %3413 = vmatprep.subr.bf16.mxu0 %v2515
    %3414 = vmatpush1.bf16.msra.mxu0 %v2514
    %3415 = vmatprep.subr.bf16.mxu0 %v2519
    %3416 = vmatpush1.bf16.msra.mxu0 %v2518
    %3417 = vmatprep.subr.bf16.mxu0 %v2523
    %3418 = vmatpush1.bf16.msra.mxu0 %v2522
    %3419 = vmatprep.subr.bf16.mxu0 %v2527
    %3420 = vmatpush1.bf16.msra.mxu0 %v2526
    %3421 = vmatprep.subr.bf16.mxu0 %v2531
    %3422 = vmatpush1.bf16.msra.mxu0 %v2530
    %3423 = vmatprep.subr.bf16.mxu0 %v2535
    %3424 = vmatpush1.bf16.msra.mxu0 %v2534
    %3425 = vmatprep.subr.bf16.mxu0 %v2539
    %3426 = vmatpush1.bf16.msra.mxu0 %v2538
    %3427 = vmatprep.subr.bf16.mxu0 %v2543
    %3428 = vmatpush1.bf16.msra.mxu0 %v2542
    %3429 = vmatprep.subr.bf16.mxu0 %v2547
    %3430 = vmatpush1.bf16.msra.mxu0 %v2546
    %3431 = vmatprep.subr.bf16.mxu0 %v2551
    %3432 = vmatpush1.bf16.msra.mxu0 %v2550
    %3433 = vmatprep.subr.bf16.mxu0 %v2555
    %3434 = vmatpush1.bf16.msra.mxu0 %v2554
    %3435 = vmatprep.mubr.bf16.mxu0 %v99
    %3436 = vmatmul.mubr.bf16.gmra.mrb[0].mxu0 %v98
    %v3437 = vpop.f32.mrb[0].mxu0
    %v3438 = vadd.f32 %v3397, %v3437
    %v3439 = vpop.f32.mrb[0].mxu0
    %v3440 = vadd.f32 %v3399, %v3439
    %v3441 = vpop.f32.mrb[0].mxu0
    %v3442 = vpop.f32.mrb[0].mxu0
    %3443 = vdwg.mxu0
    %3444 = vmatprep.subr.bf16.mxu0 %v2559
    %3445 = vmatpush1.bf16.msra.mxu0 %v2558
    %3446 = vmatprep.subr.bf16.mxu0 %v2563
    %3447 = vmatpush1.bf16.msra.mxu0 %v2562
    %3448 = vmatprep.subr.bf16.mxu0 %v2567
    %3449 = vmatpush1.bf16.msra.mxu0 %v2566
    %3450 = vmatprep.subr.bf16.mxu0 %v2571
    %3451 = vmatpush1.bf16.msra.mxu0 %v2570
    %3452 = vmatprep.subr.bf16.mxu0 %v2575
    %3453 = vmatpush1.bf16.msra.mxu0 %v2574
    %3454 = vmatprep.subr.bf16.mxu0 %v2579
    %3455 = vmatpush1.bf16.msra.mxu0 %v2578
    %3456 = vmatprep.subr.bf16.mxu0 %v2583
    %3457 = vmatpush1.bf16.msra.mxu0 %v2582
    %3458 = vmatprep.subr.bf16.mxu0 %v2587
    %3459 = vmatpush1.bf16.msra.mxu0 %v2586
    %3460 = vmatprep.subr.bf16.mxu0 %v2591
    %3461 = vmatpush1.bf16.msra.mxu0 %v2590
    %3462 = vmatprep.subr.bf16.mxu0 %v2595
    %3463 = vmatpush1.bf16.msra.mxu0 %v2594
    %3464 = vmatprep.subr.bf16.mxu0 %v2599
    %3465 = vmatpush1.bf16.msra.mxu0 %v2598
    %3466 = vmatprep.subr.bf16.mxu0 %v2603
    %3467 = vmatpush1.bf16.msra.mxu0 %v2602
    %3468 = vmatprep.subr.bf16.mxu0 %v2607
    %3469 = vmatpush1.bf16.msra.mxu0 %v2606
    %3470 = vmatprep.subr.bf16.mxu0 %v2611
    %3471 = vmatpush1.bf16.msra.mxu0 %v2610
    %3472 = vmatprep.subr.bf16.mxu0 %v2615
    %3473 = vmatpush1.bf16.msra.mxu0 %v2614
    %3474 = vmatprep.subr.bf16.mxu0 %v2619
    %3475 = vmatpush1.bf16.msra.mxu0 %v2618
    %3476 = vmatprep.mubr.bf16.mxu0 %v101
    %3477 = vmatmul.mubr.bf16.gmra.mrb[0].mxu0 %v100
    %v3478 = vpop.f32.mrb[0].mxu0
    %v3479 = vadd.f32 %v3438, %v3478
    %v3480 = vpop.f32.mrb[0].mxu0
    %v3481 = vadd.f32 %v3440, %v3480
    %v3482 = vpop.f32.mrb[0].mxu0
    %v3483 = vpop.f32.mrb[0].mxu0
    %3484 = vdwg.mxu0
    %3485 = vmatprep.subr.bf16.mxu0 %v2623
    %3486 = vmatpush1.bf16.msra.mxu0 %v2622
    %3487 = vmatprep.subr.bf16.mxu0 %v2627
    %3488 = vmatpush1.bf16.msra.mxu0 %v2626
    %3489 = vmatprep.subr.bf16.mxu0 %v2631
    %3490 = vmatpush1.bf16.msra.mxu0 %v2630
    %3491 = vmatprep.subr.bf16.mxu0 %v2635
    %3492 = vmatpush1.bf16.msra.mxu0 %v2634
    %3493 = vmatprep.subr.bf16.mxu0 %v2639
    %3494 = vmatpush1.bf16.msra.mxu0 %v2638
    %3495 = vmatprep.subr.bf16.mxu0 %v2643
    %3496 = vmatpush1.bf16.msra.mxu0 %v2642
    %3497 = vmatprep.subr.bf16.mxu0 %v2647
    %3498 = vmatpush1.bf16.msra.mxu0 %v2646
    %3499 = vmatprep.subr.bf16.mxu0 %v2651
    %3500 = vmatpush1.bf16.msra.mxu0 %v2650
    %3501 = vmatprep.subr.bf16.mxu0 %v2655
    %3502 = vmatpush1.bf16.msra.mxu0 %v2654
    %3503 = vmatprep.subr.bf16.mxu0 %v2659
    %3504 = vmatpush1.bf16.msra.mxu0 %v2658
    %3505 = vmatprep.subr.bf16.mxu0 %v2663
    %3506 = vmatpush1.bf16.msra.mxu0 %v2662
    %3507 = vmatprep.subr.bf16.mxu0 %v2667
    %3508 = vmatpush1.bf16.msra.mxu0 %v2666
    %3509 = vmatprep.subr.bf16.mxu0 %v2671
    %3510 = vmatpush1.bf16.msra.mxu0 %v2670
    %3511 = vmatprep.subr.bf16.mxu0 %v2675
    %3512 = vmatpush1.bf16.msra.mxu0 %v2674
    %3513 = vmatprep.subr.bf16.mxu0 %v2679
    %3514 = vmatpush1.bf16.msra.mxu0 %v2678
    %3515 = vmatprep.subr.bf16.mxu0 %v2683
    %3516 = vmatpush1.bf16.msra.mxu0 %v2682
    %3517 = vmatprep.mubr.bf16.mxu0 %v103
    %3518 = vmatmul.mubr.bf16.gmra.mrb[0].mxu0 %v102
    %v3519 = vpop.f32.mrb[0].mxu0
    %v3520 = vadd.f32 %v3479, %v3519
    %v3521 = vpop.f32.mrb[0].mxu0
    %v3522 = vadd.f32 %v3481, %v3521
    %v3523 = vpop.f32.mrb[0].mxu0
    %v3524 = vpop.f32.mrb[0].mxu0
    %3525 = vdwg.mxu0
    %3526 = vmatprep.subr.bf16.mxu0 %v2177
    %3527 = vmatpush1.bf16.msra.mxu0 %v2176
    %3528 = vmatprep.subr.bf16.mxu0 %v2181
    %3529 = vmatpush1.bf16.msra.mxu0 %v2180
    %3530 = vmatprep.subr.bf16.mxu0 %v2185
    %3531 = vmatpush1.bf16.msra.mxu0 %v2184
    %3532 = vmatprep.subr.bf16.mxu0 %v2189
    %3533 = vmatpush1.bf16.msra.mxu0 %v2188
    %3534 = vmatprep.subr.bf16.mxu0 %v2193
    %3535 = vmatpush1.bf16.msra.mxu0 %v2192
    %3536 = vmatprep.subr.bf16.mxu0 %v2197
    %3537 = vmatpush1.bf16.msra.mxu0 %v2196
    %3538 = vmatprep.subr.bf16.mxu0 %v2201
    %3539 = vmatpush1.bf16.msra.mxu0 %v2200
    %3540 = vmatprep.subr.bf16.mxu0 %v2205
    %3541 = vmatpush1.bf16.msra.mxu0 %v2204
    %3542 = vmatprep.subr.bf16.mxu0 %v2209
    %3543 = vmatpush1.bf16.msra.mxu0 %v2208
    %3544 = vmatprep.subr.bf16.mxu0 %v2213
    %3545 = vmatpush1.bf16.msra.mxu0 %v2212
    %3546 = vmatprep.subr.bf16.mxu0 %v2217
    %3547 = vmatpush1.bf16.msra.mxu0 %v2216
    %3548 = vmatprep.subr.bf16.mxu0 %v2221
    %3549 = vmatpush1.bf16.msra.mxu0 %v2220
    %3550 = vmatprep.subr.bf16.mxu0 %v2225
    %3551 = vmatpush1.bf16.msra.mxu0 %v2224
    %3552 = vmatprep.subr.bf16.mxu0 %v2229
    %3553 = vmatpush1.bf16.msra.mxu0 %v2228
    %3554 = vmatprep.subr.bf16.mxu0 %v2233
    %3555 = vmatpush1.bf16.msra.mxu0 %v2232
    %3556 = vmatprep.subr.bf16.mxu0 %v2237
    %3557 = vmatpush1.bf16.msra.mxu0 %v2236
    %3558 = vmatprep.mubr.bf16.mxu0 %v89
    %3559 = vmatmul.mubr.bf16.gmra.mrb[0].mxu0 %v88
    %v3560 = vpop.f32.mrb[0].mxu0
    %v3561 = vadd.f32 %v629, %v3560
    %v3562 = vpop.f32.mrb[0].mxu0
    %v3563 = vadd.f32 %v633, %v3562
    %v3564 = vpop.f32.mrb[0].mxu0
    %v3565 = vpop.f32.mrb[0].mxu0
    %3566 = vdwg.mxu0
    %3567 = vmatprep.subr.bf16.mxu0 %v2241
    %3568 = vmatpush1.bf16.msra.mxu0 %v2240
    %3569 = vmatprep.subr.bf16.mxu0 %v2245
    %3570 = vmatpush1.bf16.msra.mxu0 %v2244
    %3571 = vmatprep.subr.bf16.mxu0 %v2249
    %3572 = vmatpush1.bf16.msra.mxu0 %v2248
    %3573 = vmatprep.subr.bf16.mxu0 %v2253
    %3574 = vmatpush1.bf16.msra.mxu0 %v2252
    %3575 = vmatprep.subr.bf16.mxu0 %v2257
    %3576 = vmatpush1.bf16.msra.mxu0 %v2256
    %3577 = vmatprep.subr.bf16.mxu0 %v2261
    %3578 = vmatpush1.bf16.msra.mxu0 %v2260
    %3579 = vmatprep.subr.bf16.mxu0 %v2265
    %3580 = vmatpush1.bf16.msra.mxu0 %v2264
    %3581 = vmatprep.subr.bf16.mxu0 %v2269
    %3582 = vmatpush1.bf16.msra.mxu0 %v2268
    %3583 = vmatprep.subr.bf16.mxu0 %v2273
    %3584 = vmatpush1.bf16.msra.mxu0 %v2272
    %3585 = vmatprep.subr.bf16.mxu0 %v2277
    %3586 = vmatpush1.bf16.msra.mxu0 %v2276
    %3587 = vmatprep.subr.bf16.mxu0 %v2281
    %3588 = vmatpush1.bf16.msra.mxu0 %v2280
    %3589 = vmatprep.subr.bf16.mxu0 %v2285
    %3590 = vmatpush1.bf16.msra.mxu0 %v2284
    %3591 = vmatprep.subr.bf16.mxu0 %v2289
    %3592 = vmatpush1.bf16.msra.mxu0 %v2288
    %3593 = vmatprep.subr.bf16.mxu0 %v2293
    %3594 = vmatpush1.bf16.msra.mxu0 %v2292
    %3595 = vmatprep.subr.bf16.mxu0 %v2297
    %3596 = vmatpush1.bf16.msra.mxu0 %v2296
    %3597 = vmatprep.subr.bf16.mxu0 %v2301
    %3598 = vmatpush1.bf16.msra.mxu0 %v2300
    %3599 = vmatprep.mubr.bf16.mxu0 %v91
    %3600 = vmatmul.mubr.bf16.gmra.mrb[0].mxu0 %v90
    %v3601 = vpop.f32.mrb[0].mxu0
    %v3602 = vadd.f32 %v3561, %v3601
    %v3603 = vpop.f32.mrb[0].mxu0
    %v3604 = vadd.f32 %v3563, %v3603
    %v3605 = vpop.f32.mrb[0].mxu0
    %v3606 = vpop.f32.mrb[0].mxu0
    %3607 = vdwg.mxu0
    %3608 = vmatprep.subr.bf16.mxu0 %v2305
    %3609 = vmatpush1.bf16.msra.mxu0 %v2304
    %3610 = vmatprep.subr.bf16.mxu0 %v2309
    %3611 = vmatpush1.bf16.msra.mxu0 %v2308
    %3612 = vmatprep.subr.bf16.mxu0 %v2313
    %3613 = vmatpush1.bf16.msra.mxu0 %v2312
    %3614 = vmatprep.subr.bf16.mxu0 %v2317
    %3615 = vmatpush1.bf16.msra.mxu0 %v2316
    %3616 = vmatprep.subr.bf16.mxu0 %v2321
    %3617 = vmatpush1.bf16.msra.mxu0 %v2320
    %3618 = vmatprep.subr.bf16.mxu0 %v2325
    %3619 = vmatpush1.bf16.msra.mxu0 %v2324
    %3620 = vmatprep.subr.bf16.mxu0 %v2329
    %3621 = vmatpush1.bf16.msra.mxu0 %v2328
    %3622 = vmatprep.subr.bf16.mxu0 %v2333
    %3623 = vmatpush1.bf16.msra.mxu0 %v2332
    %3624 = vmatprep.subr.bf16.mxu0 %v2337
    %3625 = vmatpush1.bf16.msra.mxu0 %v2336
    %3626 = vmatprep.subr.bf16.mxu0 %v2341
    %3627 = vmatpush1.bf16.msra.mxu0 %v2340
    %3628 = vmatprep.subr.bf16.mxu0 %v2345
    %3629 = vmatpush1.bf16.msra.mxu0 %v2344
    %3630 = vmatprep.subr.bf16.mxu0 %v2349
    %3631 = vmatpush1.bf16.msra.mxu0 %v2348
    %3632 = vmatprep.subr.bf16.mxu0 %v2353
    %3633 = vmatpush1.bf16.msra.mxu0 %v2352
    %3634 = vmatprep.subr.bf16.mxu0 %v2357
    %3635 = vmatpush1.bf16.msra.mxu0 %v2356
    %3636 = vmatprep.subr.bf16.mxu0 %v2361
    %3637 = vmatpush1.bf16.msra.mxu0 %v2360
    %3638 = vmatprep.subr.bf16.mxu0 %v2365
    %3639 = vmatpush1.bf16.msra.mxu0 %v2364
    %3640 = vmatprep.mubr.bf16.mxu0 %v93
    %3641 = vmatmul.mubr.bf16.gmra.mrb[0].mxu0 %v92
    %v3642 = vpop.f32.mrb[0].mxu0
    %v3643 = vadd.f32 %v3602, %v3642
    %v3644 = vpop.f32.mrb[0].mxu0
    %v3645 = vadd.f32 %v3604, %v3644
    %v3646 = vpop.f32.mrb[0].mxu0
    %v3647 = vpop.f32.mrb[0].mxu0
    %3648 = vdwg.mxu0
    %3649 = vmatprep.subr.bf16.mxu0 %v2369
    %3650 = vmatpush1.bf16.msra.mxu0 %v2368
    %3651 = vmatprep.subr.bf16.mxu0 %v2373
    %3652 = vmatpush1.bf16.msra.mxu0 %v2372
    %3653 = vmatprep.subr.bf16.mxu0 %v2377
    %3654 = vmatpush1.bf16.msra.mxu0 %v2376
    %3655 = vmatprep.subr.bf16.mxu0 %v2381
    %3656 = vmatpush1.bf16.msra.mxu0 %v2380
    %3657 = vmatprep.subr.bf16.mxu0 %v2385
    %3658 = vmatpush1.bf16.msra.mxu0 %v2384
    %3659 = vmatprep.subr.bf16.mxu0 %v2389
    %3660 = vmatpush1.bf16.msra.mxu0 %v2388
    %3661 = vmatprep.subr.bf16.mxu0 %v2393
    %3662 = vmatpush1.bf16.msra.mxu0 %v2392
    %3663 = vmatprep.subr.bf16.mxu0 %v2397
    %3664 = vmatpush1.bf16.msra.mxu0 %v2396
    %3665 = vmatprep.subr.bf16.mxu0 %v2401
    %3666 = vmatpush1.bf16.msra.mxu0 %v2400
    %3667 = vmatprep.subr.bf16.mxu0 %v2405
    %3668 = vmatpush1.bf16.msra.mxu0 %v2404
    %3669 = vmatprep.subr.bf16.mxu0 %v2409
    %3670 = vmatpush1.bf16.msra.mxu0 %v2408
    %3671 = vmatprep.subr.bf16.mxu0 %v2413
    %3672 = vmatpush1.bf16.msra.mxu0 %v2412
    %3673 = vmatprep.subr.bf16.mxu0 %v2417
    %3674 = vmatpush1.bf16.msra.mxu0 %v2416
    %3675 = vmatprep.subr.bf16.mxu0 %v2421
    %3676 = vmatpush1.bf16.msra.mxu0 %v2420
    %3677 = vmatprep.subr.bf16.mxu0 %v2425
    %3678 = vmatpush1.bf16.msra.mxu0 %v2424
    %3679 = vmatprep.subr.bf16.mxu0 %v2429
    %3680 = vmatpush1.bf16.msra.mxu0 %v2428
    %3681 = vmatprep.mubr.bf16.mxu0 %v95
    %3682 = vmatmul.mubr.bf16.gmra.mrb[0].mxu0 %v94
    %v3683 = vpop.f32.mrb[0].mxu0
    %v3684 = vadd.f32 %v3643, %v3683
    %v3685 = vpop.f32.mrb[0].mxu0
    %v3686 = vadd.f32 %v3645, %v3685
    %v3687 = vpop.f32.mrb[0].mxu0
    %v3688 = vpop.f32.mrb[0].mxu0
    %3689 = vdwg.mxu0
    %3690 = vmatprep.subr.bf16.mxu0 %v2433
    %3691 = vmatpush1.bf16.msra.mxu0 %v2432
    %3692 = vmatprep.subr.bf16.mxu0 %v2437
    %3693 = vmatpush1.bf16.msra.mxu0 %v2436
    %3694 = vmatprep.subr.bf16.mxu0 %v2441
    %3695 = vmatpush1.bf16.msra.mxu0 %v2440
    %3696 = vmatprep.subr.bf16.mxu0 %v2445
    %3697 = vmatpush1.bf16.msra.mxu0 %v2444
    %3698 = vmatprep.subr.bf16.mxu0 %v2449
    %3699 = vmatpush1.bf16.msra.mxu0 %v2448
    %3700 = vmatprep.subr.bf16.mxu0 %v2453
    %3701 = vmatpush1.bf16.msra.mxu0 %v2452
    %3702 = vmatprep.subr.bf16.mxu0 %v2457
    %3703 = vmatpush1.bf16.msra.mxu0 %v2456
    %3704 = vmatprep.subr.bf16.mxu0 %v2461
    %3705 = vmatpush1.bf16.msra.mxu0 %v2460
    %3706 = vmatprep.subr.bf16.mxu0 %v2465
    %3707 = vmatpush1.bf16.msra.mxu0 %v2464
    %3708 = vmatprep.subr.bf16.mxu0 %v2469
    %3709 = vmatpush1.bf16.msra.mxu0 %v2468
    %3710 = vmatprep.subr.bf16.mxu0 %v2473
    %3711 = vmatpush1.bf16.msra.mxu0 %v2472
    %3712 = vmatprep.subr.bf16.mxu0 %v2477
    %3713 = vmatpush1.bf16.msra.mxu0 %v2476
    %3714 = vmatprep.subr.bf16.mxu0 %v2481
    %3715 = vmatpush1.bf16.msra.mxu0 %v2480
    %3716 = vmatprep.subr.bf16.mxu0 %v2485
    %3717 = vmatpush1.bf16.msra.mxu0 %v2484
    %3718 = vmatprep.subr.bf16.mxu0 %v2489
    %3719 = vmatpush1.bf16.msra.mxu0 %v2488
    %3720 = vmatprep.subr.bf16.mxu0 %v2493
    %3721 = vmatpush1.bf16.msra.mxu0 %v2492
    %3722 = vmatprep.mubr.bf16.mxu0 %v97
    %3723 = vmatmul.mubr.bf16.gmra.mrb[0].mxu0 %v96
    %v3724 = vpop.f32.mrb[0].mxu0
    %v3725 = vadd.f32 %v3684, %v3724
    %v3726 = vpop.f32.mrb[0].mxu0
    %v3727 = vadd.f32 %v3686, %v3726
    %v3728 = vpop.f32.mrb[0].mxu0
    %v3729 = vpop.f32.mrb[0].mxu0
    %3730 = vdwg.mxu0
    %3731 = vmatprep.subr.bf16.mxu0 %v2497
    %3732 = vmatpush1.bf16.msra.mxu0 %v2496
    %3733 = vmatprep.subr.bf16.mxu0 %v2501
    %3734 = vmatpush1.bf16.msra.mxu0 %v2500
    %3735 = vmatprep.subr.bf16.mxu0 %v2505
    %3736 = vmatpush1.bf16.msra.mxu0 %v2504
    %3737 = vmatprep.subr.bf16.mxu0 %v2509
    %3738 = vmatpush1.bf16.msra.mxu0 %v2508
    %3739 = vmatprep.subr.bf16.mxu0 %v2513
    %3740 = vmatpush1.bf16.msra.mxu0 %v2512
    %3741 = vmatprep.subr.bf16.mxu0 %v2517
    %3742 = vmatpush1.bf16.msra.mxu0 %v2516
    %3743 = vmatprep.subr.bf16.mxu0 %v2521
    %3744 = vmatpush1.bf16.msra.mxu0 %v2520
    %3745 = vmatprep.subr.bf16.mxu0 %v2525
    %3746 = vmatpush1.bf16.msra.mxu0 %v2524
    %3747 = vmatprep.subr.bf16.mxu0 %v2529
    %3748 = vmatpush1.bf16.msra.mxu0 %v2528
    %3749 = vmatprep.subr.bf16.mxu0 %v2533
    %3750 = vmatpush1.bf16.msra.mxu0 %v2532
    %3751 = vmatprep.subr.bf16.mxu0 %v2537
    %3752 = vmatpush1.bf16.msra.mxu0 %v2536
    %3753 = vmatprep.subr.bf16.mxu0 %v2541
    %3754 = vmatpush1.bf16.msra.mxu0 %v2540
    %3755 = vmatprep.subr.bf16.mxu0 %v2545
    %3756 = vmatpush1.bf16.msra.mxu0 %v2544
    %3757 = vmatprep.subr.bf16.mxu0 %v2549
    %3758 = vmatpush1.bf16.msra.mxu0 %v2548
    %3759 = vmatprep.subr.bf16.mxu0 %v2553
    %3760 = vmatpush1.bf16.msra.mxu0 %v2552
    %3761 = vmatprep.subr.bf16.mxu0 %v2557
    %3762 = vmatpush1.bf16.msra.mxu0 %v2556
    %3763 = vmatprep.mubr.bf16.mxu0 %v99
    %3764 = vmatmul.mubr.bf16.gmra.mrb[0].mxu0 %v98
    %v3765 = vpop.f32.mrb[0].mxu0
    %v3766 = vadd.f32 %v3725, %v3765
    %v3767 = vpop.f32.mrb[0].mxu0
    %v3768 = vadd.f32 %v3727, %v3767
    %v3769 = vpop.f32.mrb[0].mxu0
    %v3770 = vpop.f32.mrb[0].mxu0
    %3771 = vdwg.mxu0
    %3772 = vmatprep.subr.bf16.mxu0 %v2561
    %3773 = vmatpush1.bf16.msra.mxu0 %v2560
    %3774 = vmatprep.subr.bf16.mxu0 %v2565
    %3775 = vmatpush1.bf16.msra.mxu0 %v2564
    %3776 = vmatprep.subr.bf16.mxu0 %v2569
    %3777 = vmatpush1.bf16.msra.mxu0 %v2568
    %3778 = vmatprep.subr.bf16.mxu0 %v2573
    %3779 = vmatpush1.bf16.msra.mxu0 %v2572
    %3780 = vmatprep.subr.bf16.mxu0 %v2577
    %3781 = vmatpush1.bf16.msra.mxu0 %v2576
    %3782 = vmatprep.subr.bf16.mxu0 %v2581
    %3783 = vmatpush1.bf16.msra.mxu0 %v2580
    %3784 = vmatprep.subr.bf16.mxu0 %v2585
    %3785 = vmatpush1.bf16.msra.mxu0 %v2584
    %3786 = vmatprep.subr.bf16.mxu0 %v2589
    %3787 = vmatpush1.bf16.msra.mxu0 %v2588
    %3788 = vmatprep.subr.bf16.mxu0 %v2593
    %3789 = vmatpush1.bf16.msra.mxu0 %v2592
    %3790 = vmatprep.subr.bf16.mxu0 %v2597
    %3791 = vmatpush1.bf16.msra.mxu0 %v2596
    %3792 = vmatprep.subr.bf16.mxu0 %v2601
    %3793 = vmatpush1.bf16.msra.mxu0 %v2600
    %3794 = vmatprep.subr.bf16.mxu0 %v2605
    %3795 = vmatpush1.bf16.msra.mxu0 %v2604
    %3796 = vmatprep.subr.bf16.mxu0 %v2609
    %3797 = vmatpush1.bf16.msra.mxu0 %v2608
    %3798 = vmatprep.subr.bf16.mxu0 %v2613
    %3799 = vmatpush1.bf16.msra.mxu0 %v2612
    %3800 = vmatprep.subr.bf16.mxu0 %v2617
    %3801 = vmatpush1.bf16.msra.mxu0 %v2616
    %3802 = vmatprep.subr.bf16.mxu0 %v2621
    %3803 = vmatpush1.bf16.msra.mxu0 %v2620
    %3804 = vmatprep.mubr.bf16.mxu0 %v101
    %3805 = vmatmul.mubr.bf16.gmra.mrb[0].mxu0 %v100
    %v3806 = vpop.f32.mrb[0].mxu0
    %v3807 = vadd.f32 %v3766, %v3806
    %v3808 = vpop.f32.mrb[0].mxu0
    %v3809 = vadd.f32 %v3768, %v3808
    %v3810 = vpop.f32.mrb[0].mxu0
    %v3811 = vpop.f32.mrb[0].mxu0
    %3812 = vdwg.mxu0
    %3813 = vmatprep.subr.bf16.mxu0 %v2625
    %3814 = vmatpush1.bf16.msra.mxu0 %v2624
    %3815 = vmatprep.subr.bf16.mxu0 %v2629
    %3816 = vmatpush1.bf16.msra.mxu0 %v2628
    %3817 = vmatprep.subr.bf16.mxu0 %v2633
    %3818 = vmatpush1.bf16.msra.mxu0 %v2632
    %3819 = vmatprep.subr.bf16.mxu0 %v2637
    %3820 = vmatpush1.bf16.msra.mxu0 %v2636
    %3821 = vmatprep.subr.bf16.mxu0 %v2641
    %3822 = vmatpush1.bf16.msra.mxu0 %v2640
    %3823 = vmatprep.subr.bf16.mxu0 %v2645
    %3824 = vmatpush1.bf16.msra.mxu0 %v2644
    %3825 = vmatprep.subr.bf16.mxu0 %v2649
    %3826 = vmatpush1.bf16.msra.mxu0 %v2648
    %3827 = vmatprep.subr.bf16.mxu0 %v2653
    %3828 = vmatpush1.bf16.msra.mxu0 %v2652
    %3829 = vmatprep.subr.bf16.mxu0 %v2657
    %3830 = vmatpush1.bf16.msra.mxu0 %v2656
    %3831 = vmatprep.subr.bf16.mxu0 %v2661
    %3832 = vmatpush1.bf16.msra.mxu0 %v2660
    %3833 = vmatprep.subr.bf16.mxu0 %v2665
    %3834 = vmatpush1.bf16.msra.mxu0 %v2664
    %3835 = vmatprep.subr.bf16.mxu0 %v2669
    %3836 = vmatpush1.bf16.msra.mxu0 %v2668
    %3837 = vmatprep.subr.bf16.mxu0 %v2673
    %3838 = vmatpush1.bf16.msra.mxu0 %v2672
    %3839 = vmatprep.subr.bf16.mxu0 %v2677
    %3840 = vmatpush1.bf16.msra.mxu0 %v2676
    %3841 = vmatprep.subr.bf16.mxu0 %v2681
    %3842 = vmatpush1.bf16.msra.mxu0 %v2680
    %3843 = vmatprep.subr.bf16.mxu0 %v2685
    %3844 = vmatpush1.bf16.msra.mxu0 %v2684
    %3845 = vmatprep.mubr.bf16.mxu0 %v103
    %3846 = vmatmul.mubr.bf16.gmra.mrb[0].mxu0 %v102
    %v3847 = vpop.f32.mrb[0].mxu0
    %v3848 = vadd.f32 %v3807, %v3847
    %v3849 = vpop.f32.mrb[0].mxu0
    %v3850 = vadd.f32 %v3809, %v3849
    %v3851 = vpop.f32.mrb[0].mxu0
    %v3852 = vpop.f32.mrb[0].mxu0
    %3853 = vdwg.mxu0
    %v3854 = vmax.f32 %v3520, 0.0
    %v3855 = vmax.f32 %v3522, 0.0
    %v3856 = vmax.f32 %v3848, 0.0
    %v3857 = vmax.f32 %v3850, 0.0
    %v3858 = vpack.c.bf16 %v3854, %v3854
    %v3859 = vpack.c.bf16 %v3855, %v3855
    %v3860 = vpack.c.bf16 %v3856, %v3856
    %v3861 = vpack.c.bf16 %v3857, %v3857
    %v3862 = vld [vmem:[#allocation6] sm:$0xf]
    %v3863 = vld [vmem:[#allocation6 + $0x4] sm:$0xf]
    %v3864 = vld [vmem:[#allocation6 + $0x8] sm:$0xf]
    %v3865 = vld [vmem:[#allocation6 + $0xc] sm:$0xf]
    %v3866 = vld [vmem:[#allocation6 + $0x10] sm:$0xf]
    %v3867 = vld [vmem:[#allocation6 + $0x14] sm:$0xf]
    %v3868 = vld [vmem:[#allocation6 + $0x18] sm:$0xf]
    %v3869 = vld [vmem:[#allocation6 + $0x1c] sm:$0xf]
    %v3870 = vld [vmem:[#allocation6 + $0x20] sm:$0xf]
    %v3871 = vld [vmem:[#allocation6 + $0x24] sm:$0xf]
    %v3872 = vld [vmem:[#allocation6 + $0x28] sm:$0xf]
    %v3873 = vld [vmem:[#allocation6 + $0x2c] sm:$0xf]
    %v3874 = vld [vmem:[#allocation6 + $0x30] sm:$0xf]
    %v3875 = vld [vmem:[#allocation6 + $0x34] sm:$0xf]
    %v3876 = vld [vmem:[#allocation6 + $0x38] sm:$0xf]
    %v3877 = vld [vmem:[#allocation6 + $0x3c] sm:$0xf]
    %v3878 = vld [vmem:[#allocation6 + $0x40] sm:$0xf]
    %v3879 = vld [vmem:[#allocation6 + $0x44] sm:$0xf]
    %v3880 = vld [vmem:[#allocation6 + $0x48] sm:$0xf]
    %v3881 = vld [vmem:[#allocation6 + $0x4c] sm:$0xf]
    %v3882 = vld [vmem:[#allocation6 + $0x50] sm:$0xf]
    %v3883 = vld [vmem:[#allocation6 + $0x54] sm:$0xf]
    %v3884 = vld [vmem:[#allocation6 + $0x58] sm:$0xf]
    %v3885 = vld [vmem:[#allocation6 + $0x5c] sm:$0xf]
    %v3886 = vld [vmem:[#allocation6 + $0x60] sm:$0xf]
    %v3887 = vld [vmem:[#allocation6 + $0x64] sm:$0xf]
    %v3888 = vld [vmem:[#allocation6 + $0x68] sm:$0xf]
    %v3889 = vld [vmem:[#allocation6 + $0x6c] sm:$0xf]
    %v3890 = vld [vmem:[#allocation6 + $0x70] sm:$0xf]
    %v3891 = vld [vmem:[#allocation6 + $0x74] sm:$0xf]
    %v3892 = vld [vmem:[#allocation6 + $0x78] sm:$0xf]
    %v3893 = vld [vmem:[#allocation6 + $0x7c] sm:$0xf]
    %v3894 = vld [vmem:[#allocation6 + $0x80] sm:$0xf]
    %v3895 = vld [vmem:[#allocation6 + $0x84] sm:$0xf]
    %v3896 = vld [vmem:[#allocation6 + $0x88] sm:$0xf]
    %v3897 = vld [vmem:[#allocation6 + $0x8c] sm:$0xf]
    %v3898 = vld [vmem:[#allocation6 + $0x90] sm:$0xf]
    %v3899 = vld [vmem:[#allocation6 + $0x94] sm:$0xf]
    %v3900 = vld [vmem:[#allocation6 + $0x98] sm:$0xf]
    %v3901 = vld [vmem:[#allocation6 + $0x9c] sm:$0xf]
    %v3902 = vld [vmem:[#allocation6 + $0xa0] sm:$0xf]
    %v3903 = vld [vmem:[#allocation6 + $0xa4] sm:$0xf]
    %v3904 = vld [vmem:[#allocation6 + $0xa8] sm:$0xf]
    %v3905 = vld [vmem:[#allocation6 + $0xac] sm:$0xf]
    %v3906 = vld [vmem:[#allocation6 + $0xb0] sm:$0xf]
    %v3907 = vld [vmem:[#allocation6 + $0xb4] sm:$0xf]
    %v3908 = vld [vmem:[#allocation6 + $0xb8] sm:$0xf]
    %v3909 = vld [vmem:[#allocation6 + $0xbc] sm:$0xf]
    %v3910 = vld [vmem:[#allocation6 + $0xc0] sm:$0xf]
    %v3911 = vld [vmem:[#allocation6 + $0xc4] sm:$0xf]
    %v3912 = vld [vmem:[#allocation6 + $0xc8] sm:$0xf]
    %v3913 = vld [vmem:[#allocation6 + $0xcc] sm:$0xf]
    %v3914 = vld [vmem:[#allocation6 + $0xd0] sm:$0xf]
    %v3915 = vld [vmem:[#allocation6 + $0xd4] sm:$0xf]
    %v3916 = vld [vmem:[#allocation6 + $0xd8] sm:$0xf]
    %v3917 = vld [vmem:[#allocation6 + $0xdc] sm:$0xf]
    %v3918 = vld [vmem:[#allocation6 + $0xe0] sm:$0xf]
    %v3919 = vld [vmem:[#allocation6 + $0xe4] sm:$0xf]
    %v3920 = vld [vmem:[#allocation6 + $0xe8] sm:$0xf]
    %v3921 = vld [vmem:[#allocation6 + $0xec] sm:$0xf]
    %v3922 = vld [vmem:[#allocation6 + $0xf0] sm:$0xf]
    %v3923 = vld [vmem:[#allocation6 + $0xf4] sm:$0xf]
    %v3924 = vld [vmem:[#allocation6 + $0xf8] sm:$0xf]
    %v3925 = vld [vmem:[#allocation6 + $0xfc] sm:$0xf]
    %v3926 = vld [vmem:[#allocation7] sm:$0x1]
    %v3928 = vlaneseq
    %v3929 = vshrl.u32 %v3928, 7
    %v3930 = vsub.s32 0, %v3929
    %v3931 = vrot.slane %v3926, %v3930
    %v3997 = vunpack.c.l.b16 %v3862
    %v3998 = vunpack.c.l.b16 %v3863
    %v3999 = vunpack.c.l.b16 %v3864
    %v4000 = vunpack.c.l.b16 %v3865
    %v4001 = vunpack.c.l.b16 %v3866
    %v4002 = vunpack.c.l.b16 %v3867
    %v4003 = vunpack.c.l.b16 %v3868
    %v4004 = vunpack.c.l.b16 %v3869
    %v4005 = vunpack.c.l.b16 %v3870
    %v4006 = vunpack.c.l.b16 %v3871
    %v4007 = vunpack.c.l.b16 %v3872
    %v4008 = vunpack.c.l.b16 %v3873
    %v4009 = vunpack.c.l.b16 %v3874
    %v4010 = vunpack.c.l.b16 %v3875
    %v4011 = vunpack.c.l.b16 %v3876
    %v4012 = vunpack.c.l.b16 %v3877
    %v4013 = vunpack.c.l.b16 %v3878
    %v4014 = vunpack.c.l.b16 %v3879
    %v4015 = vunpack.c.l.b16 %v3880
    %v4016 = vunpack.c.l.b16 %v3881
    %v4017 = vunpack.c.l.b16 %v3882
    %v4018 = vunpack.c.l.b16 %v3883
    %v4019 = vunpack.c.l.b16 %v3884
    %v4020 = vunpack.c.l.b16 %v3885
    %v4021 = vunpack.c.l.b16 %v3886
    %v4022 = vunpack.c.l.b16 %v3887
    %v4023 = vunpack.c.l.b16 %v3888
    %v4024 = vunpack.c.l.b16 %v3889
    %v4025 = vunpack.c.l.b16 %v3890
    %v4026 = vunpack.c.l.b16 %v3891
    %v4027 = vunpack.c.l.b16 %v3892
    %v4028 = vunpack.c.l.b16 %v3893
    %v4029 = vunpack.c.l.b16 %v3894
    %v4030 = vunpack.c.l.b16 %v3895
    %v4031 = vunpack.c.l.b16 %v3896
    %v4032 = vunpack.c.l.b16 %v3897
    %v4033 = vunpack.c.l.b16 %v3898
    %v4034 = vunpack.c.l.b16 %v3899
    %v4035 = vunpack.c.l.b16 %v3900
    %v4036 = vunpack.c.l.b16 %v3901
    %v4037 = vunpack.c.l.b16 %v3902
    %v4038 = vunpack.c.l.b16 %v3903
    %v4039 = vunpack.c.l.b16 %v3904
    %v4040 = vunpack.c.l.b16 %v3905
    %v4041 = vunpack.c.l.b16 %v3906
    %v4042 = vunpack.c.l.b16 %v3907
    %v4043 = vunpack.c.l.b16 %v3908
    %v4044 = vunpack.c.l.b16 %v3909
    %v4045 = vunpack.c.l.b16 %v3910
    %v4046 = vunpack.c.l.b16 %v3911
    %v4047 = vunpack.c.l.b16 %v3912
    %v4048 = vunpack.c.l.b16 %v3913
    %v4049 = vunpack.c.l.b16 %v3914
    %v4050 = vunpack.c.l.b16 %v3915
    %v4051 = vunpack.c.l.b16 %v3916
    %v4052 = vunpack.c.l.b16 %v3917
    %v4053 = vunpack.c.l.b16 %v3918
    %v4054 = vunpack.c.l.b16 %v3919
    %v4055 = vunpack.c.l.b16 %v3920
    %v4056 = vunpack.c.l.b16 %v3921
    %v4057 = vunpack.c.l.b16 %v3922
    %v4058 = vunpack.c.l.b16 %v3923
    %v4059 = vunpack.c.l.b16 %v3924
    %v4060 = vunpack.c.l.b16 %v3925
    %v4061 = vpack.c.b16 %v3998, %v3997
    %v4062 = vpack.c.b16 %v4000, %v3999
    %v4063 = vpack.c.b16 %v4002, %v4001
    %v4064 = vpack.c.b16 %v4004, %v4003
    %v4065 = vpack.c.b16 %v4006, %v4005
    %v4066 = vpack.c.b16 %v4008, %v4007
    %v4067 = vpack.c.b16 %v4010, %v4009
    %v4068 = vpack.c.b16 %v4012, %v4011
    %v4069 = vpack.c.b16 %v4014, %v4013
    %v4070 = vpack.c.b16 %v4016, %v4015
    %v4071 = vpack.c.b16 %v4018, %v4017
    %v4072 = vpack.c.b16 %v4020, %v4019
    %v4073 = vpack.c.b16 %v4022, %v4021
    %v4074 = vpack.c.b16 %v4024, %v4023
    %v4075 = vpack.c.b16 %v4026, %v4025
    %v4076 = vpack.c.b16 %v4028, %v4027
    %v4077 = vpack.c.b16 %v4030, %v4029
    %v4078 = vpack.c.b16 %v4032, %v4031
    %v4079 = vpack.c.b16 %v4034, %v4033
    %v4080 = vpack.c.b16 %v4036, %v4035
    %v4081 = vpack.c.b16 %v4038, %v4037
    %v4082 = vpack.c.b16 %v4040, %v4039
    %v4083 = vpack.c.b16 %v4042, %v4041
    %v4084 = vpack.c.b16 %v4044, %v4043
    %v4085 = vpack.c.b16 %v4046, %v4045
    %v4086 = vpack.c.b16 %v4048, %v4047
    %v4087 = vpack.c.b16 %v4050, %v4049
    %v4088 = vpack.c.b16 %v4052, %v4051
    %v4089 = vpack.c.b16 %v4054, %v4053
    %v4090 = vpack.c.b16 %v4056, %v4055
    %v4091 = vpack.c.b16 %v4058, %v4057
    %v4092 = vpack.c.b16 %v4060, %v4059
    %4125 = vmatprep.subr.bf16.mxu0 0
    %4126 = vmatpush1.bf16.msra.mxu0 %v4061
    %4127 = vmatprep.subr.bf16.mxu0 0
    %4128 = vmatpush1.bf16.msra.mxu0 %v4062
    %4129 = vmatprep.subr.bf16.mxu0 0
    %4130 = vmatpush1.bf16.msra.mxu0 %v4063
    %4131 = vmatprep.subr.bf16.mxu0 0
    %4132 = vmatpush1.bf16.msra.mxu0 %v4064
    %4133 = vmatprep.subr.bf16.mxu0 0
    %4134 = vmatpush1.bf16.msra.mxu0 %v4065
    %4135 = vmatprep.subr.bf16.mxu0 0
    %4136 = vmatpush1.bf16.msra.mxu0 %v4066
    %4137 = vmatprep.subr.bf16.mxu0 0
    %4138 = vmatpush1.bf16.msra.mxu0 %v4067
    %4139 = vmatprep.subr.bf16.mxu0 0
    %4140 = vmatpush1.bf16.msra.mxu0 %v4068
    %4141 = vmatprep.subr.bf16.mxu0 0
    %4142 = vmatpush1.bf16.msra.mxu0 %v4069
    %4143 = vmatprep.subr.bf16.mxu0 0
    %4144 = vmatpush1.bf16.msra.mxu0 %v4070
    %4145 = vmatprep.subr.bf16.mxu0 0
    %4146 = vmatpush1.bf16.msra.mxu0 %v4071
    %4147 = vmatprep.subr.bf16.mxu0 0
    %4148 = vmatpush1.bf16.msra.mxu0 %v4072
    %4149 = vmatprep.subr.bf16.mxu0 0
    %4150 = vmatpush1.bf16.msra.mxu0 %v4073
    %4151 = vmatprep.subr.bf16.mxu0 0
    %4152 = vmatpush1.bf16.msra.mxu0 %v4074
    %4153 = vmatprep.subr.bf16.mxu0 0
    %4154 = vmatpush1.bf16.msra.mxu0 %v4075
    %4155 = vmatprep.subr.bf16.mxu0 0
    %4156 = vmatpush1.bf16.msra.mxu0 %v4076
    %4157 = vmatprep.mubr.bf16.mxu0 %v3859
    %4158 = vmatmul.mubr.bf16.gmra.mrb[0].mxu0 %v3858
    %v4159 = vpop.f32.mrb[0].mxu0
    %v4160 = vadd.f32 %v3931, %v4159
    %v4161 = vpop.f32.mrb[0].mxu0
    %v4162 = vpop.f32.mrb[0].mxu0
    %v4163 = vpop.f32.mrb[0].mxu0
    %4164 = vdwg.mxu0
    %4165 = vmatprep.subr.bf16.mxu0 0
    %4166 = vmatpush1.bf16.msra.mxu0 %v4077
    %4167 = vmatprep.subr.bf16.mxu0 0
    %4168 = vmatpush1.bf16.msra.mxu0 %v4078
    %4169 = vmatprep.subr.bf16.mxu0 0
    %4170 = vmatpush1.bf16.msra.mxu0 %v4079
    %4171 = vmatprep.subr.bf16.mxu0 0
    %4172 = vmatpush1.bf16.msra.mxu0 %v4080
    %4173 = vmatprep.subr.bf16.mxu0 0
    %4174 = vmatpush1.bf16.msra.mxu0 %v4081
    %4175 = vmatprep.subr.bf16.mxu0 0
    %4176 = vmatpush1.bf16.msra.mxu0 %v4082
    %4177 = vmatprep.subr.bf16.mxu0 0
    %4178 = vmatpush1.bf16.msra.mxu0 %v4083
    %4179 = vmatprep.subr.bf16.mxu0 0
    %4180 = vmatpush1.bf16.msra.mxu0 %v4084
    %4181 = vmatprep.subr.bf16.mxu0 0
    %4182 = vmatpush1.bf16.msra.mxu0 %v4085
    %4183 = vmatprep.subr.bf16.mxu0 0
    %4184 = vmatpush1.bf16.msra.mxu0 %v4086
    %4185 = vmatprep.subr.bf16.mxu0 0
    %4186 = vmatpush1.bf16.msra.mxu0 %v4087
    %4187 = vmatprep.subr.bf16.mxu0 0
    %4188 = vmatpush1.bf16.msra.mxu0 %v4088
    %4189 = vmatprep.subr.bf16.mxu0 0
    %4190 = vmatpush1.bf16.msra.mxu0 %v4089
    %4191 = vmatprep.subr.bf16.mxu0 0
    %4192 = vmatpush1.bf16.msra.mxu0 %v4090
    %4193 = vmatprep.subr.bf16.mxu0 0
    %4194 = vmatpush1.bf16.msra.mxu0 %v4091
    %4195 = vmatprep.subr.bf16.mxu0 0
    %4196 = vmatpush1.bf16.msra.mxu0 %v4092
    %4197 = vmatprep.mubr.bf16.mxu0 %v3861
    %4198 = vmatmul.mubr.bf16.gmra.mrb[0].mxu0 %v3860
    %v4199 = vpop.f32.mrb[0].mxu0
    %v4200 = vadd.f32 %v4160, %v4199
    %v4201 = vpop.f32.mrb[0].mxu0
    %v4202 = vpop.f32.mrb[0].mxu0
    %v4203 = vpop.f32.mrb[0].mxu0
    %4204 = vdwg.mxu0
    %v4205 = vpack.c.bf16 %v4200, %v4200
    %4206 = vst [vmem:[%s5] sm:$0xf] %v4205
    // Predicated region
    $region38: #{new_classifier_forward.1} parent=1 // pred_check
      _
    $region39: #{new_classifier_forward.1} parent=1 // pred_check_branch
      %4208 = sbr.rel (0) target = $region41
    $region40: #{new_classifier_forward.1} parent=1 // pred_region
      _
    $region41: #{new_classifier_forward.1} parent=1 // pred_fallthru
      _
    // Predicated region
    $region42: #{new_classifier_forward.1} parent=1 // pred_check
      _
    $region43: #{new_classifier_forward.1} parent=1 // pred_check_branch
      %4210 = sbr.rel (0) target = $region45
    $region44: #{new_classifier_forward.1} parent=1 // pred_region
      _
    $region45: #{new_classifier_forward.1} parent=1 // pred_fallthru
      _
    %4211 = vsyncpa [#allocation3], 1
    %4212 = vsyncpa [#allocation5], 1
    %4213 = vsyncpa [#allocation8], 1

</llo_original>
